<compile_context>
chip_gen: v6e
topology: v6e:2x2x1
jax: 0.10.0
libtpu: 0.0.40
codegen_flags: <defaults>
</compile_context>

<pallas_src>
import jax
import jax.numpy as jnp
import numpy as np
from jax.experimental import pallas as pl
from jax.experimental.pallas import tpu as pltpu

INPUT_DIM = 18
FEAT = INPUT_DIM - 1                  # 17
PAIR_EMB = 5
REPR = 100
EXPERTS = 2
GATE_OUT = 6
HID_E = FEAT + 12 * PAIR_EMB          # 77
IN_E = HID_E + 20                     # 97
HID2 = EXPERTS * HID_E                # 154 (both experts' hidden stacked)
GHID = 4 * 20                         # 80  (all four gates' hidden stacked)
EXP_OUT_W = 256                       # stacked expert output (blocks at lanes 0 / 128)
NEG_SLOPE = 0.01                      # nn.LeakyReLU default
EPS = 1e-5                            # BatchNorm1d / LayerNorm default eps

TILE_MAX = 512                        # batch tile (multiple of 8); ~85% of HBM roofline
                                      # and safe VMEM on v5e/v6e/v7x (raise to 1024 on v6e)
VMEM_LIMIT = 48 * 1024 * 1024         # stays below v7x's 64 MiB physical VMEM

# pair i (i<6) uses x columns (i, 6+i); pair 6+i uses (i, 12+i)
PAIR_COLS = [(i, 6 + i) for i in range(6)] + [(i, 12 + i) for i in range(6)]

# ---- vector slab layout (one row per bias / gamma / beta vector) ----
VEC_SPEC = ([("pair_b1", 240), ("pair_b2", 60),
             ("beta_w1", 10), ("beta_b1", 10), ("beta_b2", 20),
             ("e_b1", HID2), ("e_g", HID2), ("e_bt", HID2), ("e_b2", EXP_OUT_W),
             ("g_b1", GHID), ("g_g", GHID), ("g_bt", GHID), ("g_b2", 24)]
            + [(f"{n}_{t}", L) for t in range(4)
               for (n, L) in (("tb1", 100), ("t1g", 100), ("t1b", 100),
                              ("tb2", 50), ("t2g", 50), ("t2b", 50),
                              ("tb3", 10), ("t3g", 10), ("t3b", 10),
                              ("tw4", 10), ("tb4", 1))])
VEC_ROW = {name: i for i, (name, _) in enumerate(VEC_SPEC)}
VEC_LEN = dict(VEC_SPEC)
VEC_ROWS = len(VEC_SPEC)
VEC_WIDTH = 256


# ----------------------------- kernel helpers -----------------------------
def _leaky(v):
    return jnp.where(v > 0, v, NEG_SLOPE * v)


def _dot(a, b):
    return jnp.dot(a, b, preferred_element_type=jnp.float32)


def _vec(vref, name):
    r = VEC_ROW[name]
    n = VEC_LEN[name]
    return vref[r:r + 1, :n]                      # (1, n) static sublane/lane slice


def _bn_apply(v, mean, var, gamma, beta):
    # training-mode BatchNorm1d applied with precomputed full-batch mean/var
    return (v - mean) * (jax.lax.rsqrt(var + EPS) * gamma) + beta


def _layer_norm(v, gamma, beta):
    mu = jnp.mean(v, axis=-1, keepdims=True)
    var = jnp.mean(jnp.square(v - mu), axis=-1, keepdims=True)
    return (v - mu) * jax.lax.rsqrt(var + EPS) * gamma + beta


def _pre_bn(x, V, pw1_ref, pw2_ref, bw2_ref, ew1e_ref, ew1x_ref, ew1b_ref, gw1s_ref):
    """Everything up to (excluding) the two BatchNorms, for one batch tile."""
    x_feat = x[:, :FEAT]                                            # (T, 17)
    x_last = x[:, FEAT:FEAT + 1]                                    # (T, 1)
    # 12 pair MLPs -> two block-diagonal matmuls; pair-column permutation is
    # folded into pw1 host-side, so the input is plain x (T, 18).
    ph = _leaky(_dot(x, pw1_ref[...]) + _vec(V, "pair_b1"))         # (T, 240)
    emb = _dot(ph, pw2_ref[...]) + _vec(V, "pair_b2")               # (T, 60)
    # beta branch: layer-1 (K=1) as a VPU broadcast FMA.
    bh = _leaky(x_last * _vec(V, "beta_w1") + _vec(V, "beta_b1"))   # (T, 10)
    beta = _dot(bh, bw2_ref[...]) + _vec(V, "beta_b2")              # (T, 20)
    # both experts' layer-1 stacked along N; cat([emb, x, beta]) -> split matmuls.
    eh_pre = (_dot(emb, ew1e_ref[...]) + _dot(x_feat, ew1x_ref[...])
              + _dot(beta, ew1b_ref[...]) + _vec(V, "e_b1"))        # (T, 154)
    # all four gates' layer-1 stacked along N.
    gh_pre = _dot(x_feat, gw1s_ref[...]) + _vec(V, "g_b1")          # (T, 80)
    return eh_pre, gh_pre


# ----------------------- pass 1: BatchNorm statistics -----------------------
def make_stats_kernel(batch, tile):
    def stats_kernel(x_ref, vec_ref, pw1_ref, pw2_ref, bw2_ref,
                     ew1e_ref, ew1x_ref, ew1b_ref, gw1s_ref, out_ref):
        eh_pre, gh_pre = _pre_bn(x_ref[...], vec_ref, pw1_ref, pw2_ref, bw2_ref,
                                 ew1e_ref, ew1x_ref, ew1b_ref, gw1s_ref)
        # mask rows beyond the true batch (partial last tile)
        row = (pl.program_id(0) * tile
               + jax.lax.broadcasted_iota(jnp.int32, (tile, 1), 0))
        valid = row < batch
        ehm = jnp.where(valid, eh_pre, 0.0)
        ghm = jnp.where(valid, gh_pre, 0.0)
        out_ref[...] = jnp.zeros((8, VEC_WIDTH), jnp.float32)
        out_ref[0:1, 0:HID2] = jnp.sum(ehm, axis=0, keepdims=True)
        out_ref[1:2, 0:HID2] = jnp.sum(ehm * ehm, axis=0, keepdims=True)
        out_ref[2:3, 0:GHID] = jnp.sum(ghm, axis=0, keepdims=True)
        out_ref[3:4, 0:GHID] = jnp.sum(ghm * ghm, axis=0, keepdims=True)
    return stats_kernel


# ----------------------------- pass 2: main -----------------------------
def transfer_kernel(x_ref, water_ref, air_ref, stats_ref, vec_ref,
                    pw1_ref, pw2_ref, bw2_ref,
                    ew1e_ref, ew1x_ref, ew1b_ref, ew2bd_ref,
                    gw1s_ref, gw2bd_ref,
                    tw1_ref, tw2_ref, tw3_ref,
                    out_ref):
    V = vec_ref
    eh_pre, gh_pre = _pre_bn(x_ref[...], V, pw1_ref, pw2_ref, bw2_ref,
                             ew1e_ref, ew1x_ref, ew1b_ref, gw1s_ref)

    # experts: BN (full-batch stats) -> LeakyReLU -> layer-2 (block-diagonal, stacked)
    eh = _leaky(_bn_apply(eh_pre, stats_ref[0:1, 0:HID2], stats_ref[1:2, 0:HID2],
                          _vec(V, "e_g"), _vec(V, "e_bt")))
    eo = _dot(eh, ew2bd_ref[...]) + _vec(V, "e_b2")                 # (T, 256)
    eo0 = eo[:, 0:REPR]                                             # expert 0
    eo1 = eo[:, 128:128 + REPR]                                     # expert 1 (128-aligned)

    # gates: BN -> LeakyReLU -> layer-2 (block-diagonal, stacked logits)
    gh = _leaky(_bn_apply(gh_pre, stats_ref[2:3, 0:GHID], stats_ref[3:4, 0:GHID],
                          _vec(V, "g_g"), _vec(V, "g_bt")))
    glog = _dot(gh, gw2bd_ref[...]) + _vec(V, "g_b2")               # (T, 24)

    water0 = water_ref[:, 0:REPR]                                   # (T, 100)
    water1 = water_ref[:, REPR:2 * REPR]

    for t in range(4):
        # softmax over this gate's 6-wide logit segment (exact division)
        seg = glog[:, 6 * t:6 * t + 6]
        m = jnp.max(seg, axis=1, keepdims=True)
        e = jnp.exp(seg - m)
        p = e / jnp.sum(e, axis=1, keepdims=True)

        a0 = air_ref[:, (2 * t) * REPR:(2 * t + 1) * REPR]
        a1 = air_ref[:, (2 * t + 1) * REPR:(2 * t + 2) * REPR]
        # gated mean over [water0, water1, air_t0, air_t1, eo0, eo1]: pure VPU FMAs
        rep = (p[:, 0:1] * water0 + p[:, 1:2] * water1
               + p[:, 2:3] * a0 + p[:, 3:4] * a1
               + p[:, 4:5] * eo0 + p[:, 5:6] * eo1) * (1.0 / 6.0)   # (T, 100)

        # task tower: 100 -> 100 -> 50 -> 10 -> 1 with LayerNorm + LeakyReLU
        h = _leaky(_layer_norm(_dot(rep, tw1_ref[t]) + _vec(V, f"tb1_{t}"),
                               _vec(V, f"t1g_{t}"), _vec(V, f"t1b_{t}")))
        h = _leaky(_layer_norm(_dot(h, tw2_ref[t]) + _vec(V, f"tb2_{t}"),
                               _vec(V, f"t2g_{t}"), _vec(V, f"t2b_{t}")))
        h = _leaky(_layer_norm(_dot(h, tw3_ref[t]) + _vec(V, f"tb3_{t}"),
                               _vec(V, f"t3g_{t}"), _vec(V, f"t3b_{t}")))
        # final 10 -> 1 layer as a VPU multiply + lane reduce; store directly.
        out_ref[:, t:t + 1] = (jnp.sum(h * _vec(V, f"tw4_{t}"), axis=1, keepdims=True)
                               + _vec(V, f"tb4_{t}"))


# ----------------------------- params / packing -----------------------------
def init_params(key):
    # Deterministic synthetic init (scaled normal weights, zero biases, unit
    # BN/LN scales).  theta1..theta4 are unused in forward and omitted.
    ks = jax.random.split(key, 16)
    ki = iter(range(16))

    def w(shape, fan_in):
        return jax.random.normal(ks[next(ki)], shape, jnp.float32) / jnp.sqrt(float(fan_in))

    z = lambda s: jnp.zeros(s, jnp.float32)
    o = lambda s: jnp.ones(s, jnp.float32)
    return dict(
        pw1=w((12, 2, 20), 2), pb1=z((12, 20)),
        pw2=w((12, 20, PAIR_EMB), 20), pb2=z((12, PAIR_EMB)),
        bw1=w((1, 10), 1), bb1=z((1, 10)),
        bw2=w((10, 20), 10), bb2=z((1, 20)),
        ew1=w((EXPERTS, IN_E, HID_E), IN_E), eb1=z((EXPERTS, HID_E)),
        eg=o((EXPERTS, HID_E)), ebt=z((EXPERTS, HID_E)),
        ew2=w((EXPERTS, HID_E, REPR), HID_E), eb2=z((EXPERTS, REPR)),
        gw1=w((4, FEAT, 20), FEAT), gb1=z((4, 20)),
        gg=o((4, 20)), gbt=z((4, 20)),
        gw2=w((4, 20, GATE_OUT), 20), gb2=z((4, GATE_OUT)),
        tw1=w((4, REPR, 100), REPR), tb1=z((4, 100)),
        t1g=o((4, 100)), t1b=z((4, 100)),
        tw2=w((4, 100, 50), 100), tb2=z((4, 50)),
        t2g=o((4, 50)), t2b=z((4, 50)),
        tw3=w((4, 50, 10), 50), tb3=z((4, 10)),
        t3g=o((4, 10)), t3b=z((4, 10)),
        tw4=w((4, 10, 1), 10), tb4=z((4, 1)),
    )


def pack_params(params):
    """Host-side (numpy) packing: folded/stacked/block-diag weights + one vector slab."""
    p = {k: np.asarray(v, np.float32) for k, v in params.items()}

    # pair MLPs: fold the column permutation + block-diagonal layer-1 into (18,240);
    # layer-2 block-diagonal (240,60).
    pw1x = np.zeros((INPUT_DIM, 240), np.float32)
    pw2bd = np.zeros((240, 60), np.float32)
    for i, (ca, cb) in enumerate(PAIR_COLS):
        pw1x[ca, 20 * i:20 * i + 20] += p["pw1"][i][0]
        pw1x[cb, 20 * i:20 * i + 20] += p["pw1"][i][1]
        pw2bd[20 * i:20 * i + 20, PAIR_EMB * i:PAIR_EMB * (i + 1)] = p["pw2"][i]

    # experts: layer-1 stacked along N and split along K (emb / x_feat / beta);
    # layer-2 block-diagonal with expert 1 at a 128-aligned lane offset.
    ew1e = np.zeros((60, HID2), np.float32)
    ew1x = np.zeros((FEAT, HID2), np.float32)
    ew1b = np.zeros((20, HID2), np.float32)
    ew2bd = np.zeros((HID2, EXP_OUT_W), np.float32)
    e_b1 = np.zeros((HID2,), np.float32)
    e_g = np.zeros_like(e_b1)
    e_bt = np.zeros_like(e_b1)
    e_b2 = np.zeros((EXP_OUT_W,), np.float32)
    for e in range(EXPERTS):
        c0 = HID_E * e
        ew1e[:, c0:c0 + HID_E] = p["ew1"][e][0:60]
        ew1x[:, c0:c0 + HID_E] = p["ew1"][e][60:60 + FEAT]
        ew1b[:, c0:c0 + HID_E] = p["ew1"][e][60 + FEAT:IN_E]
        ew2bd[c0:c0 + HID_E, 128 * e:128 * e + REPR] = p["ew2"][e]
        e_b1[c0:c0 + HID_E] = p["eb1"][e]
        e_g[c0:c0 + HID_E] = p["eg"][e]
        e_bt[c0:c0 + HID_E] = p["ebt"][e]
        e_b2[128 * e:128 * e + REPR] = p["eb2"][e]

    # gates: layer-1 stacked along N, layer-2 block-diagonal.
    gw1s = np.zeros((FEAT, GHID), np.float32)
    gw2bd = np.zeros((GHID, 4 * GATE_OUT), np.float32)
    g_b1 = np.zeros((GHID,), np.float32)
    g_g = np.zeros_like(g_b1)
    g_bt = np.zeros_like(g_b1)
    g_b2 = np.zeros((4 * GATE_OUT,), np.float32)
    for g in range(4):
        gw1s[:, 20 * g:20 * g + 20] = p["gw1"][g]
        gw2bd[20 * g:20 * g + 20, GATE_OUT * g:GATE_OUT * (g + 1)] = p["gw2"][g]
        g_b1[20 * g:20 * g + 20] = p["gb1"][g]
        g_g[20 * g:20 * g + 20] = p["gg"][g]
        g_bt[20 * g:20 * g + 20] = p["gbt"][g]
        g_b2[GATE_OUT * g:GATE_OUT * (g + 1)] = p["gb2"][g]

    vec_values = {
        "pair_b1": p["pb1"].reshape(-1), "pair_b2": p["pb2"].reshape(-1),
        "beta_w1": p["bw1"].reshape(-1), "beta_b1": p["bb1"].reshape(-1),
        "beta_b2": p["bb2"].reshape(-1),
        "e_b1": e_b1, "e_g": e_g, "e_bt": e_bt, "e_b2": e_b2,
        "g_b1": g_b1, "g_g": g_g, "g_bt": g_bt, "g_b2": g_b2,
    }
    for t in range(4):
        vec_values[f"tb1_{t}"] = p["tb1"][t]
        vec_values[f"t1g_{t}"] = p["t1g"][t]
        vec_values[f"t1b_{t}"] = p["t1b"][t]
        vec_values[f"tb2_{t}"] = p["tb2"][t]
        vec_values[f"t2g_{t}"] = p["t2g"][t]
        vec_values[f"t2b_{t}"] = p["t2b"][t]
        vec_values[f"tb3_{t}"] = p["tb3"][t]
        vec_values[f"t3g_{t}"] = p["t3g"][t]
        vec_values[f"t3b_{t}"] = p["t3b"][t]
        vec_values[f"tw4_{t}"] = p["tw4"][t].reshape(-1)
        vec_values[f"tb4_{t}"] = p["tb4"][t].reshape(-1)

    slab = np.zeros((VEC_ROWS, VEC_WIDTH), np.float32)
    for name, length in VEC_SPEC:
        v = vec_values[name]
        assert v.shape == (length,), (name, v.shape, length)
        slab[VEC_ROW[name], :length] = v

    to_j = lambda a: jnp.asarray(a, jnp.float32)
    return {
        "vec": to_j(slab),
        "pw1x": to_j(pw1x), "pw2bd": to_j(pw2bd),
        "bw2": to_j(p["bw2"]),
        "ew1e": to_j(ew1e), "ew1x": to_j(ew1x), "ew1b": to_j(ew1b), "ew2bd": to_j(ew2bd),
        "gw1s": to_j(gw1s), "gw2bd": to_j(gw2bd),
        "tw1": to_j(p["tw1"]), "tw2": to_j(p["tw2"]), "tw3": to_j(p["tw3"]),
    }


# ----------------------------- wrapper -----------------------------
def transfer_model_forward(x, water_expert_represents, air_expert_represents, packed):
    x = x.astype(jnp.float32)
    B = x.shape[0]
    # No wrapper transposes: flat, contiguous (free) views of the big inputs.
    water_flat = water_expert_represents[:, 0].reshape(B, 2 * REPR).astype(jnp.float32)
    air_flat = air_expert_represents.reshape(B, 4 * 2 * REPR).astype(jnp.float32)

    T = B if B <= TILE_MAX else TILE_MAX           # block == full dim OR multiple of 8
    n_tiles = pl.cdiv(B, T)
    cparams = pltpu.CompilerParams(dimension_semantics=("parallel",),
                                   vmem_limit_bytes=VMEM_LIMIT)

    def resident(arr):                             # weight kept VMEM-resident across steps
        nd = arr.ndim
        return pl.BlockSpec(arr.shape, lambda i, nd=nd: (0,) * nd)

    w = packed
    stats_weights = (w["vec"], w["pw1x"], w["pw2bd"], w["bw2"],
                     w["ew1e"], w["ew1x"], w["ew1b"], w["gw1s"])
    main_weights = (w["vec"], w["pw1x"], w["pw2bd"], w["bw2"],
                    w["ew1e"], w["ew1x"], w["ew1b"], w["ew2bd"],
                    w["gw1s"], w["gw2bd"], w["tw1"], w["tw2"], w["tw3"])

    # ---- pass 1: per-tile partial sums for full-batch BatchNorm statistics ----
    partial = pl.pallas_call(
        make_stats_kernel(B, T),
        out_shape=jax.ShapeDtypeStruct((n_tiles * 8, VEC_WIDTH), jnp.float32),
        grid=(n_tiles,),
        in_specs=[pl.BlockSpec((T, INPUT_DIM), lambda i: (i, 0))]
                 + [resident(a) for a in stats_weights],
        out_specs=pl.BlockSpec((8, VEC_WIDTH), lambda i: (i, 0)),
        compiler_params=cparams,
    )(x, *stats_weights)

    s = jnp.sum(partial.reshape(n_tiles, 8, VEC_WIDTH), axis=0)   # (8, 256)
    inv_b = jnp.float32(1.0 / B)
    eh_mean = s[0] * inv_b
    eh_var = jnp.maximum(s[1] * inv_b - eh_mean * eh_mean, 0.0)
    gh_mean = s[2] * inv_b
    gh_var = jnp.maximum(s[3] * inv_b - gh_mean * gh_mean, 0.0)
    zrow = jnp.zeros((VEC_WIDTH,), jnp.float32)
    stats = jnp.stack([eh_mean, eh_var, gh_mean, gh_var, zrow, zrow, zrow, zrow], axis=0)

    # ---- pass 2: fused forward, batch-tiled, weights VMEM-resident ----
    out = pl.pallas_call(
        transfer_kernel,
        out_shape=jax.ShapeDtypeStruct((B, 4), jnp.float32),
        grid=(n_tiles,),
        in_specs=[pl.BlockSpec((T, INPUT_DIM), lambda i: (i, 0)),
                  pl.BlockSpec((T, 2 * REPR), lambda i: (i, 0)),
                  pl.BlockSpec((T, 8 * REPR), lambda i: (i, 0)),
                  resident(stats)]
                 + [resident(a) for a in main_weights],
        out_specs=pl.BlockSpec((T, 4), lambda i: (i, 0)),
        compiler_params=cparams,
    )(x, water_flat, air_flat, stats, *main_weights)

    # matches the PyTorch return: four (B,) vectors
    return out[:, 0], out[:, 1], out[:, 2], out[:, 3]


if __name__ == "__main__":
    key = jax.random.PRNGKey(0)
    kx, kw, ka, kp = jax.random.split(key, 4)

    B = 8
    x = jax.random.normal(kx, (B, INPUT_DIM), jnp.float32)
    # dim-1 of water is only indexed at 0; dim-1 of air is indexed 0..3.
    # gate_output_dim=6 forces (n_water + n_air + expert_num) == 6 -> 2 + 2 + 2.
    water = jax.random.normal(kw, (B, 1, 2, REPR), jnp.float32)
    air = jax.random.normal(ka, (B, 4, 2, REPR), jnp.float32)

    params = init_params(kp)
    packed = pack_params(params)

    fwd = jax.jit(transfer_model_forward)
    o1, o2, o3, o4 = fwd(x, water, air, packed)
    jax.block_until_ready((o1, o2, o3, o4))
    assert o1.shape == (B,) and o2.shape == (B,) and o3.shape == (B,) and o4.shape == (B,)
    print("KERNEL_OK")
</pallas_src>

<mosaic_0001>
module attributes {stable_mosaic.version = 11 : i64} {
  func.func @stats_kernel(%arg0: i32, %arg1: memref<8x18xf32, #tpu.memory_space<vmem>>, %arg2: memref<57x256xf32, #tpu.memory_space<vmem>>, %arg3: memref<18x240xf32, #tpu.memory_space<vmem>>, %arg4: memref<240x60xf32, #tpu.memory_space<vmem>>, %arg5: memref<10x20xf32, #tpu.memory_space<vmem>>, %arg6: memref<60x154xf32, #tpu.memory_space<vmem>>, %arg7: memref<17x154xf32, #tpu.memory_space<vmem>>, %arg8: memref<20x154xf32, #tpu.memory_space<vmem>>, %arg9: memref<17x80xf32, #tpu.memory_space<vmem>>, %arg10: memref<8x256xf32, #tpu.memory_space<vmem>>) attributes {dimension_semantics = [#tpu.dimension_semantics<parallel>], iteration_bounds = array<i64: 1>, scalar_prefetch = 0 : i64, scratch_operands = 0 : i64, tpu.core_type = #tpu.core_type<tc>, window_params = [{transform_indices = @transform_0, window_bounds = array<i64: 8, 18>}, {pipeline_mode = #tpu.pipeline_mode<synchronous>, transform_indices = @transform_1, window_bounds = array<i64: 57, 256>}, {pipeline_mode = #tpu.pipeline_mode<synchronous>, transform_indices = @transform_2, window_bounds = array<i64: 18, 240>}, {pipeline_mode = #tpu.pipeline_mode<synchronous>, transform_indices = @transform_3, window_bounds = array<i64: 240, 60>}, {pipeline_mode = #tpu.pipeline_mode<synchronous>, transform_indices = @transform_4, window_bounds = array<i64: 10, 20>}, {pipeline_mode = #tpu.pipeline_mode<synchronous>, transform_indices = @transform_5, window_bounds = array<i64: 60, 154>}, {pipeline_mode = #tpu.pipeline_mode<synchronous>, transform_indices = @transform_6, window_bounds = array<i64: 17, 154>}, {pipeline_mode = #tpu.pipeline_mode<synchronous>, transform_indices = @transform_7, window_bounds = array<i64: 20, 154>}, {pipeline_mode = #tpu.pipeline_mode<synchronous>, transform_indices = @transform_8, window_bounds = array<i64: 17, 80>}, {transform_indices = @transform_9, window_bounds = array<i64: 8, 256>}]} {
    %c0 = arith.constant 0 : index
    %c0_0 = arith.constant 0 : index
    %0 = vector.load %arg1[%c0, %c0_0] : memref<8x18xf32, #tpu.memory_space<vmem>>, vector<8x18xf32>
    %1 = vector.extract_strided_slice %0 {offsets = [0, 0], sizes = [8, 17], strides = [1, 1]} : vector<8x18xf32> to vector<8x17xf32>
    %2 = vector.extract_strided_slice %0 {offsets = [0, 17], sizes = [8, 1], strides = [1, 1]} : vector<8x18xf32> to vector<8x1xf32>
    %c0_1 = arith.constant 0 : index
    %c0_2 = arith.constant 0 : index
    %3 = vector.load %arg3[%c0_1, %c0_2] : memref<18x240xf32, #tpu.memory_space<vmem>>, vector<18x240xf32>
    %cst = arith.constant dense<0.000000e+00> : vector<8x240xf32>
    %4 = tpu.matmul %0, %3, %cst {dimension_numbers = #tpu.dot_dimension_numbers<[1], [0], [0], [1], [0, 0, 1, 1], [], []>} : vector<8x18xf32>, vector<18x240xf32>, vector<8x240xf32> -> vector<8x240xf32>
    %c0_3 = arith.constant 0 : index
    %c0_4 = arith.constant 0 : index
    %5 = vector.load %arg2[%c0_3, %c0_4] : memref<57x256xf32, #tpu.memory_space<vmem>>, vector<1x240xf32>
    %6 = vector.broadcast %5 : vector<1x240xf32> to vector<8x240xf32>
    %7 = arith.addf %4, %6 : vector<8x240xf32>
    %cst_5 = arith.constant 0.000000e+00 : f32
    %8 = vector.broadcast %cst_5 : f32 to vector<8x240xf32>
    %9 = arith.cmpf ogt, %7, %8 : vector<8x240xf32>
    %cst_6 = arith.constant 0.00999999977 : f32
    %10 = vector.broadcast %cst_6 : f32 to vector<8x240xf32>
    %11 = arith.mulf %10, %7 : vector<8x240xf32>
    %12 = arith.select %9, %7, %11 : vector<8x240xi1>, vector<8x240xf32>
    %c0_7 = arith.constant 0 : index
    %c0_8 = arith.constant 0 : index
    %13 = vector.load %arg4[%c0_7, %c0_8] : memref<240x60xf32, #tpu.memory_space<vmem>>, vector<240x60xf32>
    %cst_9 = arith.constant dense<0.000000e+00> : vector<8x60xf32>
    %14 = tpu.matmul %12, %13, %cst_9 {dimension_numbers = #tpu.dot_dimension_numbers<[1], [0], [0], [1], [0, 0, 1, 1], [], []>} : vector<8x240xf32>, vector<240x60xf32>, vector<8x60xf32> -> vector<8x60xf32>
    %c1 = arith.constant 1 : index
    %c0_10 = arith.constant 0 : index
    %15 = vector.load %arg2[%c1, %c0_10] : memref<57x256xf32, #tpu.memory_space<vmem>>, vector<1x60xf32>
    %16 = vector.broadcast %15 : vector<1x60xf32> to vector<8x60xf32>
    %17 = arith.addf %14, %16 : vector<8x60xf32>
    %c2 = arith.constant 2 : index
    %c0_11 = arith.constant 0 : index
    %18 = vector.load %arg2[%c2, %c0_11] : memref<57x256xf32, #tpu.memory_space<vmem>>, vector<1x10xf32>
    %19 = vector.broadcast %2 : vector<8x1xf32> to vector<8x10xf32>
    %20 = vector.broadcast %18 : vector<1x10xf32> to vector<8x10xf32>
    %21 = arith.mulf %19, %20 : vector<8x10xf32>
    %c3 = arith.constant 3 : index
    %c0_12 = arith.constant 0 : index
    %22 = vector.load %arg2[%c3, %c0_12] : memref<57x256xf32, #tpu.memory_space<vmem>>, vector<1x10xf32>
    %23 = vector.broadcast %22 : vector<1x10xf32> to vector<8x10xf32>
    %24 = arith.addf %21, %23 : vector<8x10xf32>
    %cst_13 = arith.constant 0.000000e+00 : f32
    %25 = vector.broadcast %cst_13 : f32 to vector<8x10xf32>
    %26 = arith.cmpf ogt, %24, %25 : vector<8x10xf32>
    %cst_14 = arith.constant 0.00999999977 : f32
    %27 = vector.broadcast %cst_14 : f32 to vector<8x10xf32>
    %28 = arith.mulf %27, %24 : vector<8x10xf32>
    %29 = arith.select %26, %24, %28 : vector<8x10xi1>, vector<8x10xf32>
    %c0_15 = arith.constant 0 : index
    %c0_16 = arith.constant 0 : index
    %30 = vector.load %arg5[%c0_15, %c0_16] : memref<10x20xf32, #tpu.memory_space<vmem>>, vector<10x20xf32>
    %cst_17 = arith.constant dense<0.000000e+00> : vector<8x20xf32>
    %31 = tpu.matmul %29, %30, %cst_17 {dimension_numbers = #tpu.dot_dimension_numbers<[1], [0], [0], [1], [0, 0, 1, 1], [], []>} : vector<8x10xf32>, vector<10x20xf32>, vector<8x20xf32> -> vector<8x20xf32>
    %c4 = arith.constant 4 : index
    %c0_18 = arith.constant 0 : index
    %32 = vector.load %arg2[%c4, %c0_18] : memref<57x256xf32, #tpu.memory_space<vmem>>, vector<1x20xf32>
    %33 = vector.broadcast %32 : vector<1x20xf32> to vector<8x20xf32>
    %34 = arith.addf %31, %33 : vector<8x20xf32>
    %c0_19 = arith.constant 0 : index
    %c0_20 = arith.constant 0 : index
    %35 = vector.load %arg6[%c0_19, %c0_20] : memref<60x154xf32, #tpu.memory_space<vmem>>, vector<60x154xf32>
    %cst_21 = arith.constant dense<0.000000e+00> : vector<8x154xf32>
    %36 = tpu.matmul %17, %35, %cst_21 {dimension_numbers = #tpu.dot_dimension_numbers<[1], [0], [0], [1], [0, 0, 1, 1], [], []>} : vector<8x60xf32>, vector<60x154xf32>, vector<8x154xf32> -> vector<8x154xf32>
    %c0_22 = arith.constant 0 : index
    %c0_23 = arith.constant 0 : index
    %37 = vector.load %arg7[%c0_22, %c0_23] : memref<17x154xf32, #tpu.memory_space<vmem>>, vector<17x154xf32>
    %cst_24 = arith.constant dense<0.000000e+00> : vector<8x154xf32>
    %38 = tpu.matmul %1, %37, %cst_24 {dimension_numbers = #tpu.dot_dimension_numbers<[1], [0], [0], [1], [0, 0, 1, 1], [], []>} : vector<8x17xf32>, vector<17x154xf32>, vector<8x154xf32> -> vector<8x154xf32>
    %39 = arith.addf %36, %38 : vector<8x154xf32>
    %c0_25 = arith.constant 0 : index
    %c0_26 = arith.constant 0 : index
    %40 = vector.load %arg8[%c0_25, %c0_26] : memref<20x154xf32, #tpu.memory_space<vmem>>, vector<20x154xf32>
    %cst_27 = arith.constant dense<0.000000e+00> : vector<8x154xf32>
    %41 = tpu.matmul %34, %40, %cst_27 {dimension_numbers = #tpu.dot_dimension_numbers<[1], [0], [0], [1], [0, 0, 1, 1], [], []>} : vector<8x20xf32>, vector<20x154xf32>, vector<8x154xf32> -> vector<8x154xf32>
    %42 = arith.addf %39, %41 : vector<8x154xf32>
    %c5 = arith.constant 5 : index
    %c0_28 = arith.constant 0 : index
    %43 = vector.load %arg2[%c5, %c0_28] : memref<57x256xf32, #tpu.memory_space<vmem>>, vector<1x154xf32>
    %44 = vector.broadcast %43 : vector<1x154xf32> to vector<8x154xf32>
    %45 = arith.addf %42, %44 : vector<8x154xf32>
    %c0_29 = arith.constant 0 : index
    %c0_30 = arith.constant 0 : index
    %46 = vector.load %arg9[%c0_29, %c0_30] : memref<17x80xf32, #tpu.memory_space<vmem>>, vector<17x80xf32>
    %cst_31 = arith.constant dense<0.000000e+00> : vector<8x80xf32>
    %47 = tpu.matmul %1, %46, %cst_31 {dimension_numbers = #tpu.dot_dimension_numbers<[1], [0], [0], [1], [0, 0, 1, 1], [], []>} : vector<8x17xf32>, vector<17x80xf32>, vector<8x80xf32> -> vector<8x80xf32>
    %c9 = arith.constant 9 : index
    %c0_32 = arith.constant 0 : index
    %48 = vector.load %arg2[%c9, %c0_32] : memref<57x256xf32, #tpu.memory_space<vmem>>, vector<1x80xf32>
    %49 = vector.broadcast %48 : vector<1x80xf32> to vector<8x80xf32>
    %50 = arith.addf %47, %49 : vector<8x80xf32>
    %c8_i32 = arith.constant 8 : i32
    %51 = arith.muli %arg0, %c8_i32 : i32
    %52 = tpu.iota {dimensions = array<i32: 0>} : vector<8x1xi32>
    %53 = vector.broadcast %51 : i32 to vector<8x1xi32>
    %54 = arith.addi %53, %52 : vector<8x1xi32>
    %c8_i32_33 = arith.constant 8 : i32
    %55 = vector.broadcast %c8_i32_33 : i32 to vector<8x1xi32>
    %56 = arith.cmpi slt, %54, %55 : vector<8x1xi32>
    %cst_34 = arith.constant 0.000000e+00 : f32
    %57 = vector.shape_cast %56 : vector<8x1xi1> to vector<8x1xi1>
    %58 = vector.broadcast %57 : vector<8x1xi1> to vector<8x154xi1>
    %59 = vector.broadcast %cst_34 : f32 to vector<8x154xf32>
    %60 = arith.select %58, %45, %59 : vector<8x154xi1>, vector<8x154xf32>
    %cst_35 = arith.constant 0.000000e+00 : f32
    %61 = vector.shape_cast %56 : vector<8x1xi1> to vector<8x1xi1>
    %62 = vector.broadcast %61 : vector<8x1xi1> to vector<8x80xi1>
    %63 = vector.broadcast %cst_35 : f32 to vector<8x80xf32>
    %64 = arith.select %62, %50, %63 : vector<8x80xi1>, vector<8x80xf32>
    %cst_36 = arith.constant 0.000000e+00 : f32
    %65 = vector.broadcast %cst_36 : f32 to vector<8x256xf32>
    %c0_37 = arith.constant 0 : index
    %c0_38 = arith.constant 0 : index
    %66 = vector.load %arg10[%c0_37, %c0_38] : memref<8x256xf32, #tpu.memory_space<vmem>>, vector<8x256xf32>
    tpu.vector_store %arg10[%c0_37, %c0_38], %65 {strides = array<i32>} : memref<8x256xf32, #tpu.memory_space<vmem>>, vector<8x256xf32>,
    %cst_39 = arith.constant dense<0.000000e+00> : vector<154xf32>
    %67 = vector.multi_reduction <add>, %60, %cst_39 [0] : vector<8x154xf32> to vector<154xf32>
    %68 = vector.shape_cast %67 : vector<154xf32> to vector<1x154xf32>
    %c0_40 = arith.constant 0 : index
    %c0_41 = arith.constant 0 : index
    %69 = vector.load %arg10[%c0_40, %c0_41] : memref<8x256xf32, #tpu.memory_space<vmem>>, vector<1x154xf32>
    tpu.vector_store %arg10[%c0_40, %c0_41], %68 {strides = array<i32>} : memref<8x256xf32, #tpu.memory_space<vmem>>, vector<1x154xf32>,
    %70 = arith.mulf %60, %60 : vector<8x154xf32>
    %cst_42 = arith.constant dense<0.000000e+00> : vector<154xf32>
    %71 = vector.multi_reduction <add>, %70, %cst_42 [0] : vector<8x154xf32> to vector<154xf32>
    %72 = vector.shape_cast %71 : vector<154xf32> to vector<1x154xf32>
    %c1_43 = arith.constant 1 : index
    %c0_44 = arith.constant 0 : index
    %73 = vector.load %arg10[%c1_43, %c0_44] : memref<8x256xf32, #tpu.memory_space<vmem>>, vector<1x154xf32>
    tpu.vector_store %arg10[%c1_43, %c0_44], %72 {strides = array<i32>} : memref<8x256xf32, #tpu.memory_space<vmem>>, vector<1x154xf32>,
    %cst_45 = arith.constant dense<0.000000e+00> : vector<80xf32>
    %74 = vector.multi_reduction <add>, %64, %cst_45 [0] : vector<8x80xf32> to vector<80xf32>
    %75 = vector.shape_cast %74 : vector<80xf32> to vector<1x80xf32>
    %c2_46 = arith.constant 2 : index
    %c0_47 = arith.constant 0 : index
    %76 = vector.load %arg10[%c2_46, %c0_47] : memref<8x256xf32, #tpu.memory_space<vmem>>, vector<1x80xf32>
    tpu.vector_store %arg10[%c2_46, %c0_47], %75 {strides = array<i32>} : memref<8x256xf32, #tpu.memory_space<vmem>>, vector<1x80xf32>,
    %77 = arith.mulf %64, %64 : vector<8x80xf32>
    %cst_48 = arith.constant dense<0.000000e+00> : vector<80xf32>
    %78 = vector.multi_reduction <add>, %77, %cst_48 [0] : vector<8x80xf32> to vector<80xf32>
    %79 = vector.shape_cast %78 : vector<80xf32> to vector<1x80xf32>
    %c3_49 = arith.constant 3 : index
    %c0_50 = arith.constant 0 : index
    %80 = vector.load %arg10[%c3_49, %c0_50] : memref<8x256xf32, #tpu.memory_space<vmem>>, vector<1x80xf32>
    tpu.vector_store %arg10[%c3_49, %c0_50], %79 {strides = array<i32>} : memref<8x256xf32, #tpu.memory_space<vmem>>, vector<1x80xf32>,
    return
  }
  func.func @transform_0(%arg0: i32) -> (i32, i32) {
    %c0_i32 = arith.constant 0 : i32
    %c0_i32_0 = arith.constant 0 : i32
    return %arg0, %c0_i32 : i32, i32
  }
  func.func @transform_1(%arg0: i32) -> (i32, i32) {
    %c0_i32 = arith.constant 0 : i32
    %c0_i32_0 = arith.constant 0 : i32
    %c0_i32_1 = arith.constant 0 : i32
    return %c0_i32, %c0_i32_0 : i32, i32
  }
  func.func @transform_2(%arg0: i32) -> (i32, i32) {
    %c0_i32 = arith.constant 0 : i32
    %c0_i32_0 = arith.constant 0 : i32
    %c0_i32_1 = arith.constant 0 : i32
    return %c0_i32, %c0_i32_0 : i32, i32
  }
  func.func @transform_3(%arg0: i32) -> (i32, i32) {
    %c0_i32 = arith.constant 0 : i32
    %c0_i32_0 = arith.constant 0 : i32
    %c0_i32_1 = arith.constant 0 : i32
    return %c0_i32, %c0_i32_0 : i32, i32
  }
  func.func @transform_4(%arg0: i32) -> (i32, i32) {
    %c0_i32 = arith.constant 0 : i32
    %c0_i32_0 = arith.constant 0 : i32
    %c0_i32_1 = arith.constant 0 : i32
    return %c0_i32, %c0_i32_0 : i32, i32
  }
  func.func @transform_5(%arg0: i32) -> (i32, i32) {
    %c0_i32 = arith.constant 0 : i32
    %c0_i32_0 = arith.constant 0 : i32
    %c0_i32_1 = arith.constant 0 : i32
    return %c0_i32, %c0_i32_0 : i32, i32
  }
  func.func @transform_6(%arg0: i32) -> (i32, i32) {
    %c0_i32 = arith.constant 0 : i32
    %c0_i32_0 = arith.constant 0 : i32
    %c0_i32_1 = arith.constant 0 : i32
    return %c0_i32, %c0_i32_0 : i32, i32
  }
  func.func @transform_7(%arg0: i32) -> (i32, i32) {
    %c0_i32 = arith.constant 0 : i32
    %c0_i32_0 = arith.constant 0 : i32
    %c0_i32_1 = arith.constant 0 : i32
    return %c0_i32, %c0_i32_0 : i32, i32
  }
  func.func @transform_8(%arg0: i32) -> (i32, i32) {
    %c0_i32 = arith.constant 0 : i32
    %c0_i32_0 = arith.constant 0 : i32
    %c0_i32_1 = arith.constant 0 : i32
    return %c0_i32, %c0_i32_0 : i32, i32
  }
  func.func @transform_9(%arg0: i32) -> (i32, i32) {
    %c0_i32 = arith.constant 0 : i32
    %c0_i32_0 = arith.constant 0 : i32
    return %arg0, %c0_i32 : i32, i32
  }
}

module attributes {stable_mosaic.version = 11 : i64} {
  func.func @transfer_kernel(%arg0: i32, %arg1: memref<8x18xf32, #tpu.memory_space<vmem>>, %arg2: memref<8x200xf32, #tpu.memory_space<vmem>>, %arg3: memref<8x800xf32, #tpu.memory_space<vmem>>, %arg4: memref<8x256xf32, #tpu.memory_space<vmem>>, %arg5: memref<57x256xf32, #tpu.memory_space<vmem>>, %arg6: memref<18x240xf32, #tpu.memory_space<vmem>>, %arg7: memref<240x60xf32, #tpu.memory_space<vmem>>, %arg8: memref<10x20xf32, #tpu.memory_space<vmem>>, %arg9: memref<60x154xf32, #tpu.memory_space<vmem>>, %arg10: memref<17x154xf32, #tpu.memory_space<vmem>>, %arg11: memref<20x154xf32, #tpu.memory_space<vmem>>, %arg12: memref<154x256xf32, #tpu.memory_space<vmem>>, %arg13: memref<17x80xf32, #tpu.memory_space<vmem>>, %arg14: memref<80x24xf32, #tpu.memory_space<vmem>>, %arg15: memref<4x100x100xf32, #tpu.memory_space<vmem>>, %arg16: memref<4x100x50xf32, #tpu.memory_space<vmem>>, %arg17: memref<4x50x10xf32, #tpu.memory_space<vmem>>, %arg18: memref<8x4xf32, #tpu.memory_space<vmem>>) attributes {dimension_semantics = [#tpu.dimension_semantics<parallel>], iteration_bounds = array<i64: 1>, scalar_prefetch = 0 : i64, scratch_operands = 0 : i64, tpu.core_type = #tpu.core_type<tc>, window_params = [{transform_indices = @transform_0, window_bounds = array<i64: 8, 18>}, {transform_indices = @transform_1, window_bounds = array<i64: 8, 200>}, {transform_indices = @transform_2, window_bounds = array<i64: 8, 800>}, {pipeline_mode = #tpu.pipeline_mode<synchronous>, transform_indices = @transform_3, window_bounds = array<i64: 8, 256>}, {pipeline_mode = #tpu.pipeline_mode<synchronous>, transform_indices = @transform_4, window_bounds = array<i64: 57, 256>}, {pipeline_mode = #tpu.pipeline_mode<synchronous>, transform_indices = @transform_5, window_bounds = array<i64: 18, 240>}, {pipeline_mode = #tpu.pipeline_mode<synchronous>, transform_indices = @transform_6, window_bounds = array<i64: 240, 60>}, {pipeline_mode = #tpu.pipeline_mode<synchronous>, transform_indices = @transform_7, window_bounds = array<i64: 10, 20>}, {pipeline_mode = #tpu.pipeline_mode<synchronous>, transform_indices = @transform_8, window_bounds = array<i64: 60, 154>}, {pipeline_mode = #tpu.pipeline_mode<synchronous>, transform_indices = @transform_9, window_bounds = array<i64: 17, 154>}, {pipeline_mode = #tpu.pipeline_mode<synchronous>, transform_indices = @transform_10, window_bounds = array<i64: 20, 154>}, {pipeline_mode = #tpu.pipeline_mode<synchronous>, transform_indices = @transform_11, window_bounds = array<i64: 154, 256>}, {pipeline_mode = #tpu.pipeline_mode<synchronous>, transform_indices = @transform_12, window_bounds = array<i64: 17, 80>}, {pipeline_mode = #tpu.pipeline_mode<synchronous>, transform_indices = @transform_13, window_bounds = array<i64: 80, 24>}, {pipeline_mode = #tpu.pipeline_mode<synchronous>, transform_indices = @transform_14, window_bounds = array<i64: 4, 100, 100>}, {pipeline_mode = #tpu.pipeline_mode<synchronous>, transform_indices = @transform_15, window_bounds = array<i64: 4, 100, 50>}, {pipeline_mode = #tpu.pipeline_mode<synchronous>, transform_indices = @transform_16, window_bounds = array<i64: 4, 50, 10>}, {transform_indices = @transform_17, window_bounds = array<i64: 8, 4>}]} {
    %c0 = arith.constant 0 : index
    %c0_0 = arith.constant 0 : index
    %0 = vector.load %arg1[%c0, %c0_0] : memref<8x18xf32, #tpu.memory_space<vmem>>, vector<8x18xf32>
    %1 = vector.extract_strided_slice %0 {offsets = [0, 0], sizes = [8, 17], strides = [1, 1]} : vector<8x18xf32> to vector<8x17xf32>
    %2 = vector.extract_strided_slice %0 {offsets = [0, 17], sizes = [8, 1], strides = [1, 1]} : vector<8x18xf32> to vector<8x1xf32>
    %c0_1 = arith.constant 0 : index
    %c0_2 = arith.constant 0 : index
    %3 = vector.load %arg6[%c0_1, %c0_2] : memref<18x240xf32, #tpu.memory_space<vmem>>, vector<18x240xf32>
    %cst = arith.constant dense<0.000000e+00> : vector<8x240xf32>
    %4 = tpu.matmul %0, %3, %cst {dimension_numbers = #tpu.dot_dimension_numbers<[1], [0], [0], [1], [0, 0, 1, 1], [], []>} : vector<8x18xf32>, vector<18x240xf32>, vector<8x240xf32> -> vector<8x240xf32>
    %c0_3 = arith.constant 0 : index
    %c0_4 = arith.constant 0 : index
    %5 = vector.load %arg5[%c0_3, %c0_4] : memref<57x256xf32, #tpu.memory_space<vmem>>, vector<1x240xf32>
    %6 = vector.broadcast %5 : vector<1x240xf32> to vector<8x240xf32>
    %7 = arith.addf %4, %6 : vector<8x240xf32>
    %cst_5 = arith.constant 0.000000e+00 : f32
    %8 = vector.broadcast %cst_5 : f32 to vector<8x240xf32>
    %9 = arith.cmpf ogt, %7, %8 : vector<8x240xf32>
    %cst_6 = arith.constant 0.00999999977 : f32
    %10 = vector.broadcast %cst_6 : f32 to vector<8x240xf32>
    %11 = arith.mulf %10, %7 : vector<8x240xf32>
    %12 = arith.select %9, %7, %11 : vector<8x240xi1>, vector<8x240xf32>
    %c0_7 = arith.constant 0 : index
    %c0_8 = arith.constant 0 : index
    %13 = vector.load %arg7[%c0_7, %c0_8] : memref<240x60xf32, #tpu.memory_space<vmem>>, vector<240x60xf32>
    %cst_9 = arith.constant dense<0.000000e+00> : vector<8x60xf32>
    %14 = tpu.matmul %12, %13, %cst_9 {dimension_numbers = #tpu.dot_dimension_numbers<[1], [0], [0], [1], [0, 0, 1, 1], [], []>} : vector<8x240xf32>, vector<240x60xf32>, vector<8x60xf32> -> vector<8x60xf32>
    %c1 = arith.constant 1 : index
    %c0_10 = arith.constant 0 : index
    %15 = vector.load %arg5[%c1, %c0_10] : memref<57x256xf32, #tpu.memory_space<vmem>>, vector<1x60xf32>
    %16 = vector.broadcast %15 : vector<1x60xf32> to vector<8x60xf32>
    %17 = arith.addf %14, %16 : vector<8x60xf32>
    %c2 = arith.constant 2 : index
    %c0_11 = arith.constant 0 : index
    %18 = vector.load %arg5[%c2, %c0_11] : memref<57x256xf32, #tpu.memory_space<vmem>>, vector<1x10xf32>
    %19 = vector.broadcast %2 : vector<8x1xf32> to vector<8x10xf32>
    %20 = vector.broadcast %18 : vector<1x10xf32> to vector<8x10xf32>
    %21 = arith.mulf %19, %20 : vector<8x10xf32>
    %c3 = arith.constant 3 : index
    %c0_12 = arith.constant 0 : index
    %22 = vector.load %arg5[%c3, %c0_12] : memref<57x256xf32, #tpu.memory_space<vmem>>, vector<1x10xf32>
    %23 = vector.broadcast %22 : vector<1x10xf32> to vector<8x10xf32>
    %24 = arith.addf %21, %23 : vector<8x10xf32>
    %cst_13 = arith.constant 0.000000e+00 : f32
    %25 = vector.broadcast %cst_13 : f32 to vector<8x10xf32>
    %26 = arith.cmpf ogt, %24, %25 : vector<8x10xf32>
    %cst_14 = arith.constant 0.00999999977 : f32
    %27 = vector.broadcast %cst_14 : f32 to vector<8x10xf32>
    %28 = arith.mulf %27, %24 : vector<8x10xf32>
    %29 = arith.select %26, %24, %28 : vector<8x10xi1>, vector<8x10xf32>
    %c0_15 = arith.constant 0 : index
    %c0_16 = arith.constant 0 : index
    %30 = vector.load %arg8[%c0_15, %c0_16] : memref<10x20xf32, #tpu.memory_space<vmem>>, vector<10x20xf32>
    %cst_17 = arith.constant dense<0.000000e+00> : vector<8x20xf32>
    %31 = tpu.matmul %29, %30, %cst_17 {dimension_numbers = #tpu.dot_dimension_numbers<[1], [0], [0], [1], [0, 0, 1, 1], [], []>} : vector<8x10xf32>, vector<10x20xf32>, vector<8x20xf32> -> vector<8x20xf32>
    %c4 = arith.constant 4 : index
    %c0_18 = arith.constant 0 : index
    %32 = vector.load %arg5[%c4, %c0_18] : memref<57x256xf32, #tpu.memory_space<vmem>>, vector<1x20xf32>
    %33 = vector.broadcast %32 : vector<1x20xf32> to vector<8x20xf32>
    %34 = arith.addf %31, %33 : vector<8x20xf32>
    %c0_19 = arith.constant 0 : index
    %c0_20 = arith.constant 0 : index
    %35 = vector.load %arg9[%c0_19, %c0_20] : memref<60x154xf32, #tpu.memory_space<vmem>>, vector<60x154xf32>
    %cst_21 = arith.constant dense<0.000000e+00> : vector<8x154xf32>
    %36 = tpu.matmul %17, %35, %cst_21 {dimension_numbers = #tpu.dot_dimension_numbers<[1], [0], [0], [1], [0, 0, 1, 1], [], []>} : vector<8x60xf32>, vector<60x154xf32>, vector<8x154xf32> -> vector<8x154xf32>
    %c0_22 = arith.constant 0 : index
    %c0_23 = arith.constant 0 : index
    %37 = vector.load %arg10[%c0_22, %c0_23] : memref<17x154xf32, #tpu.memory_space<vmem>>, vector<17x154xf32>
    %cst_24 = arith.constant dense<0.000000e+00> : vector<8x154xf32>
    %38 = tpu.matmul %1, %37, %cst_24 {dimension_numbers = #tpu.dot_dimension_numbers<[1], [0], [0], [1], [0, 0, 1, 1], [], []>} : vector<8x17xf32>, vector<17x154xf32>, vector<8x154xf32> -> vector<8x154xf32>
    %39 = arith.addf %36, %38 : vector<8x154xf32>
    %c0_25 = arith.constant 0 : index
    %c0_26 = arith.constant 0 : index
    %40 = vector.load %arg11[%c0_25, %c0_26] : memref<20x154xf32, #tpu.memory_space<vmem>>, vector<20x154xf32>
    %cst_27 = arith.constant dense<0.000000e+00> : vector<8x154xf32>
    %41 = tpu.matmul %34, %40, %cst_27 {dimension_numbers = #tpu.dot_dimension_numbers<[1], [0], [0], [1], [0, 0, 1, 1], [], []>} : vector<8x20xf32>, vector<20x154xf32>, vector<8x154xf32> -> vector<8x154xf32>
    %42 = arith.addf %39, %41 : vector<8x154xf32>
    %c5 = arith.constant 5 : index
    %c0_28 = arith.constant 0 : index
    %43 = vector.load %arg5[%c5, %c0_28] : memref<57x256xf32, #tpu.memory_space<vmem>>, vector<1x154xf32>
    %44 = vector.broadcast %43 : vector<1x154xf32> to vector<8x154xf32>
    %45 = arith.addf %42, %44 : vector<8x154xf32>
    %c0_29 = arith.constant 0 : index
    %c0_30 = arith.constant 0 : index
    %46 = vector.load %arg13[%c0_29, %c0_30] : memref<17x80xf32, #tpu.memory_space<vmem>>, vector<17x80xf32>
    %cst_31 = arith.constant dense<0.000000e+00> : vector<8x80xf32>
    %47 = tpu.matmul %1, %46, %cst_31 {dimension_numbers = #tpu.dot_dimension_numbers<[1], [0], [0], [1], [0, 0, 1, 1], [], []>} : vector<8x17xf32>, vector<17x80xf32>, vector<8x80xf32> -> vector<8x80xf32>
    %c9 = arith.constant 9 : index
    %c0_32 = arith.constant 0 : index
    %48 = vector.load %arg5[%c9, %c0_32] : memref<57x256xf32, #tpu.memory_space<vmem>>, vector<1x80xf32>
    %49 = vector.broadcast %48 : vector<1x80xf32> to vector<8x80xf32>
    %50 = arith.addf %47, %49 : vector<8x80xf32>
    %c0_33 = arith.constant 0 : index
    %c0_34 = arith.constant 0 : index
    %51 = vector.load %arg4[%c0_33, %c0_34] : memref<8x256xf32, #tpu.memory_space<vmem>>, vector<1x154xf32>
    %c1_35 = arith.constant 1 : index
    %c0_36 = arith.constant 0 : index
    %52 = vector.load %arg4[%c1_35, %c0_36] : memref<8x256xf32, #tpu.memory_space<vmem>>, vector<1x154xf32>
    %c6 = arith.constant 6 : index
    %c0_37 = arith.constant 0 : index
    %53 = vector.load %arg5[%c6, %c0_37] : memref<57x256xf32, #tpu.memory_space<vmem>>, vector<1x154xf32>
    %c7 = arith.constant 7 : index
    %c0_38 = arith.constant 0 : index
    %54 = vector.load %arg5[%c7, %c0_38] : memref<57x256xf32, #tpu.memory_space<vmem>>, vector<1x154xf32>
    %55 = vector.broadcast %51 : vector<1x154xf32> to vector<8x154xf32>
    %56 = arith.subf %45, %55 : vector<8x154xf32>
    %cst_39 = arith.constant 9.99999974E-6 : f32
    %57 = vector.broadcast %cst_39 : f32 to vector<1x154xf32>
    %58 = arith.addf %52, %57 : vector<1x154xf32>
    %59 = math.rsqrt %58 : vector<1x154xf32>
    %60 = arith.mulf %59, %53 : vector<1x154xf32>
    %61 = vector.broadcast %60 : vector<1x154xf32> to vector<8x154xf32>
    %62 = arith.mulf %56, %61 : vector<8x154xf32>
    %63 = vector.broadcast %54 : vector<1x154xf32> to vector<8x154xf32>
    %64 = arith.addf %62, %63 : vector<8x154xf32>
    %cst_40 = arith.constant 0.000000e+00 : f32
    %65 = vector.broadcast %cst_40 : f32 to vector<8x154xf32>
    %66 = arith.cmpf ogt, %64, %65 : vector<8x154xf32>
    %cst_41 = arith.constant 0.00999999977 : f32
    %67 = vector.broadcast %cst_41 : f32 to vector<8x154xf32>
    %68 = arith.mulf %67, %64 : vector<8x154xf32>
    %69 = arith.select %66, %64, %68 : vector<8x154xi1>, vector<8x154xf32>
    %c0_42 = arith.constant 0 : index
    %c0_43 = arith.constant 0 : index
    %70 = vector.load %arg12[%c0_42, %c0_43] : memref<154x256xf32, #tpu.memory_space<vmem>>, vector<154x256xf32>
    %cst_44 = arith.constant dense<0.000000e+00> : vector<8x256xf32>
    %71 = tpu.matmul %69, %70, %cst_44 {dimension_numbers = #tpu.dot_dimension_numbers<[1], [0], [0], [1], [0, 0, 1, 1], [], []>} : vector<8x154xf32>, vector<154x256xf32>, vector<8x256xf32> -> vector<8x256xf32>
    %c8 = arith.constant 8 : index
    %c0_45 = arith.constant 0 : index
    %72 = vector.load %arg5[%c8, %c0_45] : memref<57x256xf32, #tpu.memory_space<vmem>>, vector<1x256xf32>
    %73 = vector.broadcast %72 : vector<1x256xf32> to vector<8x256xf32>
    %74 = arith.addf %71, %73 : vector<8x256xf32>
    %75 = vector.extract_strided_slice %74 {offsets = [0, 0], sizes = [8, 100], strides = [1, 1]} : vector<8x256xf32> to vector<8x100xf32>
    %76 = vector.extract_strided_slice %74 {offsets = [0, 128], sizes = [8, 100], strides = [1, 1]} : vector<8x256xf32> to vector<8x100xf32>
    %c2_46 = arith.constant 2 : index
    %c0_47 = arith.constant 0 : index
    %77 = vector.load %arg4[%c2_46, %c0_47] : memref<8x256xf32, #tpu.memory_space<vmem>>, vector<1x80xf32>
    %c3_48 = arith.constant 3 : index
    %c0_49 = arith.constant 0 : index
    %78 = vector.load %arg4[%c3_48, %c0_49] : memref<8x256xf32, #tpu.memory_space<vmem>>, vector<1x80xf32>
    %c10 = arith.constant 10 : index
    %c0_50 = arith.constant 0 : index
    %79 = vector.load %arg5[%c10, %c0_50] : memref<57x256xf32, #tpu.memory_space<vmem>>, vector<1x80xf32>
    %c11 = arith.constant 11 : index
    %c0_51 = arith.constant 0 : index
    %80 = vector.load %arg5[%c11, %c0_51] : memref<57x256xf32, #tpu.memory_space<vmem>>, vector<1x80xf32>
    %81 = vector.broadcast %77 : vector<1x80xf32> to vector<8x80xf32>
    %82 = arith.subf %50, %81 : vector<8x80xf32>
    %cst_52 = arith.constant 9.99999974E-6 : f32
    %83 = vector.broadcast %cst_52 : f32 to vector<1x80xf32>
    %84 = arith.addf %78, %83 : vector<1x80xf32>
    %85 = math.rsqrt %84 : vector<1x80xf32>
    %86 = arith.mulf %85, %79 : vector<1x80xf32>
    %87 = vector.broadcast %86 : vector<1x80xf32> to vector<8x80xf32>
    %88 = arith.mulf %82, %87 : vector<8x80xf32>
    %89 = vector.broadcast %80 : vector<1x80xf32> to vector<8x80xf32>
    %90 = arith.addf %88, %89 : vector<8x80xf32>
    %cst_53 = arith.constant 0.000000e+00 : f32
    %91 = vector.broadcast %cst_53 : f32 to vector<8x80xf32>
    %92 = arith.cmpf ogt, %90, %91 : vector<8x80xf32>
    %cst_54 = arith.constant 0.00999999977 : f32
    %93 = vector.broadcast %cst_54 : f32 to vector<8x80xf32>
    %94 = arith.mulf %93, %90 : vector<8x80xf32>
    %95 = arith.select %92, %90, %94 : vector<8x80xi1>, vector<8x80xf32>
    %c0_55 = arith.constant 0 : index
    %c0_56 = arith.constant 0 : index
    %96 = vector.load %arg14[%c0_55, %c0_56] : memref<80x24xf32, #tpu.memory_space<vmem>>, vector<80x24xf32>
    %cst_57 = arith.constant dense<0.000000e+00> : vector<8x24xf32>
    %97 = tpu.matmul %95, %96, %cst_57 {dimension_numbers = #tpu.dot_dimension_numbers<[1], [0], [0], [1], [0, 0, 1, 1], [], []>} : vector<8x80xf32>, vector<80x24xf32>, vector<8x24xf32> -> vector<8x24xf32>
    %c12 = arith.constant 12 : index
    %c0_58 = arith.constant 0 : index
    %98 = vector.load %arg5[%c12, %c0_58] : memref<57x256xf32, #tpu.memory_space<vmem>>, vector<1x24xf32>
    %99 = vector.broadcast %98 : vector<1x24xf32> to vector<8x24xf32>
    %100 = arith.addf %97, %99 : vector<8x24xf32>
    %c0_59 = arith.constant 0 : index
    %c0_60 = arith.constant 0 : index
    %101 = vector.load %arg2[%c0_59, %c0_60] : memref<8x200xf32, #tpu.memory_space<vmem>>, vector<8x100xf32>
    %c0_61 = arith.constant 0 : index
    %c100 = arith.constant 100 : index
    %102 = vector.load %arg2[%c0_61, %c100] : memref<8x200xf32, #tpu.memory_space<vmem>>, vector<8x100xf32>
    %103 = vector.extract_strided_slice %100 {offsets = [0, 0], sizes = [8, 6], strides = [1, 1]} : vector<8x24xf32> to vector<8x6xf32>
    %cst_62 = arith.constant dense<0xFF800000> : vector<8xf32>
    %104 = vector.multi_reduction <maximumf>, %103, %cst_62 [1] : vector<8x6xf32> to vector<8xf32>
    %105 = vector.shape_cast %104 : vector<8xf32> to vector<8x1xf32>
    %106 = vector.broadcast %105 : vector<8x1xf32> to vector<8x6xf32>
    %107 = arith.subf %103, %106 : vector<8x6xf32>
    %108 = math.exp %107 : vector<8x6xf32>
    %cst_63 = arith.constant dense<0.000000e+00> : vector<8xf32>
    %109 = vector.multi_reduction <add>, %108, %cst_63 [1] : vector<8x6xf32> to vector<8xf32>
    %110 = vector.shape_cast %109 : vector<8xf32> to vector<8x1xf32>
    %111 = vector.broadcast %110 : vector<8x1xf32> to vector<8x6xf32>
    %112 = arith.divf %108, %111 : vector<8x6xf32>
    %c0_64 = arith.constant 0 : index
    %c0_65 = arith.constant 0 : index
    %113 = vector.load %arg3[%c0_64, %c0_65] : memref<8x800xf32, #tpu.memory_space<vmem>>, vector<8x100xf32>
    %c0_66 = arith.constant 0 : index
    %c100_67 = arith.constant 100 : index
    %114 = vector.load %arg3[%c0_66, %c100_67] : memref<8x800xf32, #tpu.memory_space<vmem>>, vector<8x100xf32>
    %115 = vector.extract_strided_slice %112 {offsets = [0, 0], sizes = [8, 1], strides = [1, 1]} : vector<8x6xf32> to vector<8x1xf32>
    %116 = vector.broadcast %115 : vector<8x1xf32> to vector<8x100xf32>
    %117 = arith.mulf %116, %101 : vector<8x100xf32>
    %118 = vector.extract_strided_slice %112 {offsets = [0, 1], sizes = [8, 1], strides = [1, 1]} : vector<8x6xf32> to vector<8x1xf32>
    %119 = vector.broadcast %118 : vector<8x1xf32> to vector<8x100xf32>
    %120 = arith.mulf %119, %102 : vector<8x100xf32>
    %121 = arith.addf %117, %120 : vector<8x100xf32>
    %122 = vector.extract_strided_slice %112 {offsets = [0, 2], sizes = [8, 1], strides = [1, 1]} : vector<8x6xf32> to vector<8x1xf32>
    %123 = vector.broadcast %122 : vector<8x1xf32> to vector<8x100xf32>
    %124 = arith.mulf %123, %113 : vector<8x100xf32>
    %125 = arith.addf %121, %124 : vector<8x100xf32>
    %126 = vector.extract_strided_slice %112 {offsets = [0, 3], sizes = [8, 1], strides = [1, 1]} : vector<8x6xf32> to vector<8x1xf32>
    %127 = vector.broadcast %126 : vector<8x1xf32> to vector<8x100xf32>
    %128 = arith.mulf %127, %114 : vector<8x100xf32>
    %129 = arith.addf %125, %128 : vector<8x100xf32>
    %130 = vector.extract_strided_slice %112 {offsets = [0, 4], sizes = [8, 1], strides = [1, 1]} : vector<8x6xf32> to vector<8x1xf32>
    %131 = vector.broadcast %130 : vector<8x1xf32> to vector<8x100xf32>
    %132 = arith.mulf %131, %75 : vector<8x100xf32>
    %133 = arith.addf %129, %132 : vector<8x100xf32>
    %134 = vector.extract_strided_slice %112 {offsets = [0, 5], sizes = [8, 1], strides = [1, 1]} : vector<8x6xf32> to vector<8x1xf32>
    %135 = vector.broadcast %134 : vector<8x1xf32> to vector<8x100xf32>
    %136 = arith.mulf %135, %76 : vector<8x100xf32>
    %137 = arith.addf %133, %136 : vector<8x100xf32>
    %cst_68 = arith.constant 0.166666672 : f32
    %138 = vector.broadcast %cst_68 : f32 to vector<8x100xf32>
    %139 = arith.mulf %137, %138 : vector<8x100xf32>
    %c0_69 = arith.constant 0 : index
    %c0_70 = arith.constant 0 : index
    %c0_71 = arith.constant 0 : index
    %140 = vector.load %arg15[%c0_69, %c0_70, %c0_71] : memref<4x100x100xf32, #tpu.memory_space<vmem>>, vector<1x100x100xf32>
    %141 = vector.shape_cast %140 : vector<1x100x100xf32> to vector<100x100xf32>
    %cst_72 = arith.constant dense<0.000000e+00> : vector<8x100xf32>
    %142 = tpu.matmul %139, %141, %cst_72 {dimension_numbers = #tpu.dot_dimension_numbers<[1], [0], [0], [1], [0, 0, 1, 1], [], []>} : vector<8x100xf32>, vector<100x100xf32>, vector<8x100xf32> -> vector<8x100xf32>
    %c13 = arith.constant 13 : index
    %c0_73 = arith.constant 0 : index
    %143 = vector.load %arg5[%c13, %c0_73] : memref<57x256xf32, #tpu.memory_space<vmem>>, vector<1x100xf32>
    %144 = vector.broadcast %143 : vector<1x100xf32> to vector<8x100xf32>
    %145 = arith.addf %142, %144 : vector<8x100xf32>
    %c14 = arith.constant 14 : index
    %c0_74 = arith.constant 0 : index
    %146 = vector.load %arg5[%c14, %c0_74] : memref<57x256xf32, #tpu.memory_space<vmem>>, vector<1x100xf32>
    %c15 = arith.constant 15 : index
    %c0_75 = arith.constant 0 : index
    %147 = vector.load %arg5[%c15, %c0_75] : memref<57x256xf32, #tpu.memory_space<vmem>>, vector<1x100xf32>
    %cst_76 = arith.constant dense<0.000000e+00> : vector<8xf32>
    %148 = vector.multi_reduction <add>, %145, %cst_76 [1] : vector<8x100xf32> to vector<8xf32>
    %149 = vector.shape_cast %148 : vector<8xf32> to vector<8x1xf32>
    %cst_77 = arith.constant 1.000000e+02 : f32
    %150 = vector.broadcast %cst_77 : f32 to vector<8x1xf32>
    %151 = arith.divf %149, %150 : vector<8x1xf32>
    %152 = vector.broadcast %151 : vector<8x1xf32> to vector<8x100xf32>
    %153 = arith.subf %145, %152 : vector<8x100xf32>
    %154 = arith.mulf %153, %153 : vector<8x100xf32>
    %cst_78 = arith.constant dense<0.000000e+00> : vector<8xf32>
    %155 = vector.multi_reduction <add>, %154, %cst_78 [1] : vector<8x100xf32> to vector<8xf32>
    %156 = vector.shape_cast %155 : vector<8xf32> to vector<8x1xf32>
    %cst_79 = arith.constant 1.000000e+02 : f32
    %157 = vector.broadcast %cst_79 : f32 to vector<8x1xf32>
    %158 = arith.divf %156, %157 : vector<8x1xf32>
    %159 = vector.broadcast %151 : vector<8x1xf32> to vector<8x100xf32>
    %160 = arith.subf %145, %159 : vector<8x100xf32>
    %cst_80 = arith.constant 9.99999974E-6 : f32
    %161 = vector.broadcast %cst_80 : f32 to vector<8x1xf32>
    %162 = arith.addf %158, %161 : vector<8x1xf32>
    %163 = math.rsqrt %162 : vector<8x1xf32>
    %164 = vector.broadcast %163 : vector<8x1xf32> to vector<8x100xf32>
    %165 = arith.mulf %160, %164 : vector<8x100xf32>
    %166 = vector.broadcast %146 : vector<1x100xf32> to vector<8x100xf32>
    %167 = arith.mulf %165, %166 : vector<8x100xf32>
    %168 = vector.broadcast %147 : vector<1x100xf32> to vector<8x100xf32>
    %169 = arith.addf %167, %168 : vector<8x100xf32>
    %cst_81 = arith.constant 0.000000e+00 : f32
    %170 = vector.broadcast %cst_81 : f32 to vector<8x100xf32>
    %171 = arith.cmpf ogt, %169, %170 : vector<8x100xf32>
    %cst_82 = arith.constant 0.00999999977 : f32
    %172 = vector.broadcast %cst_82 : f32 to vector<8x100xf32>
    %173 = arith.mulf %172, %169 : vector<8x100xf32>
    %174 = arith.select %171, %169, %173 : vector<8x100xi1>, vector<8x100xf32>
    %c0_83 = arith.constant 0 : index
    %c0_84 = arith.constant 0 : index
    %c0_85 = arith.constant 0 : index
    %175 = vector.load %arg16[%c0_83, %c0_84, %c0_85] : memref<4x100x50xf32, #tpu.memory_space<vmem>>, vector<1x100x50xf32>
    %176 = vector.shape_cast %175 : vector<1x100x50xf32> to vector<100x50xf32>
    %cst_86 = arith.constant dense<0.000000e+00> : vector<8x50xf32>
    %177 = tpu.matmul %174, %176, %cst_86 {dimension_numbers = #tpu.dot_dimension_numbers<[1], [0], [0], [1], [0, 0, 1, 1], [], []>} : vector<8x100xf32>, vector<100x50xf32>, vector<8x50xf32> -> vector<8x50xf32>
    %c16 = arith.constant 16 : index
    %c0_87 = arith.constant 0 : index
    %178 = vector.load %arg5[%c16, %c0_87] : memref<57x256xf32, #tpu.memory_space<vmem>>, vector<1x50xf32>
    %179 = vector.broadcast %178 : vector<1x50xf32> to vector<8x50xf32>
    %180 = arith.addf %177, %179 : vector<8x50xf32>
    %c17 = arith.constant 17 : index
    %c0_88 = arith.constant 0 : index
    %181 = vector.load %arg5[%c17, %c0_88] : memref<57x256xf32, #tpu.memory_space<vmem>>, vector<1x50xf32>
    %c18 = arith.constant 18 : index
    %c0_89 = arith.constant 0 : index
    %182 = vector.load %arg5[%c18, %c0_89] : memref<57x256xf32, #tpu.memory_space<vmem>>, vector<1x50xf32>
    %cst_90 = arith.constant dense<0.000000e+00> : vector<8xf32>
    %183 = vector.multi_reduction <add>, %180, %cst_90 [1] : vector<8x50xf32> to vector<8xf32>
    %184 = vector.shape_cast %183 : vector<8xf32> to vector<8x1xf32>
    %cst_91 = arith.constant 5.000000e+01 : f32
    %185 = vector.broadcast %cst_91 : f32 to vector<8x1xf32>
    %186 = arith.divf %184, %185 : vector<8x1xf32>
    %187 = vector.broadcast %186 : vector<8x1xf32> to vector<8x50xf32>
    %188 = arith.subf %180, %187 : vector<8x50xf32>
    %189 = arith.mulf %188, %188 : vector<8x50xf32>
    %cst_92 = arith.constant dense<0.000000e+00> : vector<8xf32>
    %190 = vector.multi_reduction <add>, %189, %cst_92 [1] : vector<8x50xf32> to vector<8xf32>
    %191 = vector.shape_cast %190 : vector<8xf32> to vector<8x1xf32>
    %cst_93 = arith.constant 5.000000e+01 : f32
    %192 = vector.broadcast %cst_93 : f32 to vector<8x1xf32>
    %193 = arith.divf %191, %192 : vector<8x1xf32>
    %194 = vector.broadcast %186 : vector<8x1xf32> to vector<8x50xf32>
    %195 = arith.subf %180, %194 : vector<8x50xf32>
    %cst_94 = arith.constant 9.99999974E-6 : f32
    %196 = vector.broadcast %cst_94 : f32 to vector<8x1xf32>
    %197 = arith.addf %193, %196 : vector<8x1xf32>
    %198 = math.rsqrt %197 : vector<8x1xf32>
    %199 = vector.broadcast %198 : vector<8x1xf32> to vector<8x50xf32>
    %200 = arith.mulf %195, %199 : vector<8x50xf32>
    %201 = vector.broadcast %181 : vector<1x50xf32> to vector<8x50xf32>
    %202 = arith.mulf %200, %201 : vector<8x50xf32>
    %203 = vector.broadcast %182 : vector<1x50xf32> to vector<8x50xf32>
    %204 = arith.addf %202, %203 : vector<8x50xf32>
    %cst_95 = arith.constant 0.000000e+00 : f32
    %205 = vector.broadcast %cst_95 : f32 to vector<8x50xf32>
    %206 = arith.cmpf ogt, %204, %205 : vector<8x50xf32>
    %cst_96 = arith.constant 0.00999999977 : f32
    %207 = vector.broadcast %cst_96 : f32 to vector<8x50xf32>
    %208 = arith.mulf %207, %204 : vector<8x50xf32>
    %209 = arith.select %206, %204, %208 : vector<8x50xi1>, vector<8x50xf32>
    %c0_97 = arith.constant 0 : index
    %c0_98 = arith.constant 0 : index
    %c0_99 = arith.constant 0 : index
    %210 = vector.load %arg17[%c0_97, %c0_98, %c0_99] : memref<4x50x10xf32, #tpu.memory_space<vmem>>, vector<1x50x10xf32>
    %211 = vector.shape_cast %210 : vector<1x50x10xf32> to vector<50x10xf32>
    %cst_100 = arith.constant dense<0.000000e+00> : vector<8x10xf32>
    %212 = tpu.matmul %209, %211, %cst_100 {dimension_numbers = #tpu.dot_dimension_numbers<[1], [0], [0], [1], [0, 0, 1, 1], [], []>} : vector<8x50xf32>, vector<50x10xf32>, vector<8x10xf32> -> vector<8x10xf32>
    %c19 = arith.constant 19 : index
    %c0_101 = arith.constant 0 : index
    %213 = vector.load %arg5[%c19, %c0_101] : memref<57x256xf32, #tpu.memory_space<vmem>>, vector<1x10xf32>
    %214 = vector.broadcast %213 : vector<1x10xf32> to vector<8x10xf32>
    %215 = arith.addf %212, %214 : vector<8x10xf32>
    %c20 = arith.constant 20 : index
    %c0_102 = arith.constant 0 : index
    %216 = vector.load %arg5[%c20, %c0_102] : memref<57x256xf32, #tpu.memory_space<vmem>>, vector<1x10xf32>
    %c21 = arith.constant 21 : index
    %c0_103 = arith.constant 0 : index
    %217 = vector.load %arg5[%c21, %c0_103] : memref<57x256xf32, #tpu.memory_space<vmem>>, vector<1x10xf32>
    %cst_104 = arith.constant dense<0.000000e+00> : vector<8xf32>
    %218 = vector.multi_reduction <add>, %215, %cst_104 [1] : vector<8x10xf32> to vector<8xf32>
    %219 = vector.shape_cast %218 : vector<8xf32> to vector<8x1xf32>
    %cst_105 = arith.constant 1.000000e+01 : f32
    %220 = vector.broadcast %cst_105 : f32 to vector<8x1xf32>
    %221 = arith.divf %219, %220 : vector<8x1xf32>
    %222 = vector.broadcast %221 : vector<8x1xf32> to vector<8x10xf32>
    %223 = arith.subf %215, %222 : vector<8x10xf32>
    %224 = arith.mulf %223, %223 : vector<8x10xf32>
    %cst_106 = arith.constant dense<0.000000e+00> : vector<8xf32>
    %225 = vector.multi_reduction <add>, %224, %cst_106 [1] : vector<8x10xf32> to vector<8xf32>
    %226 = vector.shape_cast %225 : vector<8xf32> to vector<8x1xf32>
    %cst_107 = arith.constant 1.000000e+01 : f32
    %227 = vector.broadcast %cst_107 : f32 to vector<8x1xf32>
    %228 = arith.divf %226, %227 : vector<8x1xf32>
    %229 = vector.broadcast %221 : vector<8x1xf32> to vector<8x10xf32>
    %230 = arith.subf %215, %229 : vector<8x10xf32>
    %cst_108 = arith.constant 9.99999974E-6 : f32
    %231 = vector.broadcast %cst_108 : f32 to vector<8x1xf32>
    %232 = arith.addf %228, %231 : vector<8x1xf32>
    %233 = math.rsqrt %232 : vector<8x1xf32>
    %234 = vector.broadcast %233 : vector<8x1xf32> to vector<8x10xf32>
    %235 = arith.mulf %230, %234 : vector<8x10xf32>
    %236 = vector.broadcast %216 : vector<1x10xf32> to vector<8x10xf32>
    %237 = arith.mulf %235, %236 : vector<8x10xf32>
    %238 = vector.broadcast %217 : vector<1x10xf32> to vector<8x10xf32>
    %239 = arith.addf %237, %238 : vector<8x10xf32>
    %cst_109 = arith.constant 0.000000e+00 : f32
    %240 = vector.broadcast %cst_109 : f32 to vector<8x10xf32>
    %241 = arith.cmpf ogt, %239, %240 : vector<8x10xf32>
    %cst_110 = arith.constant 0.00999999977 : f32
    %242 = vector.broadcast %cst_110 : f32 to vector<8x10xf32>
    %243 = arith.mulf %242, %239 : vector<8x10xf32>
    %244 = arith.select %241, %239, %243 : vector<8x10xi1>, vector<8x10xf32>
    %c22 = arith.constant 22 : index
    %c0_111 = arith.constant 0 : index
    %245 = vector.load %arg5[%c22, %c0_111] : memref<57x256xf32, #tpu.memory_space<vmem>>, vector<1x10xf32>
    %246 = vector.broadcast %245 : vector<1x10xf32> to vector<8x10xf32>
    %247 = arith.mulf %244, %246 : vector<8x10xf32>
    %cst_112 = arith.constant dense<0.000000e+00> : vector<8xf32>
    %248 = vector.multi_reduction <add>, %247, %cst_112 [1] : vector<8x10xf32> to vector<8xf32>
    %249 = vector.shape_cast %248 : vector<8xf32> to vector<8x1xf32>
    %c23 = arith.constant 23 : index
    %c0_113 = arith.constant 0 : index
    %250 = vector.load %arg5[%c23, %c0_113] : memref<57x256xf32, #tpu.memory_space<vmem>>, vector<1x1xf32>
    %251 = vector.broadcast %250 : vector<1x1xf32> to vector<8x1xf32>
    %252 = arith.addf %249, %251 : vector<8x1xf32>
    %c0_114 = arith.constant 0 : index
    %c0_115 = arith.constant 0 : index
    %253 = vector.load %arg18[%c0_114, %c0_115] : memref<8x4xf32, #tpu.memory_space<vmem>>, vector<8x1xf32>
    tpu.vector_store %arg18[%c0_114, %c0_115], %252 {strides = array<i32>} : memref<8x4xf32, #tpu.memory_space<vmem>>, vector<8x1xf32>,
    %254 = vector.extract_strided_slice %100 {offsets = [0, 6], sizes = [8, 6], strides = [1, 1]} : vector<8x24xf32> to vector<8x6xf32>
    %cst_116 = arith.constant dense<0xFF800000> : vector<8xf32>
    %255 = vector.multi_reduction <maximumf>, %254, %cst_116 [1] : vector<8x6xf32> to vector<8xf32>
    %256 = vector.shape_cast %255 : vector<8xf32> to vector<8x1xf32>
    %257 = vector.broadcast %256 : vector<8x1xf32> to vector<8x6xf32>
    %258 = arith.subf %254, %257 : vector<8x6xf32>
    %259 = math.exp %258 : vector<8x6xf32>
    %cst_117 = arith.constant dense<0.000000e+00> : vector<8xf32>
    %260 = vector.multi_reduction <add>, %259, %cst_117 [1] : vector<8x6xf32> to vector<8xf32>
    %261 = vector.shape_cast %260 : vector<8xf32> to vector<8x1xf32>
    %262 = vector.broadcast %261 : vector<8x1xf32> to vector<8x6xf32>
    %263 = arith.divf %259, %262 : vector<8x6xf32>
    %c0_118 = arith.constant 0 : index
    %c200 = arith.constant 200 : index
    %264 = vector.load %arg3[%c0_118, %c200] : memref<8x800xf32, #tpu.memory_space<vmem>>, vector<8x100xf32>
    %c0_119 = arith.constant 0 : index
    %c300 = arith.constant 300 : index
    %265 = vector.load %arg3[%c0_119, %c300] : memref<8x800xf32, #tpu.memory_space<vmem>>, vector<8x100xf32>
    %266 = vector.extract_strided_slice %263 {offsets = [0, 0], sizes = [8, 1], strides = [1, 1]} : vector<8x6xf32> to vector<8x1xf32>
    %267 = vector.broadcast %266 : vector<8x1xf32> to vector<8x100xf32>
    %268 = arith.mulf %267, %101 : vector<8x100xf32>
    %269 = vector.extract_strided_slice %263 {offsets = [0, 1], sizes = [8, 1], strides = [1, 1]} : vector<8x6xf32> to vector<8x1xf32>
    %270 = vector.broadcast %269 : vector<8x1xf32> to vector<8x100xf32>
    %271 = arith.mulf %270, %102 : vector<8x100xf32>
    %272 = arith.addf %268, %271 : vector<8x100xf32>
    %273 = vector.extract_strided_slice %263 {offsets = [0, 2], sizes = [8, 1], strides = [1, 1]} : vector<8x6xf32> to vector<8x1xf32>
    %274 = vector.broadcast %273 : vector<8x1xf32> to vector<8x100xf32>
    %275 = arith.mulf %274, %264 : vector<8x100xf32>
    %276 = arith.addf %272, %275 : vector<8x100xf32>
    %277 = vector.extract_strided_slice %263 {offsets = [0, 3], sizes = [8, 1], strides = [1, 1]} : vector<8x6xf32> to vector<8x1xf32>
    %278 = vector.broadcast %277 : vector<8x1xf32> to vector<8x100xf32>
    %279 = arith.mulf %278, %265 : vector<8x100xf32>
    %280 = arith.addf %276, %279 : vector<8x100xf32>
    %281 = vector.extract_strided_slice %263 {offsets = [0, 4], sizes = [8, 1], strides = [1, 1]} : vector<8x6xf32> to vector<8x1xf32>
    %282 = vector.broadcast %281 : vector<8x1xf32> to vector<8x100xf32>
    %283 = arith.mulf %282, %75 : vector<8x100xf32>
    %284 = arith.addf %280, %283 : vector<8x100xf32>
    %285 = vector.extract_strided_slice %263 {offsets = [0, 5], sizes = [8, 1], strides = [1, 1]} : vector<8x6xf32> to vector<8x1xf32>
    %286 = vector.broadcast %285 : vector<8x1xf32> to vector<8x100xf32>
    %287 = arith.mulf %286, %76 : vector<8x100xf32>
    %288 = arith.addf %284, %287 : vector<8x100xf32>
    %cst_120 = arith.constant 0.166666672 : f32
    %289 = vector.broadcast %cst_120 : f32 to vector<8x100xf32>
    %290 = arith.mulf %288, %289 : vector<8x100xf32>
    %c1_121 = arith.constant 1 : index
    %c0_122 = arith.constant 0 : index
    %c0_123 = arith.constant 0 : index
    %291 = vector.load %arg15[%c1_121, %c0_122, %c0_123] : memref<4x100x100xf32, #tpu.memory_space<vmem>>, vector<1x100x100xf32>
    %292 = vector.shape_cast %291 : vector<1x100x100xf32> to vector<100x100xf32>
    %cst_124 = arith.constant dense<0.000000e+00> : vector<8x100xf32>
    %293 = tpu.matmul %290, %292, %cst_124 {dimension_numbers = #tpu.dot_dimension_numbers<[1], [0], [0], [1], [0, 0, 1, 1], [], []>} : vector<8x100xf32>, vector<100x100xf32>, vector<8x100xf32> -> vector<8x100xf32>
    %c24 = arith.constant 24 : index
    %c0_125 = arith.constant 0 : index
    %294 = vector.load %arg5[%c24, %c0_125] : memref<57x256xf32, #tpu.memory_space<vmem>>, vector<1x100xf32>
    %295 = vector.broadcast %294 : vector<1x100xf32> to vector<8x100xf32>
    %296 = arith.addf %293, %295 : vector<8x100xf32>
    %c25 = arith.constant 25 : index
    %c0_126 = arith.constant 0 : index
    %297 = vector.load %arg5[%c25, %c0_126] : memref<57x256xf32, #tpu.memory_space<vmem>>, vector<1x100xf32>
    %c26 = arith.constant 26 : index
    %c0_127 = arith.constant 0 : index
    %298 = vector.load %arg5[%c26, %c0_127] : memref<57x256xf32, #tpu.memory_space<vmem>>, vector<1x100xf32>
    %cst_128 = arith.constant dense<0.000000e+00> : vector<8xf32>
    %299 = vector.multi_reduction <add>, %296, %cst_128 [1] : vector<8x100xf32> to vector<8xf32>
    %300 = vector.shape_cast %299 : vector<8xf32> to vector<8x1xf32>
    %cst_129 = arith.constant 1.000000e+02 : f32
    %301 = vector.broadcast %cst_129 : f32 to vector<8x1xf32>
    %302 = arith.divf %300, %301 : vector<8x1xf32>
    %303 = vector.broadcast %302 : vector<8x1xf32> to vector<8x100xf32>
    %304 = arith.subf %296, %303 : vector<8x100xf32>
    %305 = arith.mulf %304, %304 : vector<8x100xf32>
    %cst_130 = arith.constant dense<0.000000e+00> : vector<8xf32>
    %306 = vector.multi_reduction <add>, %305, %cst_130 [1] : vector<8x100xf32> to vector<8xf32>
    %307 = vector.shape_cast %306 : vector<8xf32> to vector<8x1xf32>
    %cst_131 = arith.constant 1.000000e+02 : f32
    %308 = vector.broadcast %cst_131 : f32 to vector<8x1xf32>
    %309 = arith.divf %307, %308 : vector<8x1xf32>
    %310 = vector.broadcast %302 : vector<8x1xf32> to vector<8x100xf32>
    %311 = arith.subf %296, %310 : vector<8x100xf32>
    %cst_132 = arith.constant 9.99999974E-6 : f32
    %312 = vector.broadcast %cst_132 : f32 to vector<8x1xf32>
    %313 = arith.addf %309, %312 : vector<8x1xf32>
    %314 = math.rsqrt %313 : vector<8x1xf32>
    %315 = vector.broadcast %314 : vector<8x1xf32> to vector<8x100xf32>
    %316 = arith.mulf %311, %315 : vector<8x100xf32>
    %317 = vector.broadcast %297 : vector<1x100xf32> to vector<8x100xf32>
    %318 = arith.mulf %316, %317 : vector<8x100xf32>
    %319 = vector.broadcast %298 : vector<1x100xf32> to vector<8x100xf32>
    %320 = arith.addf %318, %319 : vector<8x100xf32>
    %cst_133 = arith.constant 0.000000e+00 : f32
    %321 = vector.broadcast %cst_133 : f32 to vector<8x100xf32>
    %322 = arith.cmpf ogt, %320, %321 : vector<8x100xf32>
    %cst_134 = arith.constant 0.00999999977 : f32
    %323 = vector.broadcast %cst_134 : f32 to vector<8x100xf32>
    %324 = arith.mulf %323, %320 : vector<8x100xf32>
    %325 = arith.select %322, %320, %324 : vector<8x100xi1>, vector<8x100xf32>
    %c1_135 = arith.constant 1 : index
    %c0_136 = arith.constant 0 : index
    %c0_137 = arith.constant 0 : index
    %326 = vector.load %arg16[%c1_135, %c0_136, %c0_137] : memref<4x100x50xf32, #tpu.memory_space<vmem>>, vector<1x100x50xf32>
    %327 = vector.shape_cast %326 : vector<1x100x50xf32> to vector<100x50xf32>
    %cst_138 = arith.constant dense<0.000000e+00> : vector<8x50xf32>
    %328 = tpu.matmul %325, %327, %cst_138 {dimension_numbers = #tpu.dot_dimension_numbers<[1], [0], [0], [1], [0, 0, 1, 1], [], []>} : vector<8x100xf32>, vector<100x50xf32>, vector<8x50xf32> -> vector<8x50xf32>
    %c27 = arith.constant 27 : index
    %c0_139 = arith.constant 0 : index
    %329 = vector.load %arg5[%c27, %c0_139] : memref<57x256xf32, #tpu.memory_space<vmem>>, vector<1x50xf32>
    %330 = vector.broadcast %329 : vector<1x50xf32> to vector<8x50xf32>
    %331 = arith.addf %328, %330 : vector<8x50xf32>
    %c28 = arith.constant 28 : index
    %c0_140 = arith.constant 0 : index
    %332 = vector.load %arg5[%c28, %c0_140] : memref<57x256xf32, #tpu.memory_space<vmem>>, vector<1x50xf32>
    %c29 = arith.constant 29 : index
    %c0_141 = arith.constant 0 : index
    %333 = vector.load %arg5[%c29, %c0_141] : memref<57x256xf32, #tpu.memory_space<vmem>>, vector<1x50xf32>
    %cst_142 = arith.constant dense<0.000000e+00> : vector<8xf32>
    %334 = vector.multi_reduction <add>, %331, %cst_142 [1] : vector<8x50xf32> to vector<8xf32>
    %335 = vector.shape_cast %334 : vector<8xf32> to vector<8x1xf32>
    %cst_143 = arith.constant 5.000000e+01 : f32
    %336 = vector.broadcast %cst_143 : f32 to vector<8x1xf32>
    %337 = arith.divf %335, %336 : vector<8x1xf32>
    %338 = vector.broadcast %337 : vector<8x1xf32> to vector<8x50xf32>
    %339 = arith.subf %331, %338 : vector<8x50xf32>
    %340 = arith.mulf %339, %339 : vector<8x50xf32>
    %cst_144 = arith.constant dense<0.000000e+00> : vector<8xf32>
    %341 = vector.multi_reduction <add>, %340, %cst_144 [1] : vector<8x50xf32> to vector<8xf32>
    %342 = vector.shape_cast %341 : vector<8xf32> to vector<8x1xf32>
    %cst_145 = arith.constant 5.000000e+01 : f32
    %343 = vector.broadcast %cst_145 : f32 to vector<8x1xf32>
    %344 = arith.divf %342, %343 : vector<8x1xf32>
    %345 = vector.broadcast %337 : vector<8x1xf32> to vector<8x50xf32>
    %346 = arith.subf %331, %345 : vector<8x50xf32>
    %cst_146 = arith.constant 9.99999974E-6 : f32
    %347 = vector.broadcast %cst_146 : f32 to vector<8x1xf32>
    %348 = arith.addf %344, %347 : vector<8x1xf32>
    %349 = math.rsqrt %348 : vector<8x1xf32>
    %350 = vector.broadcast %349 : vector<8x1xf32> to vector<8x50xf32>
    %351 = arith.mulf %346, %350 : vector<8x50xf32>
    %352 = vector.broadcast %332 : vector<1x50xf32> to vector<8x50xf32>
    %353 = arith.mulf %351, %352 : vector<8x50xf32>
    %354 = vector.broadcast %333 : vector<1x50xf32> to vector<8x50xf32>
    %355 = arith.addf %353, %354 : vector<8x50xf32>
    %cst_147 = arith.constant 0.000000e+00 : f32
    %356 = vector.broadcast %cst_147 : f32 to vector<8x50xf32>
    %357 = arith.cmpf ogt, %355, %356 : vector<8x50xf32>
    %cst_148 = arith.constant 0.00999999977 : f32
    %358 = vector.broadcast %cst_148 : f32 to vector<8x50xf32>
    %359 = arith.mulf %358, %355 : vector<8x50xf32>
    %360 = arith.select %357, %355, %359 : vector<8x50xi1>, vector<8x50xf32>
    %c1_149 = arith.constant 1 : index
    %c0_150 = arith.constant 0 : index
    %c0_151 = arith.constant 0 : index
    %361 = vector.load %arg17[%c1_149, %c0_150, %c0_151] : memref<4x50x10xf32, #tpu.memory_space<vmem>>, vector<1x50x10xf32>
    %362 = vector.shape_cast %361 : vector<1x50x10xf32> to vector<50x10xf32>
    %cst_152 = arith.constant dense<0.000000e+00> : vector<8x10xf32>
    %363 = tpu.matmul %360, %362, %cst_152 {dimension_numbers = #tpu.dot_dimension_numbers<[1], [0], [0], [1], [0, 0, 1, 1], [], []>} : vector<8x50xf32>, vector<50x10xf32>, vector<8x10xf32> -> vector<8x10xf32>
    %c30 = arith.constant 30 : index
    %c0_153 = arith.constant 0 : index
    %364 = vector.load %arg5[%c30, %c0_153] : memref<57x256xf32, #tpu.memory_space<vmem>>, vector<1x10xf32>
    %365 = vector.broadcast %364 : vector<1x10xf32> to vector<8x10xf32>
    %366 = arith.addf %363, %365 : vector<8x10xf32>
    %c31 = arith.constant 31 : index
    %c0_154 = arith.constant 0 : index
    %367 = vector.load %arg5[%c31, %c0_154] : memref<57x256xf32, #tpu.memory_space<vmem>>, vector<1x10xf32>
    %c32 = arith.constant 32 : index
    %c0_155 = arith.constant 0 : index
    %368 = vector.load %arg5[%c32, %c0_155] : memref<57x256xf32, #tpu.memory_space<vmem>>, vector<1x10xf32>
    %cst_156 = arith.constant dense<0.000000e+00> : vector<8xf32>
    %369 = vector.multi_reduction <add>, %366, %cst_156 [1] : vector<8x10xf32> to vector<8xf32>
    %370 = vector.shape_cast %369 : vector<8xf32> to vector<8x1xf32>
    %cst_157 = arith.constant 1.000000e+01 : f32
    %371 = vector.broadcast %cst_157 : f32 to vector<8x1xf32>
    %372 = arith.divf %370, %371 : vector<8x1xf32>
    %373 = vector.broadcast %372 : vector<8x1xf32> to vector<8x10xf32>
    %374 = arith.subf %366, %373 : vector<8x10xf32>
    %375 = arith.mulf %374, %374 : vector<8x10xf32>
    %cst_158 = arith.constant dense<0.000000e+00> : vector<8xf32>
    %376 = vector.multi_reduction <add>, %375, %cst_158 [1] : vector<8x10xf32> to vector<8xf32>
    %377 = vector.shape_cast %376 : vector<8xf32> to vector<8x1xf32>
    %cst_159 = arith.constant 1.000000e+01 : f32
    %378 = vector.broadcast %cst_159 : f32 to vector<8x1xf32>
    %379 = arith.divf %377, %378 : vector<8x1xf32>
    %380 = vector.broadcast %372 : vector<8x1xf32> to vector<8x10xf32>
    %381 = arith.subf %366, %380 : vector<8x10xf32>
    %cst_160 = arith.constant 9.99999974E-6 : f32
    %382 = vector.broadcast %cst_160 : f32 to vector<8x1xf32>
    %383 = arith.addf %379, %382 : vector<8x1xf32>
    %384 = math.rsqrt %383 : vector<8x1xf32>
    %385 = vector.broadcast %384 : vector<8x1xf32> to vector<8x10xf32>
    %386 = arith.mulf %381, %385 : vector<8x10xf32>
    %387 = vector.broadcast %367 : vector<1x10xf32> to vector<8x10xf32>
    %388 = arith.mulf %386, %387 : vector<8x10xf32>
    %389 = vector.broadcast %368 : vector<1x10xf32> to vector<8x10xf32>
    %390 = arith.addf %388, %389 : vector<8x10xf32>
    %cst_161 = arith.constant 0.000000e+00 : f32
    %391 = vector.broadcast %cst_161 : f32 to vector<8x10xf32>
    %392 = arith.cmpf ogt, %390, %391 : vector<8x10xf32>
    %cst_162 = arith.constant 0.00999999977 : f32
    %393 = vector.broadcast %cst_162 : f32 to vector<8x10xf32>
    %394 = arith.mulf %393, %390 : vector<8x10xf32>
    %395 = arith.select %392, %390, %394 : vector<8x10xi1>, vector<8x10xf32>
    %c33 = arith.constant 33 : index
    %c0_163 = arith.constant 0 : index
    %396 = vector.load %arg5[%c33, %c0_163] : memref<57x256xf32, #tpu.memory_space<vmem>>, vector<1x10xf32>
    %397 = vector.broadcast %396 : vector<1x10xf32> to vector<8x10xf32>
    %398 = arith.mulf %395, %397 : vector<8x10xf32>
    %cst_164 = arith.constant dense<0.000000e+00> : vector<8xf32>
    %399 = vector.multi_reduction <add>, %398, %cst_164 [1] : vector<8x10xf32> to vector<8xf32>
    %400 = vector.shape_cast %399 : vector<8xf32> to vector<8x1xf32>
    %c34 = arith.constant 34 : index
    %c0_165 = arith.constant 0 : index
    %401 = vector.load %arg5[%c34, %c0_165] : memref<57x256xf32, #tpu.memory_space<vmem>>, vector<1x1xf32>
    %402 = vector.broadcast %401 : vector<1x1xf32> to vector<8x1xf32>
    %403 = arith.addf %400, %402 : vector<8x1xf32>
    %c0_166 = arith.constant 0 : index
    %c1_167 = arith.constant 1 : index
    %404 = vector.load %arg18[%c0_166, %c1_167] : memref<8x4xf32, #tpu.memory_space<vmem>>, vector<8x1xf32>
    tpu.vector_store %arg18[%c0_166, %c1_167], %403 {strides = array<i32>} : memref<8x4xf32, #tpu.memory_space<vmem>>, vector<8x1xf32>,
    %405 = vector.extract_strided_slice %100 {offsets = [0, 12], sizes = [8, 6], strides = [1, 1]} : vector<8x24xf32> to vector<8x6xf32>
    %cst_168 = arith.constant dense<0xFF800000> : vector<8xf32>
    %406 = vector.multi_reduction <maximumf>, %405, %cst_168 [1] : vector<8x6xf32> to vector<8xf32>
    %407 = vector.shape_cast %406 : vector<8xf32> to vector<8x1xf32>
    %408 = vector.broadcast %407 : vector<8x1xf32> to vector<8x6xf32>
    %409 = arith.subf %405, %408 : vector<8x6xf32>
    %410 = math.exp %409 : vector<8x6xf32>
    %cst_169 = arith.constant dense<0.000000e+00> : vector<8xf32>
    %411 = vector.multi_reduction <add>, %410, %cst_169 [1] : vector<8x6xf32> to vector<8xf32>
    %412 = vector.shape_cast %411 : vector<8xf32> to vector<8x1xf32>
    %413 = vector.broadcast %412 : vector<8x1xf32> to vector<8x6xf32>
    %414 = arith.divf %410, %413 : vector<8x6xf32>
    %c0_170 = arith.constant 0 : index
    %c400 = arith.constant 400 : index
    %415 = vector.load %arg3[%c0_170, %c400] : memref<8x800xf32, #tpu.memory_space<vmem>>, vector<8x100xf32>
    %c0_171 = arith.constant 0 : index
    %c500 = arith.constant 500 : index
    %416 = vector.load %arg3[%c0_171, %c500] : memref<8x800xf32, #tpu.memory_space<vmem>>, vector<8x100xf32>
    %417 = vector.extract_strided_slice %414 {offsets = [0, 0], sizes = [8, 1], strides = [1, 1]} : vector<8x6xf32> to vector<8x1xf32>
    %418 = vector.broadcast %417 : vector<8x1xf32> to vector<8x100xf32>
    %419 = arith.mulf %418, %101 : vector<8x100xf32>
    %420 = vector.extract_strided_slice %414 {offsets = [0, 1], sizes = [8, 1], strides = [1, 1]} : vector<8x6xf32> to vector<8x1xf32>
    %421 = vector.broadcast %420 : vector<8x1xf32> to vector<8x100xf32>
    %422 = arith.mulf %421, %102 : vector<8x100xf32>
    %423 = arith.addf %419, %422 : vector<8x100xf32>
    %424 = vector.extract_strided_slice %414 {offsets = [0, 2], sizes = [8, 1], strides = [1, 1]} : vector<8x6xf32> to vector<8x1xf32>
    %425 = vector.broadcast %424 : vector<8x1xf32> to vector<8x100xf32>
    %426 = arith.mulf %425, %415 : vector<8x100xf32>
    %427 = arith.addf %423, %426 : vector<8x100xf32>
    %428 = vector.extract_strided_slice %414 {offsets = [0, 3], sizes = [8, 1], strides = [1, 1]} : vector<8x6xf32> to vector<8x1xf32>
    %429 = vector.broadcast %428 : vector<8x1xf32> to vector<8x100xf32>
    %430 = arith.mulf %429, %416 : vector<8x100xf32>
    %431 = arith.addf %427, %430 : vector<8x100xf32>
    %432 = vector.extract_strided_slice %414 {offsets = [0, 4], sizes = [8, 1], strides = [1, 1]} : vector<8x6xf32> to vector<8x1xf32>
    %433 = vector.broadcast %432 : vector<8x1xf32> to vector<8x100xf32>
    %434 = arith.mulf %433, %75 : vector<8x100xf32>
    %435 = arith.addf %431, %434 : vector<8x100xf32>
    %436 = vector.extract_strided_slice %414 {offsets = [0, 5], sizes = [8, 1], strides = [1, 1]} : vector<8x6xf32> to vector<8x1xf32>
    %437 = vector.broadcast %436 : vector<8x1xf32> to vector<8x100xf32>
    %438 = arith.mulf %437, %76 : vector<8x100xf32>
    %439 = arith.addf %435, %438 : vector<8x100xf32>
    %cst_172 = arith.constant 0.166666672 : f32
    %440 = vector.broadcast %cst_172 : f32 to vector<8x100xf32>
    %441 = arith.mulf %439, %440 : vector<8x100xf32>
    %c2_173 = arith.constant 2 : index
    %c0_174 = arith.constant 0 : index
    %c0_175 = arith.constant 0 : index
    %442 = vector.load %arg15[%c2_173, %c0_174, %c0_175] : memref<4x100x100xf32, #tpu.memory_space<vmem>>, vector<1x100x100xf32>
    %443 = vector.shape_cast %442 : vector<1x100x100xf32> to vector<100x100xf32>
    %cst_176 = arith.constant dense<0.000000e+00> : vector<8x100xf32>
    %444 = tpu.matmul %441, %443, %cst_176 {dimension_numbers = #tpu.dot_dimension_numbers<[1], [0], [0], [1], [0, 0, 1, 1], [], []>} : vector<8x100xf32>, vector<100x100xf32>, vector<8x100xf32> -> vector<8x100xf32>
    %c35 = arith.constant 35 : index
    %c0_177 = arith.constant 0 : index
    %445 = vector.load %arg5[%c35, %c0_177] : memref<57x256xf32, #tpu.memory_space<vmem>>, vector<1x100xf32>
    %446 = vector.broadcast %445 : vector<1x100xf32> to vector<8x100xf32>
    %447 = arith.addf %444, %446 : vector<8x100xf32>
    %c36 = arith.constant 36 : index
    %c0_178 = arith.constant 0 : index
    %448 = vector.load %arg5[%c36, %c0_178] : memref<57x256xf32, #tpu.memory_space<vmem>>, vector<1x100xf32>
    %c37 = arith.constant 37 : index
    %c0_179 = arith.constant 0 : index
    %449 = vector.load %arg5[%c37, %c0_179] : memref<57x256xf32, #tpu.memory_space<vmem>>, vector<1x100xf32>
    %cst_180 = arith.constant dense<0.000000e+00> : vector<8xf32>
    %450 = vector.multi_reduction <add>, %447, %cst_180 [1] : vector<8x100xf32> to vector<8xf32>
    %451 = vector.shape_cast %450 : vector<8xf32> to vector<8x1xf32>
    %cst_181 = arith.constant 1.000000e+02 : f32
    %452 = vector.broadcast %cst_181 : f32 to vector<8x1xf32>
    %453 = arith.divf %451, %452 : vector<8x1xf32>
    %454 = vector.broadcast %453 : vector<8x1xf32> to vector<8x100xf32>
    %455 = arith.subf %447, %454 : vector<8x100xf32>
    %456 = arith.mulf %455, %455 : vector<8x100xf32>
    %cst_182 = arith.constant dense<0.000000e+00> : vector<8xf32>
    %457 = vector.multi_reduction <add>, %456, %cst_182 [1] : vector<8x100xf32> to vector<8xf32>
    %458 = vector.shape_cast %457 : vector<8xf32> to vector<8x1xf32>
    %cst_183 = arith.constant 1.000000e+02 : f32
    %459 = vector.broadcast %cst_183 : f32 to vector<8x1xf32>
    %460 = arith.divf %458, %459 : vector<8x1xf32>
    %461 = vector.broadcast %453 : vector<8x1xf32> to vector<8x100xf32>
    %462 = arith.subf %447, %461 : vector<8x100xf32>
    %cst_184 = arith.constant 9.99999974E-6 : f32
    %463 = vector.broadcast %cst_184 : f32 to vector<8x1xf32>
    %464 = arith.addf %460, %463 : vector<8x1xf32>
    %465 = math.rsqrt %464 : vector<8x1xf32>
    %466 = vector.broadcast %465 : vector<8x1xf32> to vector<8x100xf32>
    %467 = arith.mulf %462, %466 : vector<8x100xf32>
    %468 = vector.broadcast %448 : vector<1x100xf32> to vector<8x100xf32>
    %469 = arith.mulf %467, %468 : vector<8x100xf32>
    %470 = vector.broadcast %449 : vector<1x100xf32> to vector<8x100xf32>
    %471 = arith.addf %469, %470 : vector<8x100xf32>
    %cst_185 = arith.constant 0.000000e+00 : f32
    %472 = vector.broadcast %cst_185 : f32 to vector<8x100xf32>
    %473 = arith.cmpf ogt, %471, %472 : vector<8x100xf32>
    %cst_186 = arith.constant 0.00999999977 : f32
    %474 = vector.broadcast %cst_186 : f32 to vector<8x100xf32>
    %475 = arith.mulf %474, %471 : vector<8x100xf32>
    %476 = arith.select %473, %471, %475 : vector<8x100xi1>, vector<8x100xf32>
    %c2_187 = arith.constant 2 : index
    %c0_188 = arith.constant 0 : index
    %c0_189 = arith.constant 0 : index
    %477 = vector.load %arg16[%c2_187, %c0_188, %c0_189] : memref<4x100x50xf32, #tpu.memory_space<vmem>>, vector<1x100x50xf32>
    %478 = vector.shape_cast %477 : vector<1x100x50xf32> to vector<100x50xf32>
    %cst_190 = arith.constant dense<0.000000e+00> : vector<8x50xf32>
    %479 = tpu.matmul %476, %478, %cst_190 {dimension_numbers = #tpu.dot_dimension_numbers<[1], [0], [0], [1], [0, 0, 1, 1], [], []>} : vector<8x100xf32>, vector<100x50xf32>, vector<8x50xf32> -> vector<8x50xf32>
    %c38 = arith.constant 38 : index
    %c0_191 = arith.constant 0 : index
    %480 = vector.load %arg5[%c38, %c0_191] : memref<57x256xf32, #tpu.memory_space<vmem>>, vector<1x50xf32>
    %481 = vector.broadcast %480 : vector<1x50xf32> to vector<8x50xf32>
    %482 = arith.addf %479, %481 : vector<8x50xf32>
    %c39 = arith.constant 39 : index
    %c0_192 = arith.constant 0 : index
    %483 = vector.load %arg5[%c39, %c0_192] : memref<57x256xf32, #tpu.memory_space<vmem>>, vector<1x50xf32>
    %c40 = arith.constant 40 : index
    %c0_193 = arith.constant 0 : index
    %484 = vector.load %arg5[%c40, %c0_193] : memref<57x256xf32, #tpu.memory_space<vmem>>, vector<1x50xf32>
    %cst_194 = arith.constant dense<0.000000e+00> : vector<8xf32>
    %485 = vector.multi_reduction <add>, %482, %cst_194 [1] : vector<8x50xf32> to vector<8xf32>
    %486 = vector.shape_cast %485 : vector<8xf32> to vector<8x1xf32>
    %cst_195 = arith.constant 5.000000e+01 : f32
    %487 = vector.broadcast %cst_195 : f32 to vector<8x1xf32>
    %488 = arith.divf %486, %487 : vector<8x1xf32>
    %489 = vector.broadcast %488 : vector<8x1xf32> to vector<8x50xf32>
    %490 = arith.subf %482, %489 : vector<8x50xf32>
    %491 = arith.mulf %490, %490 : vector<8x50xf32>
    %cst_196 = arith.constant dense<0.000000e+00> : vector<8xf32>
    %492 = vector.multi_reduction <add>, %491, %cst_196 [1] : vector<8x50xf32> to vector<8xf32>
    %493 = vector.shape_cast %492 : vector<8xf32> to vector<8x1xf32>
    %cst_197 = arith.constant 5.000000e+01 : f32
    %494 = vector.broadcast %cst_197 : f32 to vector<8x1xf32>
    %495 = arith.divf %493, %494 : vector<8x1xf32>
    %496 = vector.broadcast %488 : vector<8x1xf32> to vector<8x50xf32>
    %497 = arith.subf %482, %496 : vector<8x50xf32>
    %cst_198 = arith.constant 9.99999974E-6 : f32
    %498 = vector.broadcast %cst_198 : f32 to vector<8x1xf32>
    %499 = arith.addf %495, %498 : vector<8x1xf32>
    %500 = math.rsqrt %499 : vector<8x1xf32>
    %501 = vector.broadcast %500 : vector<8x1xf32> to vector<8x50xf32>
    %502 = arith.mulf %497, %501 : vector<8x50xf32>
    %503 = vector.broadcast %483 : vector<1x50xf32> to vector<8x50xf32>
    %504 = arith.mulf %502, %503 : vector<8x50xf32>
    %505 = vector.broadcast %484 : vector<1x50xf32> to vector<8x50xf32>
    %506 = arith.addf %504, %505 : vector<8x50xf32>
    %cst_199 = arith.constant 0.000000e+00 : f32
    %507 = vector.broadcast %cst_199 : f32 to vector<8x50xf32>
    %508 = arith.cmpf ogt, %506, %507 : vector<8x50xf32>
    %cst_200 = arith.constant 0.00999999977 : f32
    %509 = vector.broadcast %cst_200 : f32 to vector<8x50xf32>
    %510 = arith.mulf %509, %506 : vector<8x50xf32>
    %511 = arith.select %508, %506, %510 : vector<8x50xi1>, vector<8x50xf32>
    %c2_201 = arith.constant 2 : index
    %c0_202 = arith.constant 0 : index
    %c0_203 = arith.constant 0 : index
    %512 = vector.load %arg17[%c2_201, %c0_202, %c0_203] : memref<4x50x10xf32, #tpu.memory_space<vmem>>, vector<1x50x10xf32>
    %513 = vector.shape_cast %512 : vector<1x50x10xf32> to vector<50x10xf32>
    %cst_204 = arith.constant dense<0.000000e+00> : vector<8x10xf32>
    %514 = tpu.matmul %511, %513, %cst_204 {dimension_numbers = #tpu.dot_dimension_numbers<[1], [0], [0], [1], [0, 0, 1, 1], [], []>} : vector<8x50xf32>, vector<50x10xf32>, vector<8x10xf32> -> vector<8x10xf32>
    %c41 = arith.constant 41 : index
    %c0_205 = arith.constant 0 : index
    %515 = vector.load %arg5[%c41, %c0_205] : memref<57x256xf32, #tpu.memory_space<vmem>>, vector<1x10xf32>
    %516 = vector.broadcast %515 : vector<1x10xf32> to vector<8x10xf32>
    %517 = arith.addf %514, %516 : vector<8x10xf32>
    %c42 = arith.constant 42 : index
    %c0_206 = arith.constant 0 : index
    %518 = vector.load %arg5[%c42, %c0_206] : memref<57x256xf32, #tpu.memory_space<vmem>>, vector<1x10xf32>
    %c43 = arith.constant 43 : index
    %c0_207 = arith.constant 0 : index
    %519 = vector.load %arg5[%c43, %c0_207] : memref<57x256xf32, #tpu.memory_space<vmem>>, vector<1x10xf32>
    %cst_208 = arith.constant dense<0.000000e+00> : vector<8xf32>
    %520 = vector.multi_reduction <add>, %517, %cst_208 [1] : vector<8x10xf32> to vector<8xf32>
    %521 = vector.shape_cast %520 : vector<8xf32> to vector<8x1xf32>
    %cst_209 = arith.constant 1.000000e+01 : f32
    %522 = vector.broadcast %cst_209 : f32 to vector<8x1xf32>
    %523 = arith.divf %521, %522 : vector<8x1xf32>
    %524 = vector.broadcast %523 : vector<8x1xf32> to vector<8x10xf32>
    %525 = arith.subf %517, %524 : vector<8x10xf32>
    %526 = arith.mulf %525, %525 : vector<8x10xf32>
    %cst_210 = arith.constant dense<0.000000e+00> : vector<8xf32>
    %527 = vector.multi_reduction <add>, %526, %cst_210 [1] : vector<8x10xf32> to vector<8xf32>
    %528 = vector.shape_cast %527 : vector<8xf32> to vector<8x1xf32>
    %cst_211 = arith.constant 1.000000e+01 : f32
    %529 = vector.broadcast %cst_211 : f32 to vector<8x1xf32>
    %530 = arith.divf %528, %529 : vector<8x1xf32>
    %531 = vector.broadcast %523 : vector<8x1xf32> to vector<8x10xf32>
    %532 = arith.subf %517, %531 : vector<8x10xf32>
    %cst_212 = arith.constant 9.99999974E-6 : f32
    %533 = vector.broadcast %cst_212 : f32 to vector<8x1xf32>
    %534 = arith.addf %530, %533 : vector<8x1xf32>
    %535 = math.rsqrt %534 : vector<8x1xf32>
    %536 = vector.broadcast %535 : vector<8x1xf32> to vector<8x10xf32>
    %537 = arith.mulf %532, %536 : vector<8x10xf32>
    %538 = vector.broadcast %518 : vector<1x10xf32> to vector<8x10xf32>
    %539 = arith.mulf %537, %538 : vector<8x10xf32>
    %540 = vector.broadcast %519 : vector<1x10xf32> to vector<8x10xf32>
    %541 = arith.addf %539, %540 : vector<8x10xf32>
    %cst_213 = arith.constant 0.000000e+00 : f32
    %542 = vector.broadcast %cst_213 : f32 to vector<8x10xf32>
    %543 = arith.cmpf ogt, %541, %542 : vector<8x10xf32>
    %cst_214 = arith.constant 0.00999999977 : f32
    %544 = vector.broadcast %cst_214 : f32 to vector<8x10xf32>
    %545 = arith.mulf %544, %541 : vector<8x10xf32>
    %546 = arith.select %543, %541, %545 : vector<8x10xi1>, vector<8x10xf32>
    %c44 = arith.constant 44 : index
    %c0_215 = arith.constant 0 : index
    %547 = vector.load %arg5[%c44, %c0_215] : memref<57x256xf32, #tpu.memory_space<vmem>>, vector<1x10xf32>
    %548 = vector.broadcast %547 : vector<1x10xf32> to vector<8x10xf32>
    %549 = arith.mulf %546, %548 : vector<8x10xf32>
    %cst_216 = arith.constant dense<0.000000e+00> : vector<8xf32>
    %550 = vector.multi_reduction <add>, %549, %cst_216 [1] : vector<8x10xf32> to vector<8xf32>
    %551 = vector.shape_cast %550 : vector<8xf32> to vector<8x1xf32>
    %c45 = arith.constant 45 : index
    %c0_217 = arith.constant 0 : index
    %552 = vector.load %arg5[%c45, %c0_217] : memref<57x256xf32, #tpu.memory_space<vmem>>, vector<1x1xf32>
    %553 = vector.broadcast %552 : vector<1x1xf32> to vector<8x1xf32>
    %554 = arith.addf %551, %553 : vector<8x1xf32>
    %c0_218 = arith.constant 0 : index
    %c2_219 = arith.constant 2 : index
    %555 = vector.load %arg18[%c0_218, %c2_219] : memref<8x4xf32, #tpu.memory_space<vmem>>, vector<8x1xf32>
    tpu.vector_store %arg18[%c0_218, %c2_219], %554 {strides = array<i32>} : memref<8x4xf32, #tpu.memory_space<vmem>>, vector<8x1xf32>,
    %556 = vector.extract_strided_slice %100 {offsets = [0, 18], sizes = [8, 6], strides = [1, 1]} : vector<8x24xf32> to vector<8x6xf32>
    %cst_220 = arith.constant dense<0xFF800000> : vector<8xf32>
    %557 = vector.multi_reduction <maximumf>, %556, %cst_220 [1] : vector<8x6xf32> to vector<8xf32>
    %558 = vector.shape_cast %557 : vector<8xf32> to vector<8x1xf32>
    %559 = vector.broadcast %558 : vector<8x1xf32> to vector<8x6xf32>
    %560 = arith.subf %556, %559 : vector<8x6xf32>
    %561 = math.exp %560 : vector<8x6xf32>
    %cst_221 = arith.constant dense<0.000000e+00> : vector<8xf32>
    %562 = vector.multi_reduction <add>, %561, %cst_221 [1] : vector<8x6xf32> to vector<8xf32>
    %563 = vector.shape_cast %562 : vector<8xf32> to vector<8x1xf32>
    %564 = vector.broadcast %563 : vector<8x1xf32> to vector<8x6xf32>
    %565 = arith.divf %561, %564 : vector<8x6xf32>
    %c0_222 = arith.constant 0 : index
    %c600 = arith.constant 600 : index
    %566 = vector.load %arg3[%c0_222, %c600] : memref<8x800xf32, #tpu.memory_space<vmem>>, vector<8x100xf32>
    %c0_223 = arith.constant 0 : index
    %c700 = arith.constant 700 : index
    %567 = vector.load %arg3[%c0_223, %c700] : memref<8x800xf32, #tpu.memory_space<vmem>>, vector<8x100xf32>
    %568 = vector.extract_strided_slice %565 {offsets = [0, 0], sizes = [8, 1], strides = [1, 1]} : vector<8x6xf32> to vector<8x1xf32>
    %569 = vector.broadcast %568 : vector<8x1xf32> to vector<8x100xf32>
    %570 = arith.mulf %569, %101 : vector<8x100xf32>
    %571 = vector.extract_strided_slice %565 {offsets = [0, 1], sizes = [8, 1], strides = [1, 1]} : vector<8x6xf32> to vector<8x1xf32>
    %572 = vector.broadcast %571 : vector<8x1xf32> to vector<8x100xf32>
    %573 = arith.mulf %572, %102 : vector<8x100xf32>
    %574 = arith.addf %570, %573 : vector<8x100xf32>
    %575 = vector.extract_strided_slice %565 {offsets = [0, 2], sizes = [8, 1], strides = [1, 1]} : vector<8x6xf32> to vector<8x1xf32>
    %576 = vector.broadcast %575 : vector<8x1xf32> to vector<8x100xf32>
    %577 = arith.mulf %576, %566 : vector<8x100xf32>
    %578 = arith.addf %574, %577 : vector<8x100xf32>
    %579 = vector.extract_strided_slice %565 {offsets = [0, 3], sizes = [8, 1], strides = [1, 1]} : vector<8x6xf32> to vector<8x1xf32>
    %580 = vector.broadcast %579 : vector<8x1xf32> to vector<8x100xf32>
    %581 = arith.mulf %580, %567 : vector<8x100xf32>
    %582 = arith.addf %578, %581 : vector<8x100xf32>
    %583 = vector.extract_strided_slice %565 {offsets = [0, 4], sizes = [8, 1], strides = [1, 1]} : vector<8x6xf32> to vector<8x1xf32>
    %584 = vector.broadcast %583 : vector<8x1xf32> to vector<8x100xf32>
    %585 = arith.mulf %584, %75 : vector<8x100xf32>
    %586 = arith.addf %582, %585 : vector<8x100xf32>
    %587 = vector.extract_strided_slice %565 {offsets = [0, 5], sizes = [8, 1], strides = [1, 1]} : vector<8x6xf32> to vector<8x1xf32>
    %588 = vector.broadcast %587 : vector<8x1xf32> to vector<8x100xf32>
    %589 = arith.mulf %588, %76 : vector<8x100xf32>
    %590 = arith.addf %586, %589 : vector<8x100xf32>
    %cst_224 = arith.constant 0.166666672 : f32
    %591 = vector.broadcast %cst_224 : f32 to vector<8x100xf32>
    %592 = arith.mulf %590, %591 : vector<8x100xf32>
    %c3_225 = arith.constant 3 : index
    %c0_226 = arith.constant 0 : index
    %c0_227 = arith.constant 0 : index
    %593 = vector.load %arg15[%c3_225, %c0_226, %c0_227] : memref<4x100x100xf32, #tpu.memory_space<vmem>>, vector<1x100x100xf32>
    %594 = vector.shape_cast %593 : vector<1x100x100xf32> to vector<100x100xf32>
    %cst_228 = arith.constant dense<0.000000e+00> : vector<8x100xf32>
    %595 = tpu.matmul %592, %594, %cst_228 {dimension_numbers = #tpu.dot_dimension_numbers<[1], [0], [0], [1], [0, 0, 1, 1], [], []>} : vector<8x100xf32>, vector<100x100xf32>, vector<8x100xf32> -> vector<8x100xf32>
    %c46 = arith.constant 46 : index
    %c0_229 = arith.constant 0 : index
    %596 = vector.load %arg5[%c46, %c0_229] : memref<57x256xf32, #tpu.memory_space<vmem>>, vector<1x100xf32>
    %597 = vector.broadcast %596 : vector<1x100xf32> to vector<8x100xf32>
    %598 = arith.addf %595, %597 : vector<8x100xf32>
    %c47 = arith.constant 47 : index
    %c0_230 = arith.constant 0 : index
    %599 = vector.load %arg5[%c47, %c0_230] : memref<57x256xf32, #tpu.memory_space<vmem>>, vector<1x100xf32>
    %c48 = arith.constant 48 : index
    %c0_231 = arith.constant 0 : index
    %600 = vector.load %arg5[%c48, %c0_231] : memref<57x256xf32, #tpu.memory_space<vmem>>, vector<1x100xf32>
    %cst_232 = arith.constant dense<0.000000e+00> : vector<8xf32>
    %601 = vector.multi_reduction <add>, %598, %cst_232 [1] : vector<8x100xf32> to vector<8xf32>
    %602 = vector.shape_cast %601 : vector<8xf32> to vector<8x1xf32>
    %cst_233 = arith.constant 1.000000e+02 : f32
    %603 = vector.broadcast %cst_233 : f32 to vector<8x1xf32>
    %604 = arith.divf %602, %603 : vector<8x1xf32>
    %605 = vector.broadcast %604 : vector<8x1xf32> to vector<8x100xf32>
    %606 = arith.subf %598, %605 : vector<8x100xf32>
    %607 = arith.mulf %606, %606 : vector<8x100xf32>
    %cst_234 = arith.constant dense<0.000000e+00> : vector<8xf32>
    %608 = vector.multi_reduction <add>, %607, %cst_234 [1] : vector<8x100xf32> to vector<8xf32>
    %609 = vector.shape_cast %608 : vector<8xf32> to vector<8x1xf32>
    %cst_235 = arith.constant 1.000000e+02 : f32
    %610 = vector.broadcast %cst_235 : f32 to vector<8x1xf32>
    %611 = arith.divf %609, %610 : vector<8x1xf32>
    %612 = vector.broadcast %604 : vector<8x1xf32> to vector<8x100xf32>
    %613 = arith.subf %598, %612 : vector<8x100xf32>
    %cst_236 = arith.constant 9.99999974E-6 : f32
    %614 = vector.broadcast %cst_236 : f32 to vector<8x1xf32>
    %615 = arith.addf %611, %614 : vector<8x1xf32>
    %616 = math.rsqrt %615 : vector<8x1xf32>
    %617 = vector.broadcast %616 : vector<8x1xf32> to vector<8x100xf32>
    %618 = arith.mulf %613, %617 : vector<8x100xf32>
    %619 = vector.broadcast %599 : vector<1x100xf32> to vector<8x100xf32>
    %620 = arith.mulf %618, %619 : vector<8x100xf32>
    %621 = vector.broadcast %600 : vector<1x100xf32> to vector<8x100xf32>
    %622 = arith.addf %620, %621 : vector<8x100xf32>
    %cst_237 = arith.constant 0.000000e+00 : f32
    %623 = vector.broadcast %cst_237 : f32 to vector<8x100xf32>
    %624 = arith.cmpf ogt, %622, %623 : vector<8x100xf32>
    %cst_238 = arith.constant 0.00999999977 : f32
    %625 = vector.broadcast %cst_238 : f32 to vector<8x100xf32>
    %626 = arith.mulf %625, %622 : vector<8x100xf32>
    %627 = arith.select %624, %622, %626 : vector<8x100xi1>, vector<8x100xf32>
    %c3_239 = arith.constant 3 : index
    %c0_240 = arith.constant 0 : index
    %c0_241 = arith.constant 0 : index
    %628 = vector.load %arg16[%c3_239, %c0_240, %c0_241] : memref<4x100x50xf32, #tpu.memory_space<vmem>>, vector<1x100x50xf32>
    %629 = vector.shape_cast %628 : vector<1x100x50xf32> to vector<100x50xf32>
    %cst_242 = arith.constant dense<0.000000e+00> : vector<8x50xf32>
    %630 = tpu.matmul %627, %629, %cst_242 {dimension_numbers = #tpu.dot_dimension_numbers<[1], [0], [0], [1], [0, 0, 1, 1], [], []>} : vector<8x100xf32>, vector<100x50xf32>, vector<8x50xf32> -> vector<8x50xf32>
    %c49 = arith.constant 49 : index
    %c0_243 = arith.constant 0 : index
    %631 = vector.load %arg5[%c49, %c0_243] : memref<57x256xf32, #tpu.memory_space<vmem>>, vector<1x50xf32>
    %632 = vector.broadcast %631 : vector<1x50xf32> to vector<8x50xf32>
    %633 = arith.addf %630, %632 : vector<8x50xf32>
    %c50 = arith.constant 50 : index
    %c0_244 = arith.constant 0 : index
    %634 = vector.load %arg5[%c50, %c0_244] : memref<57x256xf32, #tpu.memory_space<vmem>>, vector<1x50xf32>
    %c51 = arith.constant 51 : index
    %c0_245 = arith.constant 0 : index
    %635 = vector.load %arg5[%c51, %c0_245] : memref<57x256xf32, #tpu.memory_space<vmem>>, vector<1x50xf32>
    %cst_246 = arith.constant dense<0.000000e+00> : vector<8xf32>
    %636 = vector.multi_reduction <add>, %633, %cst_246 [1] : vector<8x50xf32> to vector<8xf32>
    %637 = vector.shape_cast %636 : vector<8xf32> to vector<8x1xf32>
    %cst_247 = arith.constant 5.000000e+01 : f32
    %638 = vector.broadcast %cst_247 : f32 to vector<8x1xf32>
    %639 = arith.divf %637, %638 : vector<8x1xf32>
    %640 = vector.broadcast %639 : vector<8x1xf32> to vector<8x50xf32>
    %641 = arith.subf %633, %640 : vector<8x50xf32>
    %642 = arith.mulf %641, %641 : vector<8x50xf32>
    %cst_248 = arith.constant dense<0.000000e+00> : vector<8xf32>
    %643 = vector.multi_reduction <add>, %642, %cst_248 [1] : vector<8x50xf32> to vector<8xf32>
    %644 = vector.shape_cast %643 : vector<8xf32> to vector<8x1xf32>
    %cst_249 = arith.constant 5.000000e+01 : f32
    %645 = vector.broadcast %cst_249 : f32 to vector<8x1xf32>
    %646 = arith.divf %644, %645 : vector<8x1xf32>
    %647 = vector.broadcast %639 : vector<8x1xf32> to vector<8x50xf32>
    %648 = arith.subf %633, %647 : vector<8x50xf32>
    %cst_250 = arith.constant 9.99999974E-6 : f32
    %649 = vector.broadcast %cst_250 : f32 to vector<8x1xf32>
    %650 = arith.addf %646, %649 : vector<8x1xf32>
    %651 = math.rsqrt %650 : vector<8x1xf32>
    %652 = vector.broadcast %651 : vector<8x1xf32> to vector<8x50xf32>
    %653 = arith.mulf %648, %652 : vector<8x50xf32>
    %654 = vector.broadcast %634 : vector<1x50xf32> to vector<8x50xf32>
    %655 = arith.mulf %653, %654 : vector<8x50xf32>
    %656 = vector.broadcast %635 : vector<1x50xf32> to vector<8x50xf32>
    %657 = arith.addf %655, %656 : vector<8x50xf32>
    %cst_251 = arith.constant 0.000000e+00 : f32
    %658 = vector.broadcast %cst_251 : f32 to vector<8x50xf32>
    %659 = arith.cmpf ogt, %657, %658 : vector<8x50xf32>
    %cst_252 = arith.constant 0.00999999977 : f32
    %660 = vector.broadcast %cst_252 : f32 to vector<8x50xf32>
    %661 = arith.mulf %660, %657 : vector<8x50xf32>
    %662 = arith.select %659, %657, %661 : vector<8x50xi1>, vector<8x50xf32>
    %c3_253 = arith.constant 3 : index
    %c0_254 = arith.constant 0 : index
    %c0_255 = arith.constant 0 : index
    %663 = vector.load %arg17[%c3_253, %c0_254, %c0_255] : memref<4x50x10xf32, #tpu.memory_space<vmem>>, vector<1x50x10xf32>
    %664 = vector.shape_cast %663 : vector<1x50x10xf32> to vector<50x10xf32>
    %cst_256 = arith.constant dense<0.000000e+00> : vector<8x10xf32>
    %665 = tpu.matmul %662, %664, %cst_256 {dimension_numbers = #tpu.dot_dimension_numbers<[1], [0], [0], [1], [0, 0, 1, 1], [], []>} : vector<8x50xf32>, vector<50x10xf32>, vector<8x10xf32> -> vector<8x10xf32>
    %c52 = arith.constant 52 : index
    %c0_257 = arith.constant 0 : index
    %666 = vector.load %arg5[%c52, %c0_257] : memref<57x256xf32, #tpu.memory_space<vmem>>, vector<1x10xf32>
    %667 = vector.broadcast %666 : vector<1x10xf32> to vector<8x10xf32>
    %668 = arith.addf %665, %667 : vector<8x10xf32>
    %c53 = arith.constant 53 : index
    %c0_258 = arith.constant 0 : index
    %669 = vector.load %arg5[%c53, %c0_258] : memref<57x256xf32, #tpu.memory_space<vmem>>, vector<1x10xf32>
    %c54 = arith.constant 54 : index
    %c0_259 = arith.constant 0 : index
    %670 = vector.load %arg5[%c54, %c0_259] : memref<57x256xf32, #tpu.memory_space<vmem>>, vector<1x10xf32>
    %cst_260 = arith.constant dense<0.000000e+00> : vector<8xf32>
    %671 = vector.multi_reduction <add>, %668, %cst_260 [1] : vector<8x10xf32> to vector<8xf32>
    %672 = vector.shape_cast %671 : vector<8xf32> to vector<8x1xf32>
    %cst_261 = arith.constant 1.000000e+01 : f32
    %673 = vector.broadcast %cst_261 : f32 to vector<8x1xf32>
    %674 = arith.divf %672, %673 : vector<8x1xf32>
    %675 = vector.broadcast %674 : vector<8x1xf32> to vector<8x10xf32>
    %676 = arith.subf %668, %675 : vector<8x10xf32>
    %677 = arith.mulf %676, %676 : vector<8x10xf32>
    %cst_262 = arith.constant dense<0.000000e+00> : vector<8xf32>
    %678 = vector.multi_reduction <add>, %677, %cst_262 [1] : vector<8x10xf32> to vector<8xf32>
    %679 = vector.shape_cast %678 : vector<8xf32> to vector<8x1xf32>
    %cst_263 = arith.constant 1.000000e+01 : f32
    %680 = vector.broadcast %cst_263 : f32 to vector<8x1xf32>
    %681 = arith.divf %679, %680 : vector<8x1xf32>
    %682 = vector.broadcast %674 : vector<8x1xf32> to vector<8x10xf32>
    %683 = arith.subf %668, %682 : vector<8x10xf32>
    %cst_264 = arith.constant 9.99999974E-6 : f32
    %684 = vector.broadcast %cst_264 : f32 to vector<8x1xf32>
    %685 = arith.addf %681, %684 : vector<8x1xf32>
    %686 = math.rsqrt %685 : vector<8x1xf32>
    %687 = vector.broadcast %686 : vector<8x1xf32> to vector<8x10xf32>
    %688 = arith.mulf %683, %687 : vector<8x10xf32>
    %689 = vector.broadcast %669 : vector<1x10xf32> to vector<8x10xf32>
    %690 = arith.mulf %688, %689 : vector<8x10xf32>
    %691 = vector.broadcast %670 : vector<1x10xf32> to vector<8x10xf32>
    %692 = arith.addf %690, %691 : vector<8x10xf32>
    %cst_265 = arith.constant 0.000000e+00 : f32
    %693 = vector.broadcast %cst_265 : f32 to vector<8x10xf32>
    %694 = arith.cmpf ogt, %692, %693 : vector<8x10xf32>
    %cst_266 = arith.constant 0.00999999977 : f32
    %695 = vector.broadcast %cst_266 : f32 to vector<8x10xf32>
    %696 = arith.mulf %695, %692 : vector<8x10xf32>
    %697 = arith.select %694, %692, %696 : vector<8x10xi1>, vector<8x10xf32>
    %c55 = arith.constant 55 : index
    %c0_267 = arith.constant 0 : index
    %698 = vector.load %arg5[%c55, %c0_267] : memref<57x256xf32, #tpu.memory_space<vmem>>, vector<1x10xf32>
    %699 = vector.broadcast %698 : vector<1x10xf32> to vector<8x10xf32>
    %700 = arith.mulf %697, %699 : vector<8x10xf32>
    %cst_268 = arith.constant dense<0.000000e+00> : vector<8xf32>
    %701 = vector.multi_reduction <add>, %700, %cst_268 [1] : vector<8x10xf32> to vector<8xf32>
    %702 = vector.shape_cast %701 : vector<8xf32> to vector<8x1xf32>
    %c56 = arith.constant 56 : index
    %c0_269 = arith.constant 0 : index
    %703 = vector.load %arg5[%c56, %c0_269] : memref<57x256xf32, #tpu.memory_space<vmem>>, vector<1x1xf32>
    %704 = vector.broadcast %703 : vector<1x1xf32> to vector<8x1xf32>
    %705 = arith.addf %702, %704 : vector<8x1xf32>
    %c0_270 = arith.constant 0 : index
    %c3_271 = arith.constant 3 : index
    %706 = vector.load %arg18[%c0_270, %c3_271] : memref<8x4xf32, #tpu.memory_space<vmem>>, vector<8x1xf32>
    tpu.vector_store %arg18[%c0_270, %c3_271], %705 {strides = array<i32>} : memref<8x4xf32, #tpu.memory_space<vmem>>, vector<8x1xf32>,
    return
  }
  func.func @transform_0(%arg0: i32) -> (i32, i32) {
    %c0_i32 = arith.constant 0 : i32
    %c0_i32_0 = arith.constant 0 : i32
    return %arg0, %c0_i32 : i32, i32
  }
  func.func @transform_1(%arg0: i32) -> (i32, i32) {
    %c0_i32 = arith.constant 0 : i32
    %c0_i32_0 = arith.constant 0 : i32
    return %arg0, %c0_i32 : i32, i32
  }
  func.func @transform_2(%arg0: i32) -> (i32, i32) {
    %c0_i32 = arith.constant 0 : i32
    %c0_i32_0 = arith.constant 0 : i32
    return %arg0, %c0_i32 : i32, i32
  }
  func.func @transform_3(%arg0: i32) -> (i32, i32) {
    %c0_i32 = arith.constant 0 : i32
    %c0_i32_0 = arith.constant 0 : i32
    %c0_i32_1 = arith.constant 0 : i32
    return %c0_i32, %c0_i32_0 : i32, i32
  }
  func.func @transform_4(%arg0: i32) -> (i32, i32) {
    %c0_i32 = arith.constant 0 : i32
    %c0_i32_0 = arith.constant 0 : i32
    %c0_i32_1 = arith.constant 0 : i32
    return %c0_i32, %c0_i32_0 : i32, i32
  }
  func.func @transform_5(%arg0: i32) -> (i32, i32) {
    %c0_i32 = arith.constant 0 : i32
    %c0_i32_0 = arith.constant 0 : i32
    %c0_i32_1 = arith.constant 0 : i32
    return %c0_i32, %c0_i32_0 : i32, i32
  }
  func.func @transform_6(%arg0: i32) -> (i32, i32) {
    %c0_i32 = arith.constant 0 : i32
    %c0_i32_0 = arith.constant 0 : i32
    %c0_i32_1 = arith.constant 0 : i32
    return %c0_i32, %c0_i32_0 : i32, i32
  }
  func.func @transform_7(%arg0: i32) -> (i32, i32) {
    %c0_i32 = arith.constant 0 : i32
    %c0_i32_0 = arith.constant 0 : i32
    %c0_i32_1 = arith.constant 0 : i32
    return %c0_i32, %c0_i32_0 : i32, i32
  }
  func.func @transform_8(%arg0: i32) -> (i32, i32) {
    %c0_i32 = arith.constant 0 : i32
    %c0_i32_0 = arith.constant 0 : i32
    %c0_i32_1 = arith.constant 0 : i32
    return %c0_i32, %c0_i32_0 : i32, i32
  }
  func.func @transform_9(%arg0: i32) -> (i32, i32) {
    %c0_i32 = arith.constant 0 : i32
    %c0_i32_0 = arith.constant 0 : i32
    %c0_i32_1 = arith.constant 0 : i32
    return %c0_i32, %c0_i32_0 : i32, i32
  }
  func.func @transform_10(%arg0: i32) -> (i32, i32) {
    %c0_i32 = arith.constant 0 : i32
    %c0_i32_0 = arith.constant 0 : i32
    %c0_i32_1 = arith.constant 0 : i32
    return %c0_i32, %c0_i32_0 : i32, i32
  }
  func.func @transform_11(%arg0: i32) -> (i32, i32) {
    %c0_i32 = arith.constant 0 : i32
    %c0_i32_0 = arith.constant 0 : i32
    %c0_i32_1 = arith.constant 0 : i32
    return %c0_i32, %c0_i32_0 : i32, i32
  }
  func.func @transform_12(%arg0: i32) -> (i32, i32) {
    %c0_i32 = arith.constant 0 : i32
    %c0_i32_0 = arith.constant 0 : i32
    %c0_i32_1 = arith.constant 0 : i32
    return %c0_i32, %c0_i32_0 : i32, i32
  }
  func.func @transform_13(%arg0: i32) -> (i32, i32) {
    %c0_i32 = arith.constant 0 : i32
    %c0_i32_0 = arith.constant 0 : i32
    %c0_i32_1 = arith.constant 0 : i32
    return %c0_i32, %c0_i32_0 : i32, i32
  }
  func.func @transform_14(%arg0: i32) -> (i32, i32, i32) {
    %c0_i32 = arith.constant 0 : i32
    %c0_i32_0 = arith.constant 0 : i32
    %c0_i32_1 = arith.constant 0 : i32
    %c0_i32_2 = arith.constant 0 : i32
    return %c0_i32, %c0_i32_0, %c0_i32_1 : i32, i32, i32
  }
  func.func @transform_15(%arg0: i32) -> (i32, i32, i32) {
    %c0_i32 = arith.constant 0 : i32
    %c0_i32_0 = arith.constant 0 : i32
    %c0_i32_1 = arith.constant 0 : i32
    %c0_i32_2 = arith.constant 0 : i32
    return %c0_i32, %c0_i32_0, %c0_i32_1 : i32, i32, i32
  }
  func.func @transform_16(%arg0: i32) -> (i32, i32, i32) {
    %c0_i32 = arith.constant 0 : i32
    %c0_i32_0 = arith.constant 0 : i32
    %c0_i32_1 = arith.constant 0 : i32
    %c0_i32_2 = arith.constant 0 : i32
    return %c0_i32, %c0_i32_0, %c0_i32_1 : i32, i32, i32
  }
  func.func @transform_17(%arg0: i32) -> (i32, i32) {
    %c0_i32 = arith.constant 0 : i32
    %c0_i32_0 = arith.constant 0 : i32
    return %arg0, %c0_i32 : i32, i32
  }
}

</mosaic_0001>

<llo_original>
// kernel: squeeze.9
$region0: #{squeeze.9}
  %s0 = inlined_call_operand.hbm [shape: f32[8,1,2,100], index: 0, kind: input, shape index: {}]
  %s1 = inlined_call_operand.vmem [shape: f32[8,200], index: 1, kind: output, shape index: {}]
  $region1: #{squeeze.9} parent=0
    #allocation0 [shape = 'u8[8192]{0}', space=vmem, size = 0x2000, scoped, tag = 'operand span for operand 0']
    #allocation1 [shape = 's32[1]{0}', space=sflag, size = 0x4, scoped, tag = 'scoped memory for squeeze.9']
    #allocation2 [shape = 'u8[32768]{0}', space=vmem, size = 0x8000, scoped, tag = 'scoped mem for input reshape']
    %2 = vsyncpa [#allocation1], 0
    %s4 = ssub.s32 256, 256
    %5 = vsyncadd [#allocation1], %s4
    %s7 = sshll.u32 [#allocation0], 4
    %s8 = int_to_ptr.vmem [resolvable:$true] %s7
    %10 = dma.hbm_to_vmem [thread:$0]  %s0, 256, %s8, [#allocation1]
    %11 = dma.done [#allocation1], 256
    %s13 = sshll.u32 1, 2
    %s14 = ssub.s32 %s13, 1
    %s15 = smul.addr 2, 7
    %s16 = scalar_lea.vmem [#allocation0], %s15
    %v17 = vld [vmem:[%s16] sm:%s14]
    %s18 = scalar_lea.vmem [#allocation2], 56
    %19 = vst [vmem:[%s18] sm:%s14] %v17
    %s20 = smul.addr 2, 6
    %s21 = scalar_lea.vmem [#allocation0], %s20
    %v22 = vld [vmem:[%s21] sm:%s14]
    %s23 = scalar_lea.vmem [#allocation2], 48
    %24 = vst [vmem:[%s23] sm:%s14] %v22
    %s25 = smul.addr 2, 5
    %s26 = scalar_lea.vmem [#allocation0], %s25
    %v27 = vld [vmem:[%s26] sm:%s14]
    %s28 = scalar_lea.vmem [#allocation2], 40
    %29 = vst [vmem:[%s28] sm:%s14] %v27
    %s30 = smul.addr 2, 4
    %s31 = scalar_lea.vmem [#allocation0], %s30
    %v32 = vld [vmem:[%s31] sm:%s14]
    %s33 = scalar_lea.vmem [#allocation2], 32
    %34 = vst [vmem:[%s33] sm:%s14] %v32
    %s35 = smul.addr 2, 3
    %s36 = scalar_lea.vmem [#allocation0], %s35
    %v37 = vld [vmem:[%s36] sm:%s14]
    %s38 = scalar_lea.vmem [#allocation2], 24
    %39 = vst [vmem:[%s38] sm:%s14] %v37
    %s40 = smul.addr 2, 2
    %s41 = scalar_lea.vmem [#allocation0], %s40
    %v42 = vld [vmem:[%s41] sm:%s14]
    %s43 = scalar_lea.vmem [#allocation2], 16
    %44 = vst [vmem:[%s43] sm:%s14] %v42
    %s45 = scalar_lea.vmem [#allocation0], 2
    %v46 = vld [vmem:[%s45] sm:%s14]
    %s47 = scalar_lea.vmem [#allocation2], 8
    %48 = vst [vmem:[%s47] sm:%s14] %v46
    %v49 = vld [vmem:[#allocation0] sm:%s14]
    %50 = vst [vmem:[#allocation2] sm:%s14] %v49
    %v51 = vld [vmem:[#allocation2] ss:$8 sm:$0xf]
    %v52 = vld [vmem:[#allocation2] ss:$8 sm:$0xf0]
    %vm53 = vcmask 1047556
    %v54 = vsel %vm53, %v52, %v51
    %vm55 = vcmask 818176
    %56 = vst.msk [vmem:[%s1] sm:$0xff] %vm55, %v54
    %s57 = scalar_lea.vmem [#allocation2], 1
    %v58 = vld [vmem:[%s57] ss:$8 sm:$0xf]
    %s59 = scalar_lea.vmem [#allocation2], 1
    %v60 = vld [vmem:[%s59] ss:$8 sm:$0xf0]
    %vm61 = vcmask 1047556
    %v62 = vsel %vm61, %v60, %v58
    %s63 = scalar_lea.vmem [#allocation2], 1
    %v64 = vld [vmem:[%s63] ss:$8 sm:$0xf]
    %s65 = scalar_lea.vmem [#allocation2], 1
    %v66 = vld [vmem:[%s65] ss:$8 sm:$0xf0]
    %vm67 = vcmask 1047556
    %v68 = vsel %vm67, %v66, %v64
    %vm69 = vcmask 228352
    %v70 = vsel %vm69, %v68, %v62
    %71 = vrot.lane.b32.xlu0 %v70, 100
    %v72 = vpop.permute.xlu0 %71
    %vm73 = vcmask 588800
    %s74 = scalar_lea.vmem %s1, 8
    %75 = vst.msk [vmem:[%s74] sm:$0xff] %vm73, %v72
    %vm76 = vcmask 1048352
    %77 = vst.msk [vmem:[%s1] sm:$0xff] %vm76, %v72
    %78 = vsyncpa [#allocation1], 1

// kernel: transfer_model_forward.2
$region0: #{transfer_model_forward.2}
  #allocation0 [shape = 'u32[]', space=smem, size = 0x4, offset = 0x4, fixed_abs, tag = 'smem constant byte address 0x4 - core index']
  #allocation1 [shape = 'u32[144,128]{1,0:T(1,128)}', space=vmem, size = 0x12000, scoped, tag = 'internal scratch']
  %s0 = inlined_call_operand.vmem [shape: f32[8,18], index: 0, kind: input, shape index: {}]
  %s1 = inlined_call_operand.vmem [shape: f32[57,256], index: 1, kind: input, shape index: {}]
  %s2 = inlined_call_operand.vmem [shape: f32[18,240], index: 2, kind: input, shape index: {}]
  %s3 = inlined_call_operand.vmem [shape: f32[240,60], index: 3, kind: input, shape index: {}]
  %s4 = inlined_call_operand.vmem [shape: f32[10,20], index: 4, kind: input, shape index: {}]
  %s5 = inlined_call_operand.vmem [shape: f32[60,154], index: 5, kind: input, shape index: {}]
  %s6 = inlined_call_operand.vmem [shape: f32[17,154], index: 6, kind: input, shape index: {}]
  %s7 = inlined_call_operand.vmem [shape: f32[20,154], index: 7, kind: input, shape index: {}]
  %s8 = inlined_call_operand.vmem [shape: f32[17,80], index: 8, kind: input, shape index: {}]
  %s9 = inlined_call_operand.vmem [shape: f32[8,256], index: 9, kind: output, shape index: {}]
  %s10 = sld [smem:[#allocation0]]
  $region46: #{transfer_model_forward.2} parent=0
    _
  %s12 = ssub.s32 1, %s10
  %s13 = scalar_select 0, %s12, %s10
  // Predicated region
  $region2: #{transfer_model_forward.2} parent=0 // pred_check
    _
  $region3: #{transfer_model_forward.2} parent=0 // pred_check_branch
    %15 = sbr.rel (0) target = $region5
  $region4: #{transfer_model_forward.2} parent=0 // pred_region
    _
  $region5: #{transfer_model_forward.2} parent=0 // pred_fallthru
    _
  // Predicated region
  $region6: #{transfer_model_forward.2} parent=0 // pred_check
    _
  $region7: #{transfer_model_forward.2} parent=0 // pred_check_branch
    %17 = sbr.rel (0) target = $region9
  $region8: #{transfer_model_forward.2} parent=0 // pred_region
    _
  $region9: #{transfer_model_forward.2} parent=0 // pred_fallthru
    _
  // Predicated region
  $region10: #{transfer_model_forward.2} parent=0 // pred_check
    _
  $region11: #{transfer_model_forward.2} parent=0 // pred_check_branch
    %19 = sbr.rel (0) target = $region13
  $region12: #{transfer_model_forward.2} parent=0 // pred_region
    _
  $region13: #{transfer_model_forward.2} parent=0 // pred_fallthru
    _
  // Predicated region
  $region14: #{transfer_model_forward.2} parent=0 // pred_check
    _
  $region15: #{transfer_model_forward.2} parent=0 // pred_check_branch
    %21 = sbr.rel (0) target = $region17
  $region16: #{transfer_model_forward.2} parent=0 // pred_region
    _
  $region17: #{transfer_model_forward.2} parent=0 // pred_fallthru
    _
  // Predicated region
  $region18: #{transfer_model_forward.2} parent=0 // pred_check
    _
  $region19: #{transfer_model_forward.2} parent=0 // pred_check_branch
    %23 = sbr.rel (0) target = $region21
  $region20: #{transfer_model_forward.2} parent=0 // pred_region
    _
  $region21: #{transfer_model_forward.2} parent=0 // pred_fallthru
    _
  // Predicated region
  $region22: #{transfer_model_forward.2} parent=0 // pred_check
    _
  $region23: #{transfer_model_forward.2} parent=0 // pred_check_branch
    %25 = sbr.rel (0) target = $region25
  $region24: #{transfer_model_forward.2} parent=0 // pred_region
    _
  $region25: #{transfer_model_forward.2} parent=0 // pred_fallthru
    _
  // Predicated region
  $region26: #{transfer_model_forward.2} parent=0 // pred_check
    _
  $region27: #{transfer_model_forward.2} parent=0 // pred_check_branch
    %27 = sbr.rel (0) target = $region29
  $region28: #{transfer_model_forward.2} parent=0 // pred_region
    _
  $region29: #{transfer_model_forward.2} parent=0 // pred_fallthru
    _
  // Predicated region
  $region30: #{transfer_model_forward.2} parent=0 // pred_check
    _
  $region31: #{transfer_model_forward.2} parent=0 // pred_check_branch
    %29 = sbr.rel (0) target = $region33
  $region32: #{transfer_model_forward.2} parent=0 // pred_region
    _
  $region33: #{transfer_model_forward.2} parent=0 // pred_fallthru
    _
  // Predicated region
  $region34: #{transfer_model_forward.2} parent=0 // pred_check
    _
  $region35: #{transfer_model_forward.2} parent=0 // pred_check_branch
    %31 = sbr.rel (0) target = $region37
  $region36: #{transfer_model_forward.2} parent=0 // pred_region
    _
  $region37: #{transfer_model_forward.2} parent=0 // pred_fallthru
    _
  %v32 = vld [vmem:[%s0] sm:$0xff]
  %v33 = vld [vmem:[%s2] sm:$0xff]
  %v34 = vld [vmem:[%s2 + $0x8] sm:$0xff]
  %v35 = vld [vmem:[%s2 + $0x10] sm:$0xff]
  %v36 = vld [vmem:[%s2 + $0x18] sm:$0xff]
  %v37 = vld [vmem:[%s2 + $0x20] sm:$0x3]
  %v38 = vld [vmem:[%s2 + $0x28] sm:$0x3]
  %v39 = vld [vmem:[%s1] ss:$8 sm:$0x3]
  %v41 = vlaneseq
  %v42 = vshrl.u32 %v41, 7
  %v43 = vsub.s32 0, %v42
  %v44 = vrot.slane %v39, %v43
  %v45 = vlaneseq
  %v46 = vshrl.u32 %v45, 7
  %v47 = vsub.s32 1, %v46
  %v48 = vrot.slane %v39, %v47
  %vm51 = vcmask 146432
  %v53 = vsel %vm51, %v32, 0
  %vm55 = vcmask 1041408
  %v57 = vsel %vm55, %v37, 0
  %v60 = vsel %vm55, %v38, 0
  %62 = vmatprep.subr.mxu0 0.0
  %63 = vmatpush1.msra.mxu0 0.0
  %64 = vmatprep.subr.mxu0 0.0
  %65 = vmatpush1.msra.mxu0 0.0
  %66 = vmatprep.subr.mxu0 0.0
  %67 = vmatpush1.msra.mxu0 0.0
  %68 = vmatprep.subr.mxu0 0.0
  %69 = vmatpush1.msra.mxu0 0.0
  %70 = vmatprep.subr.mxu0 0.0
  %71 = vmatpush1.msra.mxu0 0.0
  %72 = vmatprep.subr.mxu0 0.0
  %73 = vmatpush1.msra.mxu0 0.0
  %74 = vmatprep.subr.mxu0 0.0
  %75 = vmatpush1.msra.mxu0 0.0
  %76 = vmatprep.subr.mxu0 0.0
  %77 = vmatpush1.msra.mxu0 0.0
  %78 = vmatprep.subr.mxu0 0.0
  %79 = vmatpush1.msra.mxu0 0.0
  %80 = vmatprep.subr.mxu0 0.0
  %81 = vmatpush1.msra.mxu0 0.0
  %82 = vmatprep.subr.mxu0 0.0
  %83 = vmatpush1.msra.mxu0 0.0
  %84 = vmatprep.subr.mxu0 0.0
  %85 = vmatpush1.msra.mxu0 0.0
  %86 = vmatprep.subr.mxu0 0.0
  %87 = vmatpush1.msra.mxu0 0.0
  %88 = vmatprep.subr.mxu0 %v60
  %89 = vmatpush1.msra.mxu0 %v57
  %90 = vmatprep.subr.mxu0 %v36
  %91 = vmatpush1.msra.mxu0 %v35
  %92 = vmatprep.subr.mxu0 %v34
  %93 = vmatpush1.msra.mxu0 %v33
  %94 = vmatprep.subr.mxu0 0.0
  %95 = vmatpush2.msra.mxu0 0.0
  %96 = vmatprep.subr.mxu0 0.0
  %97 = vmatpush2.msra.mxu0 0.0
  %98 = vmatprep.subr.mxu0 0.0
  %99 = vmatpush2.msra.mxu0 0.0
  %100 = vmatprep.subr.mxu0 0.0
  %101 = vmatpush2.msra.mxu0 0.0
  %102 = vmatprep.subr.mxu0 0.0
  %103 = vmatpush2.msra.mxu0 0.0
  %104 = vmatprep.subr.mxu0 0.0
  %105 = vmatpush2.msra.mxu0 0.0
  %106 = vmatprep.subr.mxu0 0.0
  %107 = vmatpush2.msra.mxu0 0.0
  %108 = vmatprep.subr.mxu0 0.0
  %109 = vmatpush2.msra.mxu0 0.0
  %110 = vmatprep.subr.mxu0 0.0
  %111 = vmatpush2.msra.mxu0 0.0
  %112 = vmatprep.subr.mxu0 0.0
  %113 = vmatpush2.msra.mxu0 0.0
  %114 = vmatprep.subr.mxu0 0.0
  %115 = vmatpush2.msra.mxu0 0.0
  %116 = vmatprep.subr.mxu0 0.0
  %117 = vmatpush2.msra.mxu0 0.0
  %118 = vmatprep.subr.mxu0 0.0
  %119 = vmatpush2.msra.mxu0 0.0
  %120 = vmatprep.subr.mxu0 0.0
  %121 = vmatpush2.msra.mxu0 0.0
  %122 = vmatprep.subr.mxu0 0.0
  %123 = vmatpush2.msra.mxu0 0.0
  %124 = vmatprep.subr.mxu0 0.0
  %125 = vmatpush2.msra.mxu0 0.0
  %126 = vmatprep.mubr.f32.mxu0 0.0
  %127 = vmatmul.mubr.f32.gmra.mxu0 %v53
  %v128 = vpop.f32.mrf.mxu0
  %v129 = vadd.f32 %v44, %v128
  %v130 = vpop.f32.mrf.mxu0
  %v131 = vadd.f32 %v48, %v130
  %132 = vdwg.mxu0
  %vm133 = vcmp.gt.f32.partialorder %v129, 0.0
  %vm134 = vcmp.gt.f32.partialorder %v131, 0.0
  %v135 = vmul.f32 %v129, 0.01
  %v136 = vmul.f32 %v131, 0.01
  %v137 = vsel %vm133, %v129, %v135
  %v138 = vsel %vm134, %v131, %v136
  %v139 = vld [vmem:[%s3] sm:$0xff]
  %v140 = vld [vmem:[%s3 + $0x8] sm:$0xff]
  %v141 = vld [vmem:[%s3 + $0x10] sm:$0xff]
  %v142 = vld [vmem:[%s3 + $0x18] sm:$0xff]
  %v143 = vld [vmem:[%s3 + $0x20] sm:$0xff]
  %v144 = vld [vmem:[%s3 + $0x28] sm:$0xff]
  %v145 = vld [vmem:[%s3 + $0x30] sm:$0xff]
  %v146 = vld [vmem:[%s3 + $0x38] sm:$0xff]
  %v147 = vld [vmem:[%s3 + $0x40] sm:$0xff]
  %v148 = vld [vmem:[%s3 + $0x48] sm:$0xff]
  %v149 = vld [vmem:[%s3 + $0x50] sm:$0xff]
  %v150 = vld [vmem:[%s3 + $0x58] sm:$0xff]
  %v151 = vld [vmem:[%s3 + $0x60] sm:$0xff]
  %v152 = vld [vmem:[%s3 + $0x68] sm:$0xff]
  %v153 = vld [vmem:[%s3 + $0x70] sm:$0xff]
  %v154 = vld [vmem:[%s3 + $0x78] sm:$0xff]
  %v155 = vld [vmem:[%s3 + $0x80] sm:$0xff]
  %v156 = vld [vmem:[%s3 + $0x88] sm:$0xff]
  %v157 = vld [vmem:[%s3 + $0x90] sm:$0xff]
  %v158 = vld [vmem:[%s3 + $0x98] sm:$0xff]
  %v159 = vld [vmem:[%s3 + $0xa0] sm:$0xff]
  %v160 = vld [vmem:[%s3 + $0xa8] sm:$0xff]
  %v161 = vld [vmem:[%s3 + $0xb0] sm:$0xff]
  %v162 = vld [vmem:[%s3 + $0xb8] sm:$0xff]
  %v163 = vld [vmem:[%s3 + $0xc0] sm:$0xff]
  %v164 = vld [vmem:[%s3 + $0xc8] sm:$0xff]
  %v165 = vld [vmem:[%s3 + $0xd0] sm:$0xff]
  %v166 = vld [vmem:[%s3 + $0xd8] sm:$0xff]
  %v167 = vld [vmem:[%s3 + $0xe0] sm:$0xff]
  %v168 = vld [vmem:[%s3 + $0xe8] sm:$0xff]
  %v169 = vld [vmem:[%s1 + $0x1] ss:$0 sm:$0xff]
  %vm170 = vcmask 916480
  %v172 = vsel %vm170, %v138, 0
  %174 = vmatprep.subr.mxu0 0.0
  %175 = vmatpush1.msra.mxu0 %v154
  %176 = vmatprep.subr.mxu0 0.0
  %177 = vmatpush1.msra.mxu0 %v153
  %178 = vmatprep.subr.mxu0 0.0
  %179 = vmatpush1.msra.mxu0 %v152
  %180 = vmatprep.subr.mxu0 0.0
  %181 = vmatpush1.msra.mxu0 %v151
  %182 = vmatprep.subr.mxu0 0.0
  %183 = vmatpush1.msra.mxu0 %v150
  %184 = vmatprep.subr.mxu0 0.0
  %185 = vmatpush1.msra.mxu0 %v149
  %186 = vmatprep.subr.mxu0 0.0
  %187 = vmatpush1.msra.mxu0 %v148
  %188 = vmatprep.subr.mxu0 0.0
  %189 = vmatpush1.msra.mxu0 %v147
  %190 = vmatprep.subr.mxu0 0.0
  %191 = vmatpush1.msra.mxu0 %v146
  %192 = vmatprep.subr.mxu0 0.0
  %193 = vmatpush1.msra.mxu0 %v145
  %194 = vmatprep.subr.mxu0 0.0
  %195 = vmatpush1.msra.mxu0 %v144
  %196 = vmatprep.subr.mxu0 0.0
  %197 = vmatpush1.msra.mxu0 %v143
  %198 = vmatprep.subr.mxu0 0.0
  %199 = vmatpush1.msra.mxu0 %v142
  %200 = vmatprep.subr.mxu0 0.0
  %201 = vmatpush1.msra.mxu0 %v141
  %202 = vmatprep.subr.mxu0 0.0
  %203 = vmatpush1.msra.mxu0 %v140
  %204 = vmatprep.subr.mxu0 0.0
  %205 = vmatpush1.msra.mxu0 %v139
  %206 = vmatprep.subr.mxu0 0.0
  %207 = vmatpush2.msra.mxu0 0.0
  %208 = vmatprep.subr.mxu0 0.0
  %209 = vmatpush2.msra.mxu0 0.0
  %210 = vmatprep.subr.mxu0 0.0
  %211 = vmatpush2.msra.mxu0 %v168
  %212 = vmatprep.subr.mxu0 0.0
  %213 = vmatpush2.msra.mxu0 %v167
  %214 = vmatprep.subr.mxu0 0.0
  %215 = vmatpush2.msra.mxu0 %v166
  %216 = vmatprep.subr.mxu0 0.0
  %217 = vmatpush2.msra.mxu0 %v165
  %218 = vmatprep.subr.mxu0 0.0
  %219 = vmatpush2.msra.mxu0 %v164
  %220 = vmatprep.subr.mxu0 0.0
  %221 = vmatpush2.msra.mxu0 %v163
  %222 = vmatprep.subr.mxu0 0.0
  %223 = vmatpush2.msra.mxu0 %v162
  %224 = vmatprep.subr.mxu0 0.0
  %225 = vmatpush2.msra.mxu0 %v161
  %226 = vmatprep.subr.mxu0 0.0
  %227 = vmatpush2.msra.mxu0 %v160
  %228 = vmatprep.subr.mxu0 0.0
  %229 = vmatpush2.msra.mxu0 %v159
  %230 = vmatprep.subr.mxu0 0.0
  %231 = vmatpush2.msra.mxu0 %v158
  %232 = vmatprep.subr.mxu0 0.0
  %233 = vmatpush2.msra.mxu0 %v157
  %234 = vmatprep.subr.mxu0 0.0
  %235 = vmatpush2.msra.mxu0 %v156
  %236 = vmatprep.subr.mxu0 0.0
  %237 = vmatpush2.msra.mxu0 %v155
  %238 = vmatprep.mubr.f32.mxu0 %v172
  %239 = vmatmul.mubr.f32.gmra.mxu0 %v137
  %v240 = vpop.f32.mrf.mxu0
  %v241 = vadd.f32 %v169, %v240
  %v242 = vpop.f32.mrf.mxu0
  %243 = vdwg.mxu0
  %v244 = vld [vmem:[%s1 + $0x2] ss:$0 sm:$0xff]
  %245 = vset.pattern.permute.xlu0 17
  %246 = vperm.xlu0 %245, %v32
  %v247 = vpop.permute.xlu0 %246
  %v249 = vmul.f32 %v247, %v244
  %v250 = vld [vmem:[%s1 + $0x3] ss:$0 sm:$0xff]
  %v251 = vadd.f32 %v249, %v250
  %vm252 = vcmp.gt.f32.partialorder %v251, 0.0
  %v253 = vmul.f32 %v251, 0.01
  %v254 = vsel %vm252, %v251, %v253
  %v255 = vld [vmem:[%s4] sm:$0xff]
  %v256 = vld [vmem:[%s4 + $0x8] sm:$0x3]
  %v257 = vld [vmem:[%s1 + $0x4] ss:$0 sm:$0xff]
  %vm258 = vcmask 80896
  %v260 = vsel %vm258, %v254, 0
  %v263 = vsel %vm55, %v256, 0
  %265 = vmatprep.subr.mxu0 0.0
  %266 = vmatpush1.msra.mxu0 0.0
  %267 = vmatprep.subr.mxu0 0.0
  %268 = vmatpush1.msra.mxu0 0.0
  %269 = vmatprep.subr.mxu0 0.0
  %270 = vmatpush1.msra.mxu0 0.0
  %271 = vmatprep.subr.mxu0 0.0
  %272 = vmatpush1.msra.mxu0 0.0
  %273 = vmatprep.subr.mxu0 0.0
  %274 = vmatpush1.msra.mxu0 0.0
  %275 = vmatprep.subr.mxu0 0.0
  %276 = vmatpush1.msra.mxu0 0.0
  %277 = vmatprep.subr.mxu0 0.0
  %278 = vmatpush1.msra.mxu0 0.0
  %279 = vmatprep.subr.mxu0 0.0
  %280 = vmatpush1.msra.mxu0 0.0
  %281 = vmatprep.subr.mxu0 0.0
  %282 = vmatpush1.msra.mxu0 0.0
  %283 = vmatprep.subr.mxu0 0.0
  %284 = vmatpush1.msra.mxu0 0.0
  %285 = vmatprep.subr.mxu0 0.0
  %286 = vmatpush1.msra.mxu0 0.0
  %287 = vmatprep.subr.mxu0 0.0
  %288 = vmatpush1.msra.mxu0 0.0
  %289 = vmatprep.subr.mxu0 0.0
  %290 = vmatpush1.msra.mxu0 0.0
  %291 = vmatprep.subr.mxu0 0.0
  %292 = vmatpush1.msra.mxu0 0.0
  %293 = vmatprep.subr.mxu0 0.0
  %294 = vmatpush1.msra.mxu0 %v263
  %295 = vmatprep.subr.mxu0 0.0
  %296 = vmatpush1.msra.mxu0 %v255
  %297 = vmatprep.subr.mxu0 0.0
  %298 = vmatpush2.msra.mxu0 0.0
  %299 = vmatprep.subr.mxu0 0.0
  %300 = vmatpush2.msra.mxu0 0.0
  %301 = vmatprep.subr.mxu0 0.0
  %302 = vmatpush2.msra.mxu0 0.0
  %303 = vmatprep.subr.mxu0 0.0
  %304 = vmatpush2.msra.mxu0 0.0
  %305 = vmatprep.subr.mxu0 0.0
  %306 = vmatpush2.msra.mxu0 0.0
  %307 = vmatprep.subr.mxu0 0.0
  %308 = vmatpush2.msra.mxu0 0.0
  %309 = vmatprep.subr.mxu0 0.0
  %310 = vmatpush2.msra.mxu0 0.0
  %311 = vmatprep.subr.mxu0 0.0
  %312 = vmatpush2.msra.mxu0 0.0
  %313 = vmatprep.subr.mxu0 0.0
  %314 = vmatpush2.msra.mxu0 0.0
  %315 = vmatprep.subr.mxu0 0.0
  %316 = vmatpush2.msra.mxu0 0.0
  %317 = vmatprep.subr.mxu0 0.0
  %318 = vmatpush2.msra.mxu0 0.0
  %319 = vmatprep.subr.mxu0 0.0
  %320 = vmatpush2.msra.mxu0 0.0
  %321 = vmatprep.subr.mxu0 0.0
  %322 = vmatpush2.msra.mxu0 0.0
  %323 = vmatprep.subr.mxu0 0.0
  %324 = vmatpush2.msra.mxu0 0.0
  %325 = vmatprep.subr.mxu0 0.0
  %326 = vmatpush2.msra.mxu0 0.0
  %327 = vmatprep.subr.mxu0 0.0
  %328 = vmatpush2.msra.mxu0 0.0
  %329 = vmatprep.mubr.f32.mxu0 0.0
  %330 = vmatmul.mubr.f32.gmra.mxu0 %v260
  %v331 = vpop.f32.mrf.mxu0
  %v332 = vadd.f32 %v257, %v331
  %v333 = vpop.f32.mrf.mxu0
  %334 = vdwg.mxu0
  %v335 = vld [vmem:[%s5] sm:$0xff]
  %v336 = vld [vmem:[%s5 + $0x8] sm:$0xff]
  %v337 = vld [vmem:[%s5 + $0x10] sm:$0xff]
  %v338 = vld [vmem:[%s5 + $0x18] sm:$0xff]
  %v339 = vld [vmem:[%s5 + $0x20] sm:$0xff]
  %v340 = vld [vmem:[%s5 + $0x28] sm:$0xff]
  %v341 = vld [vmem:[%s5 + $0x30] sm:$0xff]
  %v342 = vld [vmem:[%s5 + $0x38] sm:$0xff]
  %v343 = vld [vmem:[%s5 + $0x40] sm:$0xff]
  %v344 = vld [vmem:[%s5 + $0x48] sm:$0xff]
  %v345 = vld [vmem:[%s5 + $0x50] sm:$0xff]
  %v346 = vld [vmem:[%s5 + $0x58] sm:$0xff]
  %v347 = vld [vmem:[%s5 + $0x60] sm:$0xff]
  %v348 = vld [vmem:[%s5 + $0x68] sm:$0xff]
  %v349 = vld [vmem:[%s5 + $0x70] sm:$0xf]
  %v350 = vld [vmem:[%s5 + $0x78] sm:$0xf]
  %v351 = vld [vmem:[%s6] sm:$0xff]
  %v352 = vld [vmem:[%s6 + $0x8] sm:$0xff]
  %v353 = vld [vmem:[%s6 + $0x10] sm:$0xff]
  %v354 = vld [vmem:[%s6 + $0x18] sm:$0xff]
  %v355 = vld [vmem:[%s6 + $0x20] sm:$0x1]
  %v356 = vld [vmem:[%s6 + $0x28] sm:$0x1]
  %vm357 = vcmask 138240
  %v358 = vsel %vm357, %v32, 0
  %vm360 = vcmask 1040384
  %v362 = vsel %vm360, %v355, 0
  %v365 = vsel %vm360, %v356, 0
  %367 = vmatprep.subr.mxu0 0.0
  %368 = vmatpush1.msra.mxu0 0.0
  %369 = vmatprep.subr.mxu0 0.0
  %370 = vmatpush1.msra.mxu0 0.0
  %371 = vmatprep.subr.mxu0 0.0
  %372 = vmatpush1.msra.mxu0 0.0
  %373 = vmatprep.subr.mxu0 0.0
  %374 = vmatpush1.msra.mxu0 0.0
  %375 = vmatprep.subr.mxu0 0.0
  %376 = vmatpush1.msra.mxu0 0.0
  %377 = vmatprep.subr.mxu0 0.0
  %378 = vmatpush1.msra.mxu0 0.0
  %379 = vmatprep.subr.mxu0 0.0
  %380 = vmatpush1.msra.mxu0 0.0
  %381 = vmatprep.subr.mxu0 0.0
  %382 = vmatpush1.msra.mxu0 0.0
  %383 = vmatprep.subr.mxu0 0.0
  %384 = vmatpush1.msra.mxu0 0.0
  %385 = vmatprep.subr.mxu0 0.0
  %386 = vmatpush1.msra.mxu0 0.0
  %387 = vmatprep.subr.mxu0 0.0
  %388 = vmatpush1.msra.mxu0 0.0
  %389 = vmatprep.subr.mxu0 0.0
  %390 = vmatpush1.msra.mxu0 0.0
  %391 = vmatprep.subr.mxu0 0.0
  %392 = vmatpush1.msra.mxu0 0.0
  %393 = vmatprep.subr.mxu0 %v365
  %394 = vmatpush1.msra.mxu0 %v362
  %395 = vmatprep.subr.mxu0 %v354
  %396 = vmatpush1.msra.mxu0 %v353
  %397 = vmatprep.subr.mxu0 %v352
  %398 = vmatpush1.msra.mxu0 %v351
  %399 = vmatprep.subr.mxu0 0.0
  %400 = vmatpush2.msra.mxu0 0.0
  %401 = vmatprep.subr.mxu0 0.0
  %402 = vmatpush2.msra.mxu0 0.0
  %403 = vmatprep.subr.mxu0 0.0
  %404 = vmatpush2.msra.mxu0 0.0
  %405 = vmatprep.subr.mxu0 0.0
  %406 = vmatpush2.msra.mxu0 0.0
  %407 = vmatprep.subr.mxu0 0.0
  %408 = vmatpush2.msra.mxu0 0.0
  %409 = vmatprep.subr.mxu0 0.0
  %410 = vmatpush2.msra.mxu0 0.0
  %411 = vmatprep.subr.mxu0 0.0
  %412 = vmatpush2.msra.mxu0 0.0
  %413 = vmatprep.subr.mxu0 0.0
  %414 = vmatpush2.msra.mxu0 0.0
  %415 = vmatprep.subr.mxu0 0.0
  %416 = vmatpush2.msra.mxu0 0.0
  %417 = vmatprep.subr.mxu0 0.0
  %418 = vmatpush2.msra.mxu0 0.0
  %419 = vmatprep.subr.mxu0 0.0
  %420 = vmatpush2.msra.mxu0 0.0
  %421 = vmatprep.subr.mxu0 0.0
  %422 = vmatpush2.msra.mxu0 0.0
  %423 = vmatprep.subr.mxu0 0.0
  %424 = vmatpush2.msra.mxu0 0.0
  %425 = vmatprep.subr.mxu0 0.0
  %426 = vmatpush2.msra.mxu0 0.0
  %427 = vmatprep.subr.mxu0 0.0
  %428 = vmatpush2.msra.mxu0 0.0
  %429 = vmatprep.subr.mxu0 0.0
  %430 = vmatpush2.msra.mxu0 0.0
  %431 = vmatprep.mubr.f32.mxu0 0.0
  %432 = vmatmul.mubr.f32.gmra.mxu0 %v358
  %v433 = vpop.f32.mrf.mxu0
  %v434 = vadd.f32 0.0, %v433
  %v435 = vpop.f32.mrf.mxu0
  %v436 = vadd.f32 0.0, %v435
  %437 = vdwg.mxu0
  %vm438 = vcmask 490496
  %v440 = vsel %vm438, %v241, 0
  %vm442 = vcmask 1043456
  %v444 = vsel %vm442, %v349, 0
  %v447 = vsel %vm442, %v350, 0
  %449 = vmatprep.subr.mxu0 0.0
  %450 = vmatpush1.msra.mxu0 0.0
  %451 = vmatprep.subr.mxu0 0.0
  %452 = vmatpush1.msra.mxu0 0.0
  %453 = vmatprep.subr.mxu0 0.0
  %454 = vmatpush1.msra.mxu0 0.0
  %455 = vmatprep.subr.mxu0 0.0
  %456 = vmatpush1.msra.mxu0 0.0
  %457 = vmatprep.subr.mxu0 0.0
  %458 = vmatpush1.msra.mxu0 0.0
  %459 = vmatprep.subr.mxu0 0.0
  %460 = vmatpush1.msra.mxu0 0.0
  %461 = vmatprep.subr.mxu0 0.0
  %462 = vmatpush1.msra.mxu0 0.0
  %463 = vmatprep.subr.mxu0 0.0
  %464 = vmatpush1.msra.mxu0 0.0
  %465 = vmatprep.subr.mxu0 %v447
  %466 = vmatpush1.msra.mxu0 %v444
  %467 = vmatprep.subr.mxu0 %v348
  %468 = vmatpush1.msra.mxu0 %v347
  %469 = vmatprep.subr.mxu0 %v346
  %470 = vmatpush1.msra.mxu0 %v345
  %471 = vmatprep.subr.mxu0 %v344
  %472 = vmatpush1.msra.mxu0 %v343
  %473 = vmatprep.subr.mxu0 %v342
  %474 = vmatpush1.msra.mxu0 %v341
  %475 = vmatprep.subr.mxu0 %v340
  %476 = vmatpush1.msra.mxu0 %v339
  %477 = vmatprep.subr.mxu0 %v338
  %478 = vmatpush1.msra.mxu0 %v337
  %479 = vmatprep.subr.mxu0 %v336
  %480 = vmatpush1.msra.mxu0 %v335
  %481 = vmatprep.subr.mxu0 0.0
  %482 = vmatpush2.msra.mxu0 0.0
  %483 = vmatprep.subr.mxu0 0.0
  %484 = vmatpush2.msra.mxu0 0.0
  %485 = vmatprep.subr.mxu0 0.0
  %486 = vmatpush2.msra.mxu0 0.0
  %487 = vmatprep.subr.mxu0 0.0
  %488 = vmatpush2.msra.mxu0 0.0
  %489 = vmatprep.subr.mxu0 0.0
  %490 = vmatpush2.msra.mxu0 0.0
  %491 = vmatprep.subr.mxu0 0.0
  %492 = vmatpush2.msra.mxu0 0.0
  %493 = vmatprep.subr.mxu0 0.0
  %494 = vmatpush2.msra.mxu0 0.0
  %495 = vmatprep.subr.mxu0 0.0
  %496 = vmatpush2.msra.mxu0 0.0
  %497 = vmatprep.subr.mxu0 0.0
  %498 = vmatpush2.msra.mxu0 0.0
  %499 = vmatprep.subr.mxu0 0.0
  %500 = vmatpush2.msra.mxu0 0.0
  %501 = vmatprep.subr.mxu0 0.0
  %502 = vmatpush2.msra.mxu0 0.0
  %503 = vmatprep.subr.mxu0 0.0
  %504 = vmatpush2.msra.mxu0 0.0
  %505 = vmatprep.subr.mxu0 0.0
  %506 = vmatpush2.msra.mxu0 0.0
  %507 = vmatprep.subr.mxu0 0.0
  %508 = vmatpush2.msra.mxu0 0.0
  %509 = vmatprep.subr.mxu0 0.0
  %510 = vmatpush2.msra.mxu0 0.0
  %511 = vmatprep.subr.mxu0 0.0
  %512 = vmatpush2.msra.mxu0 0.0
  %513 = vmatprep.mubr.f32.mxu0 0.0
  %514 = vmatmul.mubr.f32.gmra.mxu0 %v440
  %v515 = vpop.f32.mrf.mxu0
  %v516 = vadd.f32 %v434, %v515
  %v517 = vpop.f32.mrf.mxu0
  %v518 = vadd.f32 %v436, %v517
  %519 = vdwg.mxu0
  %v520 = vld [vmem:[%s7] sm:$0xff]
  %v521 = vld [vmem:[%s7 + $0x8] sm:$0xff]
  %v522 = vld [vmem:[%s7 + $0x10] sm:$0xff]
  %v523 = vld [vmem:[%s7 + $0x18] sm:$0xff]
  %v524 = vld [vmem:[%s7 + $0x20] sm:$0xf]
  %v525 = vld [vmem:[%s7 + $0x28] sm:$0xf]
  %vm526 = vcmask 162816
  %v528 = vsel %vm526, %v332, 0
  %v531 = vsel %vm442, %v524, 0
  %v534 = vsel %vm442, %v525, 0
  %536 = vmatprep.subr.mxu0 0.0
  %537 = vmatpush1.msra.mxu0 0.0
  %538 = vmatprep.subr.mxu0 0.0
  %539 = vmatpush1.msra.mxu0 0.0
  %540 = vmatprep.subr.mxu0 0.0
  %541 = vmatpush1.msra.mxu0 0.0
  %542 = vmatprep.subr.mxu0 0.0
  %543 = vmatpush1.msra.mxu0 0.0
  %544 = vmatprep.subr.mxu0 0.0
  %545 = vmatpush1.msra.mxu0 0.0
  %546 = vmatprep.subr.mxu0 0.0
  %547 = vmatpush1.msra.mxu0 0.0
  %548 = vmatprep.subr.mxu0 0.0
  %549 = vmatpush1.msra.mxu0 0.0
  %550 = vmatprep.subr.mxu0 0.0
  %551 = vmatpush1.msra.mxu0 0.0
  %552 = vmatprep.subr.mxu0 0.0
  %553 = vmatpush1.msra.mxu0 0.0
  %554 = vmatprep.subr.mxu0 0.0
  %555 = vmatpush1.msra.mxu0 0.0
  %556 = vmatprep.subr.mxu0 0.0
  %557 = vmatpush1.msra.mxu0 0.0
  %558 = vmatprep.subr.mxu0 0.0
  %559 = vmatpush1.msra.mxu0 0.0
  %560 = vmatprep.subr.mxu0 0.0
  %561 = vmatpush1.msra.mxu0 0.0
  %562 = vmatprep.subr.mxu0 %v534
  %563 = vmatpush1.msra.mxu0 %v531
  %564 = vmatprep.subr.mxu0 %v523
  %565 = vmatpush1.msra.mxu0 %v522
  %566 = vmatprep.subr.mxu0 %v521
  %567 = vmatpush1.msra.mxu0 %v520
  %568 = vmatprep.subr.mxu0 0.0
  %569 = vmatpush2.msra.mxu0 0.0
  %570 = vmatprep.subr.mxu0 0.0
  %571 = vmatpush2.msra.mxu0 0.0
  %572 = vmatprep.subr.mxu0 0.0
  %573 = vmatpush2.msra.mxu0 0.0
  %574 = vmatprep.subr.mxu0 0.0
  %575 = vmatpush2.msra.mxu0 0.0
  %576 = vmatprep.subr.mxu0 0.0
  %577 = vmatpush2.msra.mxu0 0.0
  %578 = vmatprep.subr.mxu0 0.0
  %579 = vmatpush2.msra.mxu0 0.0
  %580 = vmatprep.subr.mxu0 0.0
  %581 = vmatpush2.msra.mxu0 0.0
  %582 = vmatprep.subr.mxu0 0.0
  %583 = vmatpush2.msra.mxu0 0.0
  %584 = vmatprep.subr.mxu0 0.0
  %585 = vmatpush2.msra.mxu0 0.0
  %586 = vmatprep.subr.mxu0 0.0
  %587 = vmatpush2.msra.mxu0 0.0
  %588 = vmatprep.subr.mxu0 0.0
  %589 = vmatpush2.msra.mxu0 0.0
  %590 = vmatprep.subr.mxu0 0.0
  %591 = vmatpush2.msra.mxu0 0.0
  %592 = vmatprep.subr.mxu0 0.0
  %593 = vmatpush2.msra.mxu0 0.0
  %594 = vmatprep.subr.mxu0 0.0
  %595 = vmatpush2.msra.mxu0 0.0
  %596 = vmatprep.subr.mxu0 0.0
  %597 = vmatpush2.msra.mxu0 0.0
  %598 = vmatprep.subr.mxu0 0.0
  %599 = vmatpush2.msra.mxu0 0.0
  %600 = vmatprep.mubr.f32.mxu0 0.0
  %601 = vmatmul.mubr.f32.gmra.mxu0 %v528
  %v602 = vpop.f32.mrf.mxu0
  %v603 = vadd.f32 0.0, %v602
  %v604 = vpop.f32.mrf.mxu0
  %v605 = vadd.f32 0.0, %v604
  %606 = vdwg.mxu0
  %v607 = vadd.f32 %v516, %v603
  %v608 = vadd.f32 %v518, %v605
  %s609 = scalar_lea.vmem %s1, 5
  %v610 = vld [vmem:[%s609] ss:$8 sm:$0x3]
  %v612 = vlaneseq
  %v613 = vshrl.u32 %v612, 7
  %v614 = vsub.s32 0, %v613
  %v615 = vrot.slane %v610, %v614
  %v616 = vlaneseq
  %v617 = vshrl.u32 %v616, 7
  %v618 = vsub.s32 1, %v617
  %v619 = vrot.slane %v610, %v618
  %v622 = vadd.f32 %v607, %v615
  %v623 = vadd.f32 %v608, %v619
  %v624 = vld [vmem:[%s8] sm:$0xff]
  %v625 = vld [vmem:[%s8 + $0x8] sm:$0xff]
  %v626 = vld [vmem:[%s8 + $0x10] sm:$0x1]
  %v627 = vld [vmem:[%s1 + $0x11] ss:$0 sm:$0xff]
  %v629 = vsel %vm360, %v626, 0
  %631 = vmatprep.subr.mxu0 0.0
  %632 = vmatpush1.msra.mxu0 0.0
  %633 = vmatprep.subr.mxu0 0.0
  %634 = vmatpush1.msra.mxu0 0.0
  %635 = vmatprep.subr.mxu0 0.0
  %636 = vmatpush1.msra.mxu0 0.0
  %637 = vmatprep.subr.mxu0 0.0
  %638 = vmatpush1.msra.mxu0 0.0
  %639 = vmatprep.subr.mxu0 0.0
  %640 = vmatpush1.msra.mxu0 0.0
  %641 = vmatprep.subr.mxu0 0.0
  %642 = vmatpush1.msra.mxu0 0.0
  %643 = vmatprep.subr.mxu0 0.0
  %644 = vmatpush1.msra.mxu0 0.0
  %645 = vmatprep.subr.mxu0 0.0
  %646 = vmatpush1.msra.mxu0 0.0
  %647 = vmatprep.subr.mxu0 0.0
  %648 = vmatpush1.msra.mxu0 0.0
  %649 = vmatprep.subr.mxu0 0.0
  %650 = vmatpush1.msra.mxu0 0.0
  %651 = vmatprep.subr.mxu0 0.0
  %652 = vmatpush1.msra.mxu0 0.0
  %653 = vmatprep.subr.mxu0 0.0
  %654 = vmatpush1.msra.mxu0 0.0
  %655 = vmatprep.subr.mxu0 0.0
  %656 = vmatpush1.msra.mxu0 0.0
  %657 = vmatprep.subr.mxu0 0.0
  %658 = vmatpush1.msra.mxu0 %v629
  %659 = vmatprep.subr.mxu0 0.0
  %660 = vmatpush1.msra.mxu0 %v625
  %661 = vmatprep.subr.mxu0 0.0
  %662 = vmatpush1.msra.mxu0 %v624
  %663 = vmatprep.subr.mxu0 0.0
  %664 = vmatpush2.msra.mxu0 0.0
  %665 = vmatprep.subr.mxu0 0.0
  %666 = vmatpush2.msra.mxu0 0.0
  %667 = vmatprep.subr.mxu0 0.0
  %668 = vmatpush2.msra.mxu0 0.0
  %669 = vmatprep.subr.mxu0 0.0
  %670 = vmatpush2.msra.mxu0 0.0
  %671 = vmatprep.subr.mxu0 0.0
  %672 = vmatpush2.msra.mxu0 0.0
  %673 = vmatprep.subr.mxu0 0.0
  %674 = vmatpush2.msra.mxu0 0.0
  %675 = vmatprep.subr.mxu0 0.0
  %676 = vmatpush2.msra.mxu0 0.0
  %677 = vmatprep.subr.mxu0 0.0
  %678 = vmatpush2.msra.mxu0 0.0
  %679 = vmatprep.subr.mxu0 0.0
  %680 = vmatpush2.msra.mxu0 0.0
  %681 = vmatprep.subr.mxu0 0.0
  %682 = vmatpush2.msra.mxu0 0.0
  %683 = vmatprep.subr.mxu0 0.0
  %684 = vmatpush2.msra.mxu0 0.0
  %685 = vmatprep.subr.mxu0 0.0
  %686 = vmatpush2.msra.mxu0 0.0
  %687 = vmatprep.subr.mxu0 0.0
  %688 = vmatpush2.msra.mxu0 0.0
  %689 = vmatprep.subr.mxu0 0.0
  %690 = vmatpush2.msra.mxu0 0.0
  %691 = vmatprep.subr.mxu0 0.0
  %692 = vmatpush2.msra.mxu0 0.0
  %693 = vmatprep.subr.mxu0 0.0
  %694 = vmatpush2.msra.mxu0 0.0
  %695 = vmatprep.mubr.f32.mxu0 0.0
  %696 = vmatmul.mubr.f32.gmra.mxu0 %v358
  %v697 = vpop.f32.mrf.mxu0
  %v698 = vadd.f32 %v627, %v697
  %v699 = vpop.f32.mrf.mxu0
  %700 = vdwg.mxu0
  %s701 = smul.u32 0, 8
  %v702 = vlaneseq
  %v703 = vshrl.u32 %v702, 7
  %v704 = vstv %s701
  %v705 = vadd.s32 %v704, %v703
  %vm706 = vcmp.lt.s32.totalorder %v705, 8
  %v707 = vsel %vm706, 1, 0
  %vm708 = vcmp.eq.s32.totalorder %v707, 1
  %v709 = vsel %vm708, %v622, 0.0
  %v710 = vsel %vm708, %v623, 0.0
  %v711 = vsel %vm708, %v698, 0.0
  %712 = vst [vmem:[%s9] sm:$0xff] 0.0
  %713 = vst [vmem:[%s9 + $0x8] sm:$0xff] 0.0
  %v714 = vrot.slane %v709, 4
  %v715 = vadd.f32 %v709, %v714
  %v716 = vrot.slane %v715, 2
  %v717 = vadd.f32 %v715, %v716
  %v718 = vrot.slane %v717, 1
  %v719 = vadd.f32 %v717, %v718
  %vm720 = vcmask 211968
  %v721 = vsel %vm720, %v710, 0.0
  %v722 = vrot.slane %v721, 4
  %v723 = vadd.f32 %v721, %v722
  %v724 = vrot.slane %v723, 2
  %v725 = vadd.f32 %v723, %v724
  %v726 = vrot.slane %v725, 1
  %v727 = vadd.f32 %v725, %v726
  %v730 = vcombine.low %v719, %v727
  %v732 = vunpack.c.l.s4 1966171168
  %v733 = vunpack.c.0.s8 %v732
  %v734 = vlaneseq
  %v735 = vshrl.u32 %v734, 7
  %v736 = vsub.s32 %v733, %v735
  %v737 = vrot.slane %v730, %v736
  %v739 = vunpack.c.l.s4 1966171168
  %v740 = vunpack.c.0.s8 %v739
  %v741 = vlaneseq
  %v742 = vshrl.u32 %v741, 7
  %v743 = vsub.s32 %v740, %v742
  %v744 = vrot.slane %v737, %v743
  %v746 = vlaneseq
  %vm747 = vcmp.ge.s32.totalorder %v746, 0
  %vm748 = vcmp.lt.s32.totalorder %v746, 154
  %vm749 = vmand %vm747, %vm748
  %750 = vst.msk [vmem:[%s9] ss:$8 sm:$0x3] %vm749, %v744
  %751 = vst.msk [vmem:[%s9] ss:$8 sm:$0x0] %vm749, %v744
  %v752 = vmul.f32 %v709, %v709
  %v753 = vmul.f32 %v710, %v710
  %v754 = vrot.slane %v752, 4
  %v755 = vadd.f32 %v752, %v754
  %v756 = vrot.slane %v755, 2
  %v757 = vadd.f32 %v755, %v756
  %v758 = vrot.slane %v757, 1
  %v759 = vadd.f32 %v757, %v758
  %v760 = vsel %vm720, %v753, 0.0
  %v761 = vrot.slane %v760, 4
  %v762 = vadd.f32 %v760, %v761
  %v763 = vrot.slane %v762, 2
  %v764 = vadd.f32 %v762, %v763
  %v765 = vrot.slane %v764, 1
  %v766 = vadd.f32 %v764, %v765
  %v769 = vcombine.low %v759, %v766
  %v771 = vunpack.c.l.s4 1966171168
  %v772 = vunpack.c.0.s8 %v771
  %v773 = vlaneseq
  %v774 = vshrl.u32 %v773, 7
  %v775 = vsub.s32 %v772, %v774
  %v776 = vrot.slane %v769, %v775
  %v778 = vunpack.c.l.s4 1966171168
  %v779 = vunpack.c.0.s8 %v778
  %v780 = vlaneseq
  %v781 = vshrl.u32 %v780, 7
  %v782 = vsub.s32 %v779, %v781
  %v783 = vrot.slane %v776, %v782
  %s785 = scalar_lea.vmem %s9, 1
  %786 = vst.msk [vmem:[%s785] ss:$8 sm:$0x3] %vm749, %v783
  %787 = vst.msk [vmem:[%s785] ss:$8 sm:$0x0] %vm749, %v783
  %vm788 = vcmask 654336
  %v789 = vsel %vm788, %v711, 0.0
  %v790 = vrot.slane %v789, 4
  %v791 = vadd.f32 %v789, %v790
  %v792 = vrot.slane %v791, 2
  %v793 = vadd.f32 %v791, %v792
  %v794 = vrot.slane %v793, 1
  %v795 = vadd.f32 %v793, %v794
  %vm796 = vcmask 647168
  %797 = vst.msk [vmem:[%s9 + $0x2] sm:$0x1] %vm796, %v795
  %v798 = vmul.f32 %v711, %v711
  %v799 = vsel %vm788, %v798, 0.0
  %v800 = vrot.slane %v799, 4
  %v801 = vadd.f32 %v799, %v800
  %v802 = vrot.slane %v801, 2
  %v803 = vadd.f32 %v801, %v802
  %v804 = vrot.slane %v803, 1
  %v805 = vadd.f32 %v803, %v804
  %806 = vst.msk [vmem:[%s9 + $0x3] sm:$0x1] %vm796, %v805
  // Predicated region
  $region38: #{transfer_model_forward.2} parent=0 // pred_check
    _
  $region39: #{transfer_model_forward.2} parent=0 // pred_check_branch
    %808 = sbr.rel (0) target = $region41
  $region40: #{transfer_model_forward.2} parent=0 // pred_region
    _
  $region41: #{transfer_model_forward.2} parent=0 // pred_fallthru
    _
  // Predicated region
  $region42: #{transfer_model_forward.2} parent=0 // pred_check
    _
  $region43: #{transfer_model_forward.2} parent=0 // pred_check_branch
    %810 = sbr.rel (0) target = $region45
  $region44: #{transfer_model_forward.2} parent=0 // pred_region
    _
  $region45: #{transfer_model_forward.2} parent=0 // pred_fallthru
    _

// kernel: transfer_model_forward.3
$region0: #{transfer_model_forward.3}
  #allocation0 [shape = 'u32[]', space=smem, size = 0x4, offset = 0x4, fixed_abs, tag = 'smem constant byte address 0x4 - core index']
  #allocation1 [shape = 'u32[144,128]{1,0:T(1,128)}', space=vmem, size = 0x12000, scoped, tag = 'internal scratch']
  %s0 = inlined_call_operand.vmem [shape: f32[8,18], index: 0, kind: input, shape index: {}]
  %s1 = inlined_call_operand.vmem [shape: f32[8,200], index: 1, kind: input, shape index: {}]
  %s2 = inlined_call_operand.vmem [shape: f32[8,800], index: 2, kind: input, shape index: {}]
  %s3 = inlined_call_operand.vmem [shape: f32[8,256], index: 3, kind: input, shape index: {}]
  %s4 = inlined_call_operand.vmem [shape: f32[57,256], index: 4, kind: input, shape index: {}]
  %s5 = inlined_call_operand.vmem [shape: f32[18,240], index: 5, kind: input, shape index: {}]
  %s6 = inlined_call_operand.vmem [shape: f32[240,60], index: 6, kind: input, shape index: {}]
  %s7 = inlined_call_operand.vmem [shape: f32[10,20], index: 7, kind: input, shape index: {}]
  %s8 = inlined_call_operand.vmem [shape: f32[60,154], index: 8, kind: input, shape index: {}]
  %s9 = inlined_call_operand.vmem [shape: f32[17,154], index: 9, kind: input, shape index: {}]
  %s10 = inlined_call_operand.vmem [shape: f32[20,154], index: 10, kind: input, shape index: {}]
  %s11 = inlined_call_operand.vmem [shape: f32[154,256], index: 11, kind: input, shape index: {}]
  %s12 = inlined_call_operand.vmem [shape: f32[17,80], index: 12, kind: input, shape index: {}]
  %s13 = inlined_call_operand.vmem [shape: f32[80,24], index: 13, kind: input, shape index: {}]
  %s14 = inlined_call_operand.vmem [shape: f32[4,100,100], index: 14, kind: input, shape index: {}]
  %s15 = inlined_call_operand.vmem [shape: f32[4,100,50], index: 15, kind: input, shape index: {}]
  %s16 = inlined_call_operand.vmem [shape: f32[4,50,10], index: 16, kind: input, shape index: {}]
  %s17 = inlined_call_operand.vmem [shape: f32[8,4], index: 17, kind: output, shape index: {}]
  %s18 = sld [smem:[#allocation0]]
  $region78: #{transfer_model_forward.3} parent=0
    _
  %s20 = ssub.s32 1, %s18
  %s21 = scalar_select 0, %s20, %s18
  // Predicated region
  $region2: #{transfer_model_forward.3} parent=0 // pred_check
    _
  $region3: #{transfer_model_forward.3} parent=0 // pred_check_branch
    %23 = sbr.rel (0) target = $region5
  $region4: #{transfer_model_forward.3} parent=0 // pred_region
    _
  $region5: #{transfer_model_forward.3} parent=0 // pred_fallthru
    _
  // Predicated region
  $region6: #{transfer_model_forward.3} parent=0 // pred_check
    _
  $region7: #{transfer_model_forward.3} parent=0 // pred_check_branch
    %25 = sbr.rel (0) target = $region9
  $region8: #{transfer_model_forward.3} parent=0 // pred_region
    _
  $region9: #{transfer_model_forward.3} parent=0 // pred_fallthru
    _
  // Predicated region
  $region10: #{transfer_model_forward.3} parent=0 // pred_check
    _
  $region11: #{transfer_model_forward.3} parent=0 // pred_check_branch
    %27 = sbr.rel (0) target = $region13
  $region12: #{transfer_model_forward.3} parent=0 // pred_region
    _
  $region13: #{transfer_model_forward.3} parent=0 // pred_fallthru
    _
  // Predicated region
  $region14: #{transfer_model_forward.3} parent=0 // pred_check
    _
  $region15: #{transfer_model_forward.3} parent=0 // pred_check_branch
    %29 = sbr.rel (0) target = $region17
  $region16: #{transfer_model_forward.3} parent=0 // pred_region
    _
  $region17: #{transfer_model_forward.3} parent=0 // pred_fallthru
    _
  // Predicated region
  $region18: #{transfer_model_forward.3} parent=0 // pred_check
    _
  $region19: #{transfer_model_forward.3} parent=0 // pred_check_branch
    %31 = sbr.rel (0) target = $region21
  $region20: #{transfer_model_forward.3} parent=0 // pred_region
    _
  $region21: #{transfer_model_forward.3} parent=0 // pred_fallthru
    _
  // Predicated region
  $region22: #{transfer_model_forward.3} parent=0 // pred_check
    _
  $region23: #{transfer_model_forward.3} parent=0 // pred_check_branch
    %33 = sbr.rel (0) target = $region25
  $region24: #{transfer_model_forward.3} parent=0 // pred_region
    _
  $region25: #{transfer_model_forward.3} parent=0 // pred_fallthru
    _
  // Predicated region
  $region26: #{transfer_model_forward.3} parent=0 // pred_check
    _
  $region27: #{transfer_model_forward.3} parent=0 // pred_check_branch
    %35 = sbr.rel (0) target = $region29
  $region28: #{transfer_model_forward.3} parent=0 // pred_region
    _
  $region29: #{transfer_model_forward.3} parent=0 // pred_fallthru
    _
  // Predicated region
  $region30: #{transfer_model_forward.3} parent=0 // pred_check
    _
  $region31: #{transfer_model_forward.3} parent=0 // pred_check_branch
    %37 = sbr.rel (0) target = $region33
  $region32: #{transfer_model_forward.3} parent=0 // pred_region
    _
  $region33: #{transfer_model_forward.3} parent=0 // pred_fallthru
    _
  // Predicated region
  $region34: #{transfer_model_forward.3} parent=0 // pred_check
    _
  $region35: #{transfer_model_forward.3} parent=0 // pred_check_branch
    %39 = sbr.rel (0) target = $region37
  $region36: #{transfer_model_forward.3} parent=0 // pred_region
    _
  $region37: #{transfer_model_forward.3} parent=0 // pred_fallthru
    _
  // Predicated region
  $region38: #{transfer_model_forward.3} parent=0 // pred_check
    _
  $region39: #{transfer_model_forward.3} parent=0 // pred_check_branch
    %41 = sbr.rel (0) target = $region41
  $region40: #{transfer_model_forward.3} parent=0 // pred_region
    _
  $region41: #{transfer_model_forward.3} parent=0 // pred_fallthru
    _
  // Predicated region
  $region42: #{transfer_model_forward.3} parent=0 // pred_check
    _
  $region43: #{transfer_model_forward.3} parent=0 // pred_check_branch
    %43 = sbr.rel (0) target = $region45
  $region44: #{transfer_model_forward.3} parent=0 // pred_region
    _
  $region45: #{transfer_model_forward.3} parent=0 // pred_fallthru
    _
  // Predicated region
  $region46: #{transfer_model_forward.3} parent=0 // pred_check
    _
  $region47: #{transfer_model_forward.3} parent=0 // pred_check_branch
    %45 = sbr.rel (0) target = $region49
  $region48: #{transfer_model_forward.3} parent=0 // pred_region
    _
  $region49: #{transfer_model_forward.3} parent=0 // pred_fallthru
    _
  // Predicated region
  $region50: #{transfer_model_forward.3} parent=0 // pred_check
    _
  $region51: #{transfer_model_forward.3} parent=0 // pred_check_branch
    %47 = sbr.rel (0) target = $region53
  $region52: #{transfer_model_forward.3} parent=0 // pred_region
    _
  $region53: #{transfer_model_forward.3} parent=0 // pred_fallthru
    _
  // Predicated region
  $region54: #{transfer_model_forward.3} parent=0 // pred_check
    _
  $region55: #{transfer_model_forward.3} parent=0 // pred_check_branch
    %49 = sbr.rel (0) target = $region57
  $region56: #{transfer_model_forward.3} parent=0 // pred_region
    _
  $region57: #{transfer_model_forward.3} parent=0 // pred_fallthru
    _
  // Predicated region
  $region58: #{transfer_model_forward.3} parent=0 // pred_check
    _
  $region59: #{transfer_model_forward.3} parent=0 // pred_check_branch
    %51 = sbr.rel (0) target = $region61
  $region60: #{transfer_model_forward.3} parent=0 // pred_region
    _
  $region61: #{transfer_model_forward.3} parent=0 // pred_fallthru
    _
  // Predicated region
  $region62: #{transfer_model_forward.3} parent=0 // pred_check
    _
  $region63: #{transfer_model_forward.3} parent=0 // pred_check_branch
    %53 = sbr.rel (0) target = $region65
  $region64: #{transfer_model_forward.3} parent=0 // pred_region
    _
  $region65: #{transfer_model_forward.3} parent=0 // pred_fallthru
    _
  // Predicated region
  $region66: #{transfer_model_forward.3} parent=0 // pred_check
    _
  $region67: #{transfer_model_forward.3} parent=0 // pred_check_branch
    %55 = sbr.rel (0) target = $region69
  $region68: #{transfer_model_forward.3} parent=0 // pred_region
    _
  $region69: #{transfer_model_forward.3} parent=0 // pred_fallthru
    _
  %v56 = vld [vmem:[%s0] sm:$0xff]
  %v57 = vld [vmem:[%s5] sm:$0xff]
  %v58 = vld [vmem:[%s5 + $0x8] sm:$0xff]
  %v59 = vld [vmem:[%s5 + $0x10] sm:$0xff]
  %v60 = vld [vmem:[%s5 + $0x18] sm:$0xff]
  %v61 = vld [vmem:[%s5 + $0x20] sm:$0x3]
  %v62 = vld [vmem:[%s5 + $0x28] sm:$0x3]
  %v63 = vld [vmem:[%s4] ss:$8 sm:$0x3]
  %v65 = vlaneseq
  %v66 = vshrl.u32 %v65, 7
  %v67 = vsub.s32 0, %v66
  %v68 = vrot.slane %v63, %v67
  %v69 = vlaneseq
  %v70 = vshrl.u32 %v69, 7
  %v71 = vsub.s32 1, %v70
  %v72 = vrot.slane %v63, %v71
  %vm75 = vcmask 146432
  %v77 = vsel %vm75, %v56, 0
  %vm79 = vcmask 1041408
  %v81 = vsel %vm79, %v61, 0
  %v84 = vsel %vm79, %v62, 0
  %86 = vmatprep.subr.mxu0 0.0
  %87 = vmatpush1.msra.mxu0 0.0
  %88 = vmatprep.subr.mxu0 0.0
  %89 = vmatpush1.msra.mxu0 0.0
  %90 = vmatprep.subr.mxu0 0.0
  %91 = vmatpush1.msra.mxu0 0.0
  %92 = vmatprep.subr.mxu0 0.0
  %93 = vmatpush1.msra.mxu0 0.0
  %94 = vmatprep.subr.mxu0 0.0
  %95 = vmatpush1.msra.mxu0 0.0
  %96 = vmatprep.subr.mxu0 0.0
  %97 = vmatpush1.msra.mxu0 0.0
  %98 = vmatprep.subr.mxu0 0.0
  %99 = vmatpush1.msra.mxu0 0.0
  %100 = vmatprep.subr.mxu0 0.0
  %101 = vmatpush1.msra.mxu0 0.0
  %102 = vmatprep.subr.mxu0 0.0
  %103 = vmatpush1.msra.mxu0 0.0
  %104 = vmatprep.subr.mxu0 0.0
  %105 = vmatpush1.msra.mxu0 0.0
  %106 = vmatprep.subr.mxu0 0.0
  %107 = vmatpush1.msra.mxu0 0.0
  %108 = vmatprep.subr.mxu0 0.0
  %109 = vmatpush1.msra.mxu0 0.0
  %110 = vmatprep.subr.mxu0 0.0
  %111 = vmatpush1.msra.mxu0 0.0
  %112 = vmatprep.subr.mxu0 %v84
  %113 = vmatpush1.msra.mxu0 %v81
  %114 = vmatprep.subr.mxu0 %v60
  %115 = vmatpush1.msra.mxu0 %v59
  %116 = vmatprep.subr.mxu0 %v58
  %117 = vmatpush1.msra.mxu0 %v57
  %118 = vmatprep.subr.mxu0 0.0
  %119 = vmatpush2.msra.mxu0 0.0
  %120 = vmatprep.subr.mxu0 0.0
  %121 = vmatpush2.msra.mxu0 0.0
  %122 = vmatprep.subr.mxu0 0.0
  %123 = vmatpush2.msra.mxu0 0.0
  %124 = vmatprep.subr.mxu0 0.0
  %125 = vmatpush2.msra.mxu0 0.0
  %126 = vmatprep.subr.mxu0 0.0
  %127 = vmatpush2.msra.mxu0 0.0
  %128 = vmatprep.subr.mxu0 0.0
  %129 = vmatpush2.msra.mxu0 0.0
  %130 = vmatprep.subr.mxu0 0.0
  %131 = vmatpush2.msra.mxu0 0.0
  %132 = vmatprep.subr.mxu0 0.0
  %133 = vmatpush2.msra.mxu0 0.0
  %134 = vmatprep.subr.mxu0 0.0
  %135 = vmatpush2.msra.mxu0 0.0
  %136 = vmatprep.subr.mxu0 0.0
  %137 = vmatpush2.msra.mxu0 0.0
  %138 = vmatprep.subr.mxu0 0.0
  %139 = vmatpush2.msra.mxu0 0.0
  %140 = vmatprep.subr.mxu0 0.0
  %141 = vmatpush2.msra.mxu0 0.0
  %142 = vmatprep.subr.mxu0 0.0
  %143 = vmatpush2.msra.mxu0 0.0
  %144 = vmatprep.subr.mxu0 0.0
  %145 = vmatpush2.msra.mxu0 0.0
  %146 = vmatprep.subr.mxu0 0.0
  %147 = vmatpush2.msra.mxu0 0.0
  %148 = vmatprep.subr.mxu0 0.0
  %149 = vmatpush2.msra.mxu0 0.0
  %150 = vmatprep.mubr.f32.mxu0 0.0
  %151 = vmatmul.mubr.f32.gmra.mxu0 %v77
  %v152 = vpop.f32.mrf.mxu0
  %v153 = vadd.f32 %v68, %v152
  %v154 = vpop.f32.mrf.mxu0
  %v155 = vadd.f32 %v72, %v154
  %156 = vdwg.mxu0
  %vm157 = vcmp.gt.f32.partialorder %v153, 0.0
  %vm158 = vcmp.gt.f32.partialorder %v155, 0.0
  %v159 = vmul.f32 %v153, 0.01
  %v160 = vmul.f32 %v155, 0.01
  %v161 = vsel %vm157, %v153, %v159
  %v162 = vsel %vm158, %v155, %v160
  %v163 = vld [vmem:[%s6] sm:$0xff]
  %v164 = vld [vmem:[%s6 + $0x8] sm:$0xff]
  %v165 = vld [vmem:[%s6 + $0x10] sm:$0xff]
  %v166 = vld [vmem:[%s6 + $0x18] sm:$0xff]
  %v167 = vld [vmem:[%s6 + $0x20] sm:$0xff]
  %v168 = vld [vmem:[%s6 + $0x28] sm:$0xff]
  %v169 = vld [vmem:[%s6 + $0x30] sm:$0xff]
  %v170 = vld [vmem:[%s6 + $0x38] sm:$0xff]
  %v171 = vld [vmem:[%s6 + $0x40] sm:$0xff]
  %v172 = vld [vmem:[%s6 + $0x48] sm:$0xff]
  %v173 = vld [vmem:[%s6 + $0x50] sm:$0xff]
  %v174 = vld [vmem:[%s6 + $0x58] sm:$0xff]
  %v175 = vld [vmem:[%s6 + $0x60] sm:$0xff]
  %v176 = vld [vmem:[%s6 + $0x68] sm:$0xff]
  %v177 = vld [vmem:[%s6 + $0x70] sm:$0xff]
  %v178 = vld [vmem:[%s6 + $0x78] sm:$0xff]
  %v179 = vld [vmem:[%s6 + $0x80] sm:$0xff]
  %v180 = vld [vmem:[%s6 + $0x88] sm:$0xff]
  %v181 = vld [vmem:[%s6 + $0x90] sm:$0xff]
  %v182 = vld [vmem:[%s6 + $0x98] sm:$0xff]
  %v183 = vld [vmem:[%s6 + $0xa0] sm:$0xff]
  %v184 = vld [vmem:[%s6 + $0xa8] sm:$0xff]
  %v185 = vld [vmem:[%s6 + $0xb0] sm:$0xff]
  %v186 = vld [vmem:[%s6 + $0xb8] sm:$0xff]
  %v187 = vld [vmem:[%s6 + $0xc0] sm:$0xff]
  %v188 = vld [vmem:[%s6 + $0xc8] sm:$0xff]
  %v189 = vld [vmem:[%s6 + $0xd0] sm:$0xff]
  %v190 = vld [vmem:[%s6 + $0xd8] sm:$0xff]
  %v191 = vld [vmem:[%s6 + $0xe0] sm:$0xff]
  %v192 = vld [vmem:[%s6 + $0xe8] sm:$0xff]
  %v193 = vld [vmem:[%s4 + $0x1] ss:$0 sm:$0xff]
  %vm194 = vcmask 916480
  %v196 = vsel %vm194, %v162, 0
  %198 = vmatprep.subr.mxu0 0.0
  %199 = vmatpush1.msra.mxu0 %v178
  %200 = vmatprep.subr.mxu0 0.0
  %201 = vmatpush1.msra.mxu0 %v177
  %202 = vmatprep.subr.mxu0 0.0
  %203 = vmatpush1.msra.mxu0 %v176
  %204 = vmatprep.subr.mxu0 0.0
  %205 = vmatpush1.msra.mxu0 %v175
  %206 = vmatprep.subr.mxu0 0.0
  %207 = vmatpush1.msra.mxu0 %v174
  %208 = vmatprep.subr.mxu0 0.0
  %209 = vmatpush1.msra.mxu0 %v173
  %210 = vmatprep.subr.mxu0 0.0
  %211 = vmatpush1.msra.mxu0 %v172
  %212 = vmatprep.subr.mxu0 0.0
  %213 = vmatpush1.msra.mxu0 %v171
  %214 = vmatprep.subr.mxu0 0.0
  %215 = vmatpush1.msra.mxu0 %v170
  %216 = vmatprep.subr.mxu0 0.0
  %217 = vmatpush1.msra.mxu0 %v169
  %218 = vmatprep.subr.mxu0 0.0
  %219 = vmatpush1.msra.mxu0 %v168
  %220 = vmatprep.subr.mxu0 0.0
  %221 = vmatpush1.msra.mxu0 %v167
  %222 = vmatprep.subr.mxu0 0.0
  %223 = vmatpush1.msra.mxu0 %v166
  %224 = vmatprep.subr.mxu0 0.0
  %225 = vmatpush1.msra.mxu0 %v165
  %226 = vmatprep.subr.mxu0 0.0
  %227 = vmatpush1.msra.mxu0 %v164
  %228 = vmatprep.subr.mxu0 0.0
  %229 = vmatpush1.msra.mxu0 %v163
  %230 = vmatprep.subr.mxu0 0.0
  %231 = vmatpush2.msra.mxu0 0.0
  %232 = vmatprep.subr.mxu0 0.0
  %233 = vmatpush2.msra.mxu0 0.0
  %234 = vmatprep.subr.mxu0 0.0
  %235 = vmatpush2.msra.mxu0 %v192
  %236 = vmatprep.subr.mxu0 0.0
  %237 = vmatpush2.msra.mxu0 %v191
  %238 = vmatprep.subr.mxu0 0.0
  %239 = vmatpush2.msra.mxu0 %v190
  %240 = vmatprep.subr.mxu0 0.0
  %241 = vmatpush2.msra.mxu0 %v189
  %242 = vmatprep.subr.mxu0 0.0
  %243 = vmatpush2.msra.mxu0 %v188
  %244 = vmatprep.subr.mxu0 0.0
  %245 = vmatpush2.msra.mxu0 %v187
  %246 = vmatprep.subr.mxu0 0.0
  %247 = vmatpush2.msra.mxu0 %v186
  %248 = vmatprep.subr.mxu0 0.0
  %249 = vmatpush2.msra.mxu0 %v185
  %250 = vmatprep.subr.mxu0 0.0
  %251 = vmatpush2.msra.mxu0 %v184
  %252 = vmatprep.subr.mxu0 0.0
  %253 = vmatpush2.msra.mxu0 %v183
  %254 = vmatprep.subr.mxu0 0.0
  %255 = vmatpush2.msra.mxu0 %v182
  %256 = vmatprep.subr.mxu0 0.0
  %257 = vmatpush2.msra.mxu0 %v181
  %258 = vmatprep.subr.mxu0 0.0
  %259 = vmatpush2.msra.mxu0 %v180
  %260 = vmatprep.subr.mxu0 0.0
  %261 = vmatpush2.msra.mxu0 %v179
  %262 = vmatprep.mubr.f32.mxu0 %v196
  %263 = vmatmul.mubr.f32.gmra.mxu0 %v161
  %v264 = vpop.f32.mrf.mxu0
  %v265 = vadd.f32 %v193, %v264
  %v266 = vpop.f32.mrf.mxu0
  %267 = vdwg.mxu0
  %v268 = vld [vmem:[%s4 + $0x2] ss:$0 sm:$0xff]
  %269 = vset.pattern.permute.xlu0 17
  %270 = vperm.xlu0 %269, %v56
  %v271 = vpop.permute.xlu0 %270
  %v273 = vmul.f32 %v271, %v268
  %v274 = vld [vmem:[%s4 + $0x3] ss:$0 sm:$0xff]
  %v275 = vadd.f32 %v273, %v274
  %vm276 = vcmp.gt.f32.partialorder %v275, 0.0
  %v277 = vmul.f32 %v275, 0.01
  %v278 = vsel %vm276, %v275, %v277
  %v279 = vld [vmem:[%s7] sm:$0xff]
  %v280 = vld [vmem:[%s7 + $0x8] sm:$0x3]
  %v281 = vld [vmem:[%s4 + $0x4] ss:$0 sm:$0xff]
  %vm282 = vcmask 80896
  %v284 = vsel %vm282, %v278, 0
  %v287 = vsel %vm79, %v280, 0
  %289 = vmatprep.subr.mxu0 0.0
  %290 = vmatpush1.msra.mxu0 0.0
  %291 = vmatprep.subr.mxu0 0.0
  %292 = vmatpush1.msra.mxu0 0.0
  %293 = vmatprep.subr.mxu0 0.0
  %294 = vmatpush1.msra.mxu0 0.0
  %295 = vmatprep.subr.mxu0 0.0
  %296 = vmatpush1.msra.mxu0 0.0
  %297 = vmatprep.subr.mxu0 0.0
  %298 = vmatpush1.msra.mxu0 0.0
  %299 = vmatprep.subr.mxu0 0.0
  %300 = vmatpush1.msra.mxu0 0.0
  %301 = vmatprep.subr.mxu0 0.0
  %302 = vmatpush1.msra.mxu0 0.0
  %303 = vmatprep.subr.mxu0 0.0
  %304 = vmatpush1.msra.mxu0 0.0
  %305 = vmatprep.subr.mxu0 0.0
  %306 = vmatpush1.msra.mxu0 0.0
  %307 = vmatprep.subr.mxu0 0.0
  %308 = vmatpush1.msra.mxu0 0.0
  %309 = vmatprep.subr.mxu0 0.0
  %310 = vmatpush1.msra.mxu0 0.0
  %311 = vmatprep.subr.mxu0 0.0
  %312 = vmatpush1.msra.mxu0 0.0
  %313 = vmatprep.subr.mxu0 0.0
  %314 = vmatpush1.msra.mxu0 0.0
  %315 = vmatprep.subr.mxu0 0.0
  %316 = vmatpush1.msra.mxu0 0.0
  %317 = vmatprep.subr.mxu0 0.0
  %318 = vmatpush1.msra.mxu0 %v287
  %319 = vmatprep.subr.mxu0 0.0
  %320 = vmatpush1.msra.mxu0 %v279
  %321 = vmatprep.subr.mxu0 0.0
  %322 = vmatpush2.msra.mxu0 0.0
  %323 = vmatprep.subr.mxu0 0.0
  %324 = vmatpush2.msra.mxu0 0.0
  %325 = vmatprep.subr.mxu0 0.0
  %326 = vmatpush2.msra.mxu0 0.0
  %327 = vmatprep.subr.mxu0 0.0
  %328 = vmatpush2.msra.mxu0 0.0
  %329 = vmatprep.subr.mxu0 0.0
  %330 = vmatpush2.msra.mxu0 0.0
  %331 = vmatprep.subr.mxu0 0.0
  %332 = vmatpush2.msra.mxu0 0.0
  %333 = vmatprep.subr.mxu0 0.0
  %334 = vmatpush2.msra.mxu0 0.0
  %335 = vmatprep.subr.mxu0 0.0
  %336 = vmatpush2.msra.mxu0 0.0
  %337 = vmatprep.subr.mxu0 0.0
  %338 = vmatpush2.msra.mxu0 0.0
  %339 = vmatprep.subr.mxu0 0.0
  %340 = vmatpush2.msra.mxu0 0.0
  %341 = vmatprep.subr.mxu0 0.0
  %342 = vmatpush2.msra.mxu0 0.0
  %343 = vmatprep.subr.mxu0 0.0
  %344 = vmatpush2.msra.mxu0 0.0
  %345 = vmatprep.subr.mxu0 0.0
  %346 = vmatpush2.msra.mxu0 0.0
  %347 = vmatprep.subr.mxu0 0.0
  %348 = vmatpush2.msra.mxu0 0.0
  %349 = vmatprep.subr.mxu0 0.0
  %350 = vmatpush2.msra.mxu0 0.0
  %351 = vmatprep.subr.mxu0 0.0
  %352 = vmatpush2.msra.mxu0 0.0
  %353 = vmatprep.mubr.f32.mxu0 0.0
  %354 = vmatmul.mubr.f32.gmra.mxu0 %v284
  %v355 = vpop.f32.mrf.mxu0
  %v356 = vadd.f32 %v281, %v355
  %v357 = vpop.f32.mrf.mxu0
  %358 = vdwg.mxu0
  %v359 = vld [vmem:[%s8] sm:$0xff]
  %v360 = vld [vmem:[%s8 + $0x8] sm:$0xff]
  %v361 = vld [vmem:[%s8 + $0x10] sm:$0xff]
  %v362 = vld [vmem:[%s8 + $0x18] sm:$0xff]
  %v363 = vld [vmem:[%s8 + $0x20] sm:$0xff]
  %v364 = vld [vmem:[%s8 + $0x28] sm:$0xff]
  %v365 = vld [vmem:[%s8 + $0x30] sm:$0xff]
  %v366 = vld [vmem:[%s8 + $0x38] sm:$0xff]
  %v367 = vld [vmem:[%s8 + $0x40] sm:$0xff]
  %v368 = vld [vmem:[%s8 + $0x48] sm:$0xff]
  %v369 = vld [vmem:[%s8 + $0x50] sm:$0xff]
  %v370 = vld [vmem:[%s8 + $0x58] sm:$0xff]
  %v371 = vld [vmem:[%s8 + $0x60] sm:$0xff]
  %v372 = vld [vmem:[%s8 + $0x68] sm:$0xff]
  %v373 = vld [vmem:[%s8 + $0x70] sm:$0xf]
  %v374 = vld [vmem:[%s8 + $0x78] sm:$0xf]
  %v375 = vld [vmem:[%s9] sm:$0xff]
  %v376 = vld [vmem:[%s9 + $0x8] sm:$0xff]
  %v377 = vld [vmem:[%s9 + $0x10] sm:$0xff]
  %v378 = vld [vmem:[%s9 + $0x18] sm:$0xff]
  %v379 = vld [vmem:[%s9 + $0x20] sm:$0x1]
  %v380 = vld [vmem:[%s9 + $0x28] sm:$0x1]
  %vm381 = vcmask 138240
  %v382 = vsel %vm381, %v56, 0
  %vm384 = vcmask 1040384
  %v386 = vsel %vm384, %v379, 0
  %v389 = vsel %vm384, %v380, 0
  %391 = vmatprep.subr.mxu0 0.0
  %392 = vmatpush1.msra.mxu0 0.0
  %393 = vmatprep.subr.mxu0 0.0
  %394 = vmatpush1.msra.mxu0 0.0
  %395 = vmatprep.subr.mxu0 0.0
  %396 = vmatpush1.msra.mxu0 0.0
  %397 = vmatprep.subr.mxu0 0.0
  %398 = vmatpush1.msra.mxu0 0.0
  %399 = vmatprep.subr.mxu0 0.0
  %400 = vmatpush1.msra.mxu0 0.0
  %401 = vmatprep.subr.mxu0 0.0
  %402 = vmatpush1.msra.mxu0 0.0
  %403 = vmatprep.subr.mxu0 0.0
  %404 = vmatpush1.msra.mxu0 0.0
  %405 = vmatprep.subr.mxu0 0.0
  %406 = vmatpush1.msra.mxu0 0.0
  %407 = vmatprep.subr.mxu0 0.0
  %408 = vmatpush1.msra.mxu0 0.0
  %409 = vmatprep.subr.mxu0 0.0
  %410 = vmatpush1.msra.mxu0 0.0
  %411 = vmatprep.subr.mxu0 0.0
  %412 = vmatpush1.msra.mxu0 0.0
  %413 = vmatprep.subr.mxu0 0.0
  %414 = vmatpush1.msra.mxu0 0.0
  %415 = vmatprep.subr.mxu0 0.0
  %416 = vmatpush1.msra.mxu0 0.0
  %417 = vmatprep.subr.mxu0 %v389
  %418 = vmatpush1.msra.mxu0 %v386
  %419 = vmatprep.subr.mxu0 %v378
  %420 = vmatpush1.msra.mxu0 %v377
  %421 = vmatprep.subr.mxu0 %v376
  %422 = vmatpush1.msra.mxu0 %v375
  %423 = vmatprep.subr.mxu0 0.0
  %424 = vmatpush2.msra.mxu0 0.0
  %425 = vmatprep.subr.mxu0 0.0
  %426 = vmatpush2.msra.mxu0 0.0
  %427 = vmatprep.subr.mxu0 0.0
  %428 = vmatpush2.msra.mxu0 0.0
  %429 = vmatprep.subr.mxu0 0.0
  %430 = vmatpush2.msra.mxu0 0.0
  %431 = vmatprep.subr.mxu0 0.0
  %432 = vmatpush2.msra.mxu0 0.0
  %433 = vmatprep.subr.mxu0 0.0
  %434 = vmatpush2.msra.mxu0 0.0
  %435 = vmatprep.subr.mxu0 0.0
  %436 = vmatpush2.msra.mxu0 0.0
  %437 = vmatprep.subr.mxu0 0.0
  %438 = vmatpush2.msra.mxu0 0.0
  %439 = vmatprep.subr.mxu0 0.0
  %440 = vmatpush2.msra.mxu0 0.0
  %441 = vmatprep.subr.mxu0 0.0
  %442 = vmatpush2.msra.mxu0 0.0
  %443 = vmatprep.subr.mxu0 0.0
  %444 = vmatpush2.msra.mxu0 0.0
  %445 = vmatprep.subr.mxu0 0.0
  %446 = vmatpush2.msra.mxu0 0.0
  %447 = vmatprep.subr.mxu0 0.0
  %448 = vmatpush2.msra.mxu0 0.0
  %449 = vmatprep.subr.mxu0 0.0
  %450 = vmatpush2.msra.mxu0 0.0
  %451 = vmatprep.subr.mxu0 0.0
  %452 = vmatpush2.msra.mxu0 0.0
  %453 = vmatprep.subr.mxu0 0.0
  %454 = vmatpush2.msra.mxu0 0.0
  %455 = vmatprep.mubr.f32.mxu0 0.0
  %456 = vmatmul.mubr.f32.gmra.mxu0 %v382
  %v457 = vpop.f32.mrf.mxu0
  %v458 = vadd.f32 0.0, %v457
  %v459 = vpop.f32.mrf.mxu0
  %v460 = vadd.f32 0.0, %v459
  %461 = vdwg.mxu0
  %vm462 = vcmask 490496
  %v464 = vsel %vm462, %v265, 0
  %vm466 = vcmask 1043456
  %v468 = vsel %vm466, %v373, 0
  %v471 = vsel %vm466, %v374, 0
  %473 = vmatprep.subr.mxu0 0.0
  %474 = vmatpush1.msra.mxu0 0.0
  %475 = vmatprep.subr.mxu0 0.0
  %476 = vmatpush1.msra.mxu0 0.0
  %477 = vmatprep.subr.mxu0 0.0
  %478 = vmatpush1.msra.mxu0 0.0
  %479 = vmatprep.subr.mxu0 0.0
  %480 = vmatpush1.msra.mxu0 0.0
  %481 = vmatprep.subr.mxu0 0.0
  %482 = vmatpush1.msra.mxu0 0.0
  %483 = vmatprep.subr.mxu0 0.0
  %484 = vmatpush1.msra.mxu0 0.0
  %485 = vmatprep.subr.mxu0 0.0
  %486 = vmatpush1.msra.mxu0 0.0
  %487 = vmatprep.subr.mxu0 0.0
  %488 = vmatpush1.msra.mxu0 0.0
  %489 = vmatprep.subr.mxu0 %v471
  %490 = vmatpush1.msra.mxu0 %v468
  %491 = vmatprep.subr.mxu0 %v372
  %492 = vmatpush1.msra.mxu0 %v371
  %493 = vmatprep.subr.mxu0 %v370
  %494 = vmatpush1.msra.mxu0 %v369
  %495 = vmatprep.subr.mxu0 %v368
  %496 = vmatpush1.msra.mxu0 %v367
  %497 = vmatprep.subr.mxu0 %v366
  %498 = vmatpush1.msra.mxu0 %v365
  %499 = vmatprep.subr.mxu0 %v364
  %500 = vmatpush1.msra.mxu0 %v363
  %501 = vmatprep.subr.mxu0 %v362
  %502 = vmatpush1.msra.mxu0 %v361
  %503 = vmatprep.subr.mxu0 %v360
  %504 = vmatpush1.msra.mxu0 %v359
  %505 = vmatprep.subr.mxu0 0.0
  %506 = vmatpush2.msra.mxu0 0.0
  %507 = vmatprep.subr.mxu0 0.0
  %508 = vmatpush2.msra.mxu0 0.0
  %509 = vmatprep.subr.mxu0 0.0
  %510 = vmatpush2.msra.mxu0 0.0
  %511 = vmatprep.subr.mxu0 0.0
  %512 = vmatpush2.msra.mxu0 0.0
  %513 = vmatprep.subr.mxu0 0.0
  %514 = vmatpush2.msra.mxu0 0.0
  %515 = vmatprep.subr.mxu0 0.0
  %516 = vmatpush2.msra.mxu0 0.0
  %517 = vmatprep.subr.mxu0 0.0
  %518 = vmatpush2.msra.mxu0 0.0
  %519 = vmatprep.subr.mxu0 0.0
  %520 = vmatpush2.msra.mxu0 0.0
  %521 = vmatprep.subr.mxu0 0.0
  %522 = vmatpush2.msra.mxu0 0.0
  %523 = vmatprep.subr.mxu0 0.0
  %524 = vmatpush2.msra.mxu0 0.0
  %525 = vmatprep.subr.mxu0 0.0
  %526 = vmatpush2.msra.mxu0 0.0
  %527 = vmatprep.subr.mxu0 0.0
  %528 = vmatpush2.msra.mxu0 0.0
  %529 = vmatprep.subr.mxu0 0.0
  %530 = vmatpush2.msra.mxu0 0.0
  %531 = vmatprep.subr.mxu0 0.0
  %532 = vmatpush2.msra.mxu0 0.0
  %533 = vmatprep.subr.mxu0 0.0
  %534 = vmatpush2.msra.mxu0 0.0
  %535 = vmatprep.subr.mxu0 0.0
  %536 = vmatpush2.msra.mxu0 0.0
  %537 = vmatprep.mubr.f32.mxu0 0.0
  %538 = vmatmul.mubr.f32.gmra.mxu0 %v464
  %v539 = vpop.f32.mrf.mxu0
  %v540 = vadd.f32 %v458, %v539
  %v541 = vpop.f32.mrf.mxu0
  %v542 = vadd.f32 %v460, %v541
  %543 = vdwg.mxu0
  %v544 = vld [vmem:[%s10] sm:$0xff]
  %v545 = vld [vmem:[%s10 + $0x8] sm:$0xff]
  %v546 = vld [vmem:[%s10 + $0x10] sm:$0xff]
  %v547 = vld [vmem:[%s10 + $0x18] sm:$0xff]
  %v548 = vld [vmem:[%s10 + $0x20] sm:$0xf]
  %v549 = vld [vmem:[%s10 + $0x28] sm:$0xf]
  %vm550 = vcmask 162816
  %v552 = vsel %vm550, %v356, 0
  %v555 = vsel %vm466, %v548, 0
  %v558 = vsel %vm466, %v549, 0
  %560 = vmatprep.subr.mxu0 0.0
  %561 = vmatpush1.msra.mxu0 0.0
  %562 = vmatprep.subr.mxu0 0.0
  %563 = vmatpush1.msra.mxu0 0.0
  %564 = vmatprep.subr.mxu0 0.0
  %565 = vmatpush1.msra.mxu0 0.0
  %566 = vmatprep.subr.mxu0 0.0
  %567 = vmatpush1.msra.mxu0 0.0
  %568 = vmatprep.subr.mxu0 0.0
  %569 = vmatpush1.msra.mxu0 0.0
  %570 = vmatprep.subr.mxu0 0.0
  %571 = vmatpush1.msra.mxu0 0.0
  %572 = vmatprep.subr.mxu0 0.0
  %573 = vmatpush1.msra.mxu0 0.0
  %574 = vmatprep.subr.mxu0 0.0
  %575 = vmatpush1.msra.mxu0 0.0
  %576 = vmatprep.subr.mxu0 0.0
  %577 = vmatpush1.msra.mxu0 0.0
  %578 = vmatprep.subr.mxu0 0.0
  %579 = vmatpush1.msra.mxu0 0.0
  %580 = vmatprep.subr.mxu0 0.0
  %581 = vmatpush1.msra.mxu0 0.0
  %582 = vmatprep.subr.mxu0 0.0
  %583 = vmatpush1.msra.mxu0 0.0
  %584 = vmatprep.subr.mxu0 0.0
  %585 = vmatpush1.msra.mxu0 0.0
  %586 = vmatprep.subr.mxu0 %v558
  %587 = vmatpush1.msra.mxu0 %v555
  %588 = vmatprep.subr.mxu0 %v547
  %589 = vmatpush1.msra.mxu0 %v546
  %590 = vmatprep.subr.mxu0 %v545
  %591 = vmatpush1.msra.mxu0 %v544
  %592 = vmatprep.subr.mxu0 0.0
  %593 = vmatpush2.msra.mxu0 0.0
  %594 = vmatprep.subr.mxu0 0.0
  %595 = vmatpush2.msra.mxu0 0.0
  %596 = vmatprep.subr.mxu0 0.0
  %597 = vmatpush2.msra.mxu0 0.0
  %598 = vmatprep.subr.mxu0 0.0
  %599 = vmatpush2.msra.mxu0 0.0
  %600 = vmatprep.subr.mxu0 0.0
  %601 = vmatpush2.msra.mxu0 0.0
  %602 = vmatprep.subr.mxu0 0.0
  %603 = vmatpush2.msra.mxu0 0.0
  %604 = vmatprep.subr.mxu0 0.0
  %605 = vmatpush2.msra.mxu0 0.0
  %606 = vmatprep.subr.mxu0 0.0
  %607 = vmatpush2.msra.mxu0 0.0
  %608 = vmatprep.subr.mxu0 0.0
  %609 = vmatpush2.msra.mxu0 0.0
  %610 = vmatprep.subr.mxu0 0.0
  %611 = vmatpush2.msra.mxu0 0.0
  %612 = vmatprep.subr.mxu0 0.0
  %613 = vmatpush2.msra.mxu0 0.0
  %614 = vmatprep.subr.mxu0 0.0
  %615 = vmatpush2.msra.mxu0 0.0
  %616 = vmatprep.subr.mxu0 0.0
  %617 = vmatpush2.msra.mxu0 0.0
  %618 = vmatprep.subr.mxu0 0.0
  %619 = vmatpush2.msra.mxu0 0.0
  %620 = vmatprep.subr.mxu0 0.0
  %621 = vmatpush2.msra.mxu0 0.0
  %622 = vmatprep.subr.mxu0 0.0
  %623 = vmatpush2.msra.mxu0 0.0
  %624 = vmatprep.mubr.f32.mxu0 0.0
  %625 = vmatmul.mubr.f32.gmra.mxu0 %v552
  %v626 = vpop.f32.mrf.mxu0
  %v627 = vadd.f32 0.0, %v626
  %v628 = vpop.f32.mrf.mxu0
  %v629 = vadd.f32 0.0, %v628
  %630 = vdwg.mxu0
  %v631 = vadd.f32 %v540, %v627
  %v632 = vadd.f32 %v542, %v629
  %s633 = scalar_lea.vmem %s4, 5
  %v634 = vld [vmem:[%s633] ss:$8 sm:$0x3]
  %v636 = vlaneseq
  %v637 = vshrl.u32 %v636, 7
  %v638 = vsub.s32 0, %v637
  %v639 = vrot.slane %v634, %v638
  %v640 = vlaneseq
  %v641 = vshrl.u32 %v640, 7
  %v642 = vsub.s32 1, %v641
  %v643 = vrot.slane %v634, %v642
  %v646 = vadd.f32 %v631, %v639
  %v647 = vadd.f32 %v632, %v643
  %v648 = vld [vmem:[%s12] sm:$0xff]
  %v649 = vld [vmem:[%s12 + $0x8] sm:$0xff]
  %v650 = vld [vmem:[%s12 + $0x10] sm:$0x1]
  %v651 = vld [vmem:[%s4 + $0x11] ss:$0 sm:$0xff]
  %v653 = vsel %vm384, %v650, 0
  %655 = vmatprep.subr.mxu0 0.0
  %656 = vmatpush1.msra.mxu0 0.0
  %657 = vmatprep.subr.mxu0 0.0
  %658 = vmatpush1.msra.mxu0 0.0
  %659 = vmatprep.subr.mxu0 0.0
  %660 = vmatpush1.msra.mxu0 0.0
  %661 = vmatprep.subr.mxu0 0.0
  %662 = vmatpush1.msra.mxu0 0.0
  %663 = vmatprep.subr.mxu0 0.0
  %664 = vmatpush1.msra.mxu0 0.0
  %665 = vmatprep.subr.mxu0 0.0
  %666 = vmatpush1.msra.mxu0 0.0
  %667 = vmatprep.subr.mxu0 0.0
  %668 = vmatpush1.msra.mxu0 0.0
  %669 = vmatprep.subr.mxu0 0.0
  %670 = vmatpush1.msra.mxu0 0.0
  %671 = vmatprep.subr.mxu0 0.0
  %672 = vmatpush1.msra.mxu0 0.0
  %673 = vmatprep.subr.mxu0 0.0
  %674 = vmatpush1.msra.mxu0 0.0
  %675 = vmatprep.subr.mxu0 0.0
  %676 = vmatpush1.msra.mxu0 0.0
  %677 = vmatprep.subr.mxu0 0.0
  %678 = vmatpush1.msra.mxu0 0.0
  %679 = vmatprep.subr.mxu0 0.0
  %680 = vmatpush1.msra.mxu0 0.0
  %681 = vmatprep.subr.mxu0 0.0
  %682 = vmatpush1.msra.mxu0 %v653
  %683 = vmatprep.subr.mxu0 0.0
  %684 = vmatpush1.msra.mxu0 %v649
  %685 = vmatprep.subr.mxu0 0.0
  %686 = vmatpush1.msra.mxu0 %v648
  %687 = vmatprep.subr.mxu0 0.0
  %688 = vmatpush2.msra.mxu0 0.0
  %689 = vmatprep.subr.mxu0 0.0
  %690 = vmatpush2.msra.mxu0 0.0
  %691 = vmatprep.subr.mxu0 0.0
  %692 = vmatpush2.msra.mxu0 0.0
  %693 = vmatprep.subr.mxu0 0.0
  %694 = vmatpush2.msra.mxu0 0.0
  %695 = vmatprep.subr.mxu0 0.0
  %696 = vmatpush2.msra.mxu0 0.0
  %697 = vmatprep.subr.mxu0 0.0
  %698 = vmatpush2.msra.mxu0 0.0
  %699 = vmatprep.subr.mxu0 0.0
  %700 = vmatpush2.msra.mxu0 0.0
  %701 = vmatprep.subr.mxu0 0.0
  %702 = vmatpush2.msra.mxu0 0.0
  %703 = vmatprep.subr.mxu0 0.0
  %704 = vmatpush2.msra.mxu0 0.0
  %705 = vmatprep.subr.mxu0 0.0
  %706 = vmatpush2.msra.mxu0 0.0
  %707 = vmatprep.subr.mxu0 0.0
  %708 = vmatpush2.msra.mxu0 0.0
  %709 = vmatprep.subr.mxu0 0.0
  %710 = vmatpush2.msra.mxu0 0.0
  %711 = vmatprep.subr.mxu0 0.0
  %712 = vmatpush2.msra.mxu0 0.0
  %713 = vmatprep.subr.mxu0 0.0
  %714 = vmatpush2.msra.mxu0 0.0
  %715 = vmatprep.subr.mxu0 0.0
  %716 = vmatpush2.msra.mxu0 0.0
  %717 = vmatprep.subr.mxu0 0.0
  %718 = vmatpush2.msra.mxu0 0.0
  %719 = vmatprep.mubr.f32.mxu0 0.0
  %720 = vmatmul.mubr.f32.gmra.mxu0 %v382
  %v721 = vpop.f32.mrf.mxu0
  %v722 = vadd.f32 %v651, %v721
  %v723 = vpop.f32.mrf.mxu0
  %724 = vdwg.mxu0
  %v725 = vld [vmem:[%s3] ss:$8 sm:$0x3]
  %s726 = scalar_lea.vmem %s3, 1
  %v727 = vld [vmem:[%s726] ss:$8 sm:$0x3]
  %s728 = scalar_lea.vmem %s4, 6
  %v729 = vld [vmem:[%s728] ss:$8 sm:$0x3]
  %s730 = scalar_lea.vmem %s4, 7
  %v731 = vld [vmem:[%s730] ss:$8 sm:$0x3]
  %v733 = vlaneseq
  %v734 = vshrl.u32 %v733, 7
  %v735 = vsub.s32 0, %v734
  %v736 = vrot.slane %v725, %v735
  %v737 = vlaneseq
  %v738 = vshrl.u32 %v737, 7
  %v739 = vsub.s32 1, %v738
  %v740 = vrot.slane %v725, %v739
  %v743 = vsub.f32 %v646, %v736
  %v744 = vsub.f32 %v647, %v740
  %v745 = vadd.f32 %v727, 1e-05
  %v746 = vrsqrt.pop %v745
  %v747 = vmul.f32 %v746, %v729
  %v749 = vlaneseq
  %v750 = vshrl.u32 %v749, 7
  %v751 = vsub.s32 0, %v750
  %v752 = vrot.slane %v747, %v751
  %v753 = vlaneseq
  %v754 = vshrl.u32 %v753, 7
  %v755 = vsub.s32 1, %v754
  %v756 = vrot.slane %v747, %v755
  %v759 = vmul.f32 %v743, %v752
  %v760 = vmul.f32 %v744, %v756
  %v762 = vlaneseq
  %v763 = vshrl.u32 %v762, 7
  %v764 = vsub.s32 0, %v763
  %v765 = vrot.slane %v731, %v764
  %v766 = vlaneseq
  %v767 = vshrl.u32 %v766, 7
  %v768 = vsub.s32 1, %v767
  %v769 = vrot.slane %v731, %v768
  %v772 = vadd.f32 %v759, %v765
  %v773 = vadd.f32 %v760, %v769
  %vm774 = vcmp.gt.f32.partialorder %v772, 0.0
  %vm775 = vcmp.gt.f32.partialorder %v773, 0.0
  %v776 = vmul.f32 %v772, 0.01
  %v777 = vmul.f32 %v773, 0.01
  %v778 = vsel %vm774, %v772, %v776
  %v779 = vsel %vm775, %v773, %v777
  %v780 = vld [vmem:[%s11] sm:$0xff]
  %v781 = vld [vmem:[%s11 + $0x8] sm:$0xff]
  %v782 = vld [vmem:[%s11 + $0x10] sm:$0xff]
  %v783 = vld [vmem:[%s11 + $0x18] sm:$0xff]
  %v784 = vld [vmem:[%s11 + $0x20] sm:$0xff]
  %v785 = vld [vmem:[%s11 + $0x28] sm:$0xff]
  %v786 = vld [vmem:[%s11 + $0x30] sm:$0xff]
  %v787 = vld [vmem:[%s11 + $0x38] sm:$0xff]
  %v788 = vld [vmem:[%s11 + $0x40] sm:$0xff]
  %v789 = vld [vmem:[%s11 + $0x48] sm:$0xff]
  %v790 = vld [vmem:[%s11 + $0x50] sm:$0xff]
  %v791 = vld [vmem:[%s11 + $0x58] sm:$0xff]
  %v792 = vld [vmem:[%s11 + $0x60] sm:$0xff]
  %v793 = vld [vmem:[%s11 + $0x68] sm:$0xff]
  %v794 = vld [vmem:[%s11 + $0x70] sm:$0xff]
  %v795 = vld [vmem:[%s11 + $0x78] sm:$0xff]
  %v796 = vld [vmem:[%s11 + $0x80] sm:$0xff]
  %v797 = vld [vmem:[%s11 + $0x88] sm:$0xff]
  %v798 = vld [vmem:[%s11 + $0x90] sm:$0xff]
  %v799 = vld [vmem:[%s11 + $0x98] sm:$0xff]
  %v800 = vld [vmem:[%s11 + $0xa0] sm:$0xff]
  %v801 = vld [vmem:[%s11 + $0xa8] sm:$0xff]
  %v802 = vld [vmem:[%s11 + $0xb0] sm:$0xff]
  %v803 = vld [vmem:[%s11 + $0xb8] sm:$0xff]
  %v804 = vld [vmem:[%s11 + $0xc0] sm:$0xff]
  %v805 = vld [vmem:[%s11 + $0xc8] sm:$0xff]
  %v806 = vld [vmem:[%s11 + $0xd0] sm:$0xff]
  %v807 = vld [vmem:[%s11 + $0xd8] sm:$0xff]
  %v808 = vld [vmem:[%s11 + $0xe0] sm:$0xff]
  %v809 = vld [vmem:[%s11 + $0xe8] sm:$0xff]
  %v810 = vld [vmem:[%s11 + $0xf0] sm:$0xff]
  %v811 = vld [vmem:[%s11 + $0xf8] sm:$0xff]
  %v812 = vld [vmem:[%s11 + $0x100] sm:$0xff]
  %v813 = vld [vmem:[%s11 + $0x108] sm:$0xff]
  %v814 = vld [vmem:[%s11 + $0x110] sm:$0xff]
  %v815 = vld [vmem:[%s11 + $0x118] sm:$0xff]
  %v816 = vld [vmem:[%s11 + $0x120] sm:$0xff]
  %v817 = vld [vmem:[%s11 + $0x128] sm:$0xff]
  %v818 = vld [vmem:[%s11 + $0x130] sm:$0x3]
  %v819 = vld [vmem:[%s11 + $0x138] sm:$0x3]
  %s820 = scalar_lea.vmem %s4, 16
  %v821 = vld [vmem:[%s820] ss:$8 sm:$0x3]
  %v823 = vlaneseq
  %v824 = vshrl.u32 %v823, 7
  %v825 = vsub.s32 0, %v824
  %v826 = vrot.slane %v821, %v825
  %v827 = vlaneseq
  %v828 = vshrl.u32 %v827, 7
  %v829 = vsub.s32 1, %v828
  %v830 = vrot.slane %v821, %v829
  %vm833 = vcmask 211968
  %v835 = vsel %vm833, %v779, 0
  %v838 = vsel %vm79, %v818, 0
  %v841 = vsel %vm79, %v819, 0
  %843 = vmatprep.subr.mxu0 %v811
  %844 = vmatpush1.msra.mxu0 %v810
  %845 = vmatprep.subr.mxu0 %v809
  %846 = vmatpush1.msra.mxu0 %v808
  %847 = vmatprep.subr.mxu0 %v807
  %848 = vmatpush1.msra.mxu0 %v806
  %849 = vmatprep.subr.mxu0 %v805
  %850 = vmatpush1.msra.mxu0 %v804
  %851 = vmatprep.subr.mxu0 %v803
  %852 = vmatpush1.msra.mxu0 %v802
  %853 = vmatprep.subr.mxu0 %v801
  %854 = vmatpush1.msra.mxu0 %v800
  %855 = vmatprep.subr.mxu0 %v799
  %856 = vmatpush1.msra.mxu0 %v798
  %857 = vmatprep.subr.mxu0 %v797
  %858 = vmatpush1.msra.mxu0 %v796
  %859 = vmatprep.subr.mxu0 %v795
  %860 = vmatpush1.msra.mxu0 %v794
  %861 = vmatprep.subr.mxu0 %v793
  %862 = vmatpush1.msra.mxu0 %v792
  %863 = vmatprep.subr.mxu0 %v791
  %864 = vmatpush1.msra.mxu0 %v790
  %865 = vmatprep.subr.mxu0 %v789
  %866 = vmatpush1.msra.mxu0 %v788
  %867 = vmatprep.subr.mxu0 %v787
  %868 = vmatpush1.msra.mxu0 %v786
  %869 = vmatprep.subr.mxu0 %v785
  %870 = vmatpush1.msra.mxu0 %v784
  %871 = vmatprep.subr.mxu0 %v783
  %872 = vmatpush1.msra.mxu0 %v782
  %873 = vmatprep.subr.mxu0 %v781
  %874 = vmatpush1.msra.mxu0 %v780
  %875 = vmatprep.subr.mxu0 0.0
  %876 = vmatpush2.msra.mxu0 0.0
  %877 = vmatprep.subr.mxu0 0.0
  %878 = vmatpush2.msra.mxu0 0.0
  %879 = vmatprep.subr.mxu0 0.0
  %880 = vmatpush2.msra.mxu0 0.0
  %881 = vmatprep.subr.mxu0 0.0
  %882 = vmatpush2.msra.mxu0 0.0
  %883 = vmatprep.subr.mxu0 0.0
  %884 = vmatpush2.msra.mxu0 0.0
  %885 = vmatprep.subr.mxu0 0.0
  %886 = vmatpush2.msra.mxu0 0.0
  %887 = vmatprep.subr.mxu0 0.0
  %888 = vmatpush2.msra.mxu0 0.0
  %889 = vmatprep.subr.mxu0 0.0
  %890 = vmatpush2.msra.mxu0 0.0
  %891 = vmatprep.subr.mxu0 0.0
  %892 = vmatpush2.msra.mxu0 0.0
  %893 = vmatprep.subr.mxu0 0.0
  %894 = vmatpush2.msra.mxu0 0.0
  %895 = vmatprep.subr.mxu0 0.0
  %896 = vmatpush2.msra.mxu0 0.0
  %897 = vmatprep.subr.mxu0 0.0
  %898 = vmatpush2.msra.mxu0 0.0
  %899 = vmatprep.subr.mxu0 %v841
  %900 = vmatpush2.msra.mxu0 %v838
  %901 = vmatprep.subr.mxu0 %v817
  %902 = vmatpush2.msra.mxu0 %v816
  %903 = vmatprep.subr.mxu0 %v815
  %904 = vmatpush2.msra.mxu0 %v814
  %905 = vmatprep.subr.mxu0 %v813
  %906 = vmatpush2.msra.mxu0 %v812
  %907 = vmatprep.mubr.f32.mxu0 %v835
  %908 = vmatmul.mubr.f32.gmra.mxu0 %v778
  %v909 = vpop.f32.mrf.mxu0
  %v910 = vadd.f32 %v826, %v909
  %v911 = vpop.f32.mrf.mxu0
  %v912 = vadd.f32 %v830, %v911
  %913 = vdwg.mxu0
  %v914 = vld [vmem:[%s3 + $0x2] ss:$0 sm:$0xff]
  %v915 = vld [vmem:[%s3 + $0x3] ss:$0 sm:$0xff]
  %v916 = vld [vmem:[%s4 + $0x12] ss:$0 sm:$0xff]
  %v917 = vld [vmem:[%s4 + $0x13] ss:$0 sm:$0xff]
  %v918 = vsub.f32 %v722, %v914
  %v919 = vadd.f32 %v915, 1e-05
  %v920 = vrsqrt.pop %v919
  %v921 = vmul.f32 %v920, %v916
  %v922 = vmul.f32 %v918, %v921
  %v923 = vadd.f32 %v922, %v917
  %vm924 = vcmp.gt.f32.partialorder %v923, 0.0
  %v925 = vmul.f32 %v923, 0.01
  %v926 = vsel %vm924, %v923, %v925
  %v927 = vld [vmem:[%s13] sm:$0xff]
  %v928 = vld [vmem:[%s13 + $0x8] sm:$0xff]
  %v929 = vld [vmem:[%s13 + $0x10] sm:$0xff]
  %v930 = vld [vmem:[%s13 + $0x18] sm:$0xff]
  %v931 = vld [vmem:[%s13 + $0x20] sm:$0xff]
  %v932 = vld [vmem:[%s13 + $0x28] sm:$0xff]
  %v933 = vld [vmem:[%s13 + $0x30] sm:$0xff]
  %v934 = vld [vmem:[%s13 + $0x38] sm:$0xff]
  %v935 = vld [vmem:[%s13 + $0x40] sm:$0xff]
  %v936 = vld [vmem:[%s13 + $0x48] sm:$0xff]
  %v937 = vld [vmem:[%s4 + $0x14] ss:$0 sm:$0xff]
  %vm938 = vcmask 654336
  %v940 = vsel %vm938, %v926, 0
  %942 = vmatprep.subr.mxu0 0.0
  %943 = vmatpush1.msra.mxu0 0.0
  %944 = vmatprep.subr.mxu0 0.0
  %945 = vmatpush1.msra.mxu0 0.0
  %946 = vmatprep.subr.mxu0 0.0
  %947 = vmatpush1.msra.mxu0 0.0
  %948 = vmatprep.subr.mxu0 0.0
  %949 = vmatpush1.msra.mxu0 0.0
  %950 = vmatprep.subr.mxu0 0.0
  %951 = vmatpush1.msra.mxu0 0.0
  %952 = vmatprep.subr.mxu0 0.0
  %953 = vmatpush1.msra.mxu0 0.0
  %954 = vmatprep.subr.mxu0 0.0
  %955 = vmatpush1.msra.mxu0 %v936
  %956 = vmatprep.subr.mxu0 0.0
  %957 = vmatpush1.msra.mxu0 %v935
  %958 = vmatprep.subr.mxu0 0.0
  %959 = vmatpush1.msra.mxu0 %v934
  %960 = vmatprep.subr.mxu0 0.0
  %961 = vmatpush1.msra.mxu0 %v933
  %962 = vmatprep.subr.mxu0 0.0
  %963 = vmatpush1.msra.mxu0 %v932
  %964 = vmatprep.subr.mxu0 0.0
  %965 = vmatpush1.msra.mxu0 %v931
  %966 = vmatprep.subr.mxu0 0.0
  %967 = vmatpush1.msra.mxu0 %v930
  %968 = vmatprep.subr.mxu0 0.0
  %969 = vmatpush1.msra.mxu0 %v929
  %970 = vmatprep.subr.mxu0 0.0
  %971 = vmatpush1.msra.mxu0 %v928
  %972 = vmatprep.subr.mxu0 0.0
  %973 = vmatpush1.msra.mxu0 %v927
  %974 = vmatprep.subr.mxu0 0.0
  %975 = vmatpush2.msra.mxu0 0.0
  %976 = vmatprep.subr.mxu0 0.0
  %977 = vmatpush2.msra.mxu0 0.0
  %978 = vmatprep.subr.mxu0 0.0
  %979 = vmatpush2.msra.mxu0 0.0
  %980 = vmatprep.subr.mxu0 0.0
  %981 = vmatpush2.msra.mxu0 0.0
  %982 = vmatprep.subr.mxu0 0.0
  %983 = vmatpush2.msra.mxu0 0.0
  %984 = vmatprep.subr.mxu0 0.0
  %985 = vmatpush2.msra.mxu0 0.0
  %986 = vmatprep.subr.mxu0 0.0
  %987 = vmatpush2.msra.mxu0 0.0
  %988 = vmatprep.subr.mxu0 0.0
  %989 = vmatpush2.msra.mxu0 0.0
  %990 = vmatprep.subr.mxu0 0.0
  %991 = vmatpush2.msra.mxu0 0.0
  %992 = vmatprep.subr.mxu0 0.0
  %993 = vmatpush2.msra.mxu0 0.0
  %994 = vmatprep.subr.mxu0 0.0
  %995 = vmatpush2.msra.mxu0 0.0
  %996 = vmatprep.subr.mxu0 0.0
  %997 = vmatpush2.msra.mxu0 0.0
  %998 = vmatprep.subr.mxu0 0.0
  %999 = vmatpush2.msra.mxu0 0.0
  %1000 = vmatprep.subr.mxu0 0.0
  %1001 = vmatpush2.msra.mxu0 0.0
  %1002 = vmatprep.subr.mxu0 0.0
  %1003 = vmatpush2.msra.mxu0 0.0
  %1004 = vmatprep.subr.mxu0 0.0
  %1005 = vmatpush2.msra.mxu0 0.0
  %1006 = vmatprep.mubr.f32.mxu0 0.0
  %1007 = vmatmul.mubr.f32.gmra.mxu0 %v940
  %v1008 = vpop.f32.mrf.mxu0
  %v1009 = vadd.f32 %v937, %v1008
  %v1010 = vpop.f32.mrf.mxu0
  %1011 = vdwg.mxu0
  %v1012 = vld [vmem:[%s1] sm:$0xff]
  %v1013 = vld [vmem:[%s1 + $0x8] sm:$0xff]
  %vm1014 = vcmask 48128
  %v1015 = vsel %vm1014, %v1009, -inf
  %1016 = vmax.xlane.f32.xlu0 %v1015
  %v1017 = vpop.xlane.xlu0 %1016
  %v1018 = vsub.f32 %v1009, %v1017
  %v1019 = vmul.f32 %v1018, 1.442695
  %v1020 = vpow.pop %v1019
  %v1021 = vsel %vm1014, %v1020, 0.0
  %1022 = vadd.xlane.f32.xlu0 %v1021
  %v1023 = vpop.xlane.xlu0 %1022
  %v1024 = vrcp.pop %v1023
  %v1025 = vmul.f32 %v1020, %v1024
  %v1026 = vld [vmem:[%s2] sm:$0xff]
  %v1027 = vld [vmem:[%s2 + $0x8] sm:$0xff]
  %1029 = vset.pattern.permute.xlu0 0
  %1030 = vperm.xlu0 %1029, %v1025
  %v1031 = vpop.permute.xlu0 %1030
  %v1033 = vmul.f32 %v1031, %v1012
  %1034 = vset.pattern.permute.xlu0 1
  %1035 = vperm.xlu0 %1034, %v1025
  %v1036 = vpop.permute.xlu0 %1035
  %v1038 = vmul.f32 %v1036, %v1012
  %v1039 = vmul.f32 %v1036, %v1013
  %1042 = vrot.lane.b32.xlu0 %v1038, 28
  %v1043 = vpop.permute.xlu0 %1042
  %1044 = vrot.lane.b32.xlu0 %v1039, 28
  %v1045 = vpop.permute.xlu0 %1044
  %vm1046 = vcmask 228352
  %v1047 = vsel %vm1046, %v1043, %v1045
  %v1049 = vadd.f32 %v1033, %v1047
  %1050 = vset.pattern.permute.xlu0 2
  %1051 = vperm.xlu0 %1050, %v1025
  %v1052 = vpop.permute.xlu0 %1051
  %v1054 = vmul.f32 %v1052, %v1026
  %v1055 = vadd.f32 %v1049, %v1054
  %1056 = vset.pattern.permute.xlu0 3
  %1057 = vperm.xlu0 %1056, %v1025
  %v1058 = vpop.permute.xlu0 %1057
  %v1060 = vmul.f32 %v1058, %v1026
  %v1061 = vmul.f32 %v1058, %v1027
  %1064 = vrot.lane.b32.xlu0 %v1060, 28
  %v1065 = vpop.permute.xlu0 %1064
  %1066 = vrot.lane.b32.xlu0 %v1061, 28
  %v1067 = vpop.permute.xlu0 %1066
  %v1068 = vsel %vm1046, %v1065, %v1067
  %v1070 = vadd.f32 %v1055, %v1068
  %1071 = vset.pattern.permute.xlu0 4
  %1072 = vperm.xlu0 %1071, %v1025
  %v1073 = vpop.permute.xlu0 %1072
  %v1075 = vmul.f32 %v1073, %v910
  %v1076 = vadd.f32 %v1070, %v1075
  %1077 = vset.pattern.permute.xlu0 5
  %1078 = vperm.xlu0 %1077, %v1025
  %v1079 = vpop.permute.xlu0 %1078
  %v1081 = vmul.f32 %v1079, %v912
  %v1082 = vadd.f32 %v1076, %v1081
  %v1083 = vmul.f32 %v1082, 0.16666667
  %v1084 = vld [vmem:[%s14] sm:$0xff]
  %v1085 = vld [vmem:[%s14 + $0x8] sm:$0xff]
  %v1086 = vld [vmem:[%s14 + $0x10] sm:$0xff]
  %v1087 = vld [vmem:[%s14 + $0x18] sm:$0xff]
  %v1088 = vld [vmem:[%s14 + $0x20] sm:$0xff]
  %v1089 = vld [vmem:[%s14 + $0x28] sm:$0xff]
  %v1090 = vld [vmem:[%s14 + $0x30] sm:$0xff]
  %v1091 = vld [vmem:[%s14 + $0x38] sm:$0xff]
  %v1092 = vld [vmem:[%s14 + $0x40] sm:$0xff]
  %v1093 = vld [vmem:[%s14 + $0x48] sm:$0xff]
  %v1094 = vld [vmem:[%s14 + $0x50] sm:$0xff]
  %v1095 = vld [vmem:[%s14 + $0x58] sm:$0xff]
  %v1096 = vld [vmem:[%s14 + $0x60] sm:$0xf]
  %v1097 = vld [vmem:[%s4 + $0x15] ss:$0 sm:$0xff]
  %vm1098 = vcmask 818176
  %v1100 = vsel %vm1098, %v1083, 0
  %v1103 = vsel %vm466, %v1096, 0
  %1105 = vmatprep.subr.mxu0 0.0
  %1106 = vmatpush1.msra.mxu0 0.0
  %1107 = vmatprep.subr.mxu0 0.0
  %1108 = vmatpush1.msra.mxu0 0.0
  %1109 = vmatprep.subr.mxu0 0.0
  %1110 = vmatpush1.msra.mxu0 0.0
  %1111 = vmatprep.subr.mxu0 0.0
  %1112 = vmatpush1.msra.mxu0 %v1103
  %1113 = vmatprep.subr.mxu0 0.0
  %1114 = vmatpush1.msra.mxu0 %v1095
  %1115 = vmatprep.subr.mxu0 0.0
  %1116 = vmatpush1.msra.mxu0 %v1094
  %1117 = vmatprep.subr.mxu0 0.0
  %1118 = vmatpush1.msra.mxu0 %v1093
  %1119 = vmatprep.subr.mxu0 0.0
  %1120 = vmatpush1.msra.mxu0 %v1092
  %1121 = vmatprep.subr.mxu0 0.0
  %1122 = vmatpush1.msra.mxu0 %v1091
  %1123 = vmatprep.subr.mxu0 0.0
  %1124 = vmatpush1.msra.mxu0 %v1090
  %1125 = vmatprep.subr.mxu0 0.0
  %1126 = vmatpush1.msra.mxu0 %v1089
  %1127 = vmatprep.subr.mxu0 0.0
  %1128 = vmatpush1.msra.mxu0 %v1088
  %1129 = vmatprep.subr.mxu0 0.0
  %1130 = vmatpush1.msra.mxu0 %v1087
  %1131 = vmatprep.subr.mxu0 0.0
  %1132 = vmatpush1.msra.mxu0 %v1086
  %1133 = vmatprep.subr.mxu0 0.0
  %1134 = vmatpush1.msra.mxu0 %v1085
  %1135 = vmatprep.subr.mxu0 0.0
  %1136 = vmatpush1.msra.mxu0 %v1084
  %1137 = vmatprep.subr.mxu0 0.0
  %1138 = vmatpush2.msra.mxu0 0.0
  %1139 = vmatprep.subr.mxu0 0.0
  %1140 = vmatpush2.msra.mxu0 0.0
  %1141 = vmatprep.subr.mxu0 0.0
  %1142 = vmatpush2.msra.mxu0 0.0
  %1143 = vmatprep.subr.mxu0 0.0
  %1144 = vmatpush2.msra.mxu0 0.0
  %1145 = vmatprep.subr.mxu0 0.0
  %1146 = vmatpush2.msra.mxu0 0.0
  %1147 = vmatprep.subr.mxu0 0.0
  %1148 = vmatpush2.msra.mxu0 0.0
  %1149 = vmatprep.subr.mxu0 0.0
  %1150 = vmatpush2.msra.mxu0 0.0
  %1151 = vmatprep.subr.mxu0 0.0
  %1152 = vmatpush2.msra.mxu0 0.0
  %1153 = vmatprep.subr.mxu0 0.0
  %1154 = vmatpush2.msra.mxu0 0.0
  %1155 = vmatprep.subr.mxu0 0.0
  %1156 = vmatpush2.msra.mxu0 0.0
  %1157 = vmatprep.subr.mxu0 0.0
  %1158 = vmatpush2.msra.mxu0 0.0
  %1159 = vmatprep.subr.mxu0 0.0
  %1160 = vmatpush2.msra.mxu0 0.0
  %1161 = vmatprep.subr.mxu0 0.0
  %1162 = vmatpush2.msra.mxu0 0.0
  %1163 = vmatprep.subr.mxu0 0.0
  %1164 = vmatpush2.msra.mxu0 0.0
  %1165 = vmatprep.subr.mxu0 0.0
  %1166 = vmatpush2.msra.mxu0 0.0
  %1167 = vmatprep.subr.mxu0 0.0
  %1168 = vmatpush2.msra.mxu0 0.0
  %1169 = vmatprep.mubr.f32.mxu0 0.0
  %1170 = vmatmul.mubr.f32.gmra.mxu0 %v1100
  %v1171 = vpop.f32.mrf.mxu0
  %v1172 = vadd.f32 %v1097, %v1171
  %v1173 = vpop.f32.mrf.mxu0
  %1174 = vdwg.mxu0
  %v1175 = vld [vmem:[%s4 + $0x16] ss:$0 sm:$0xff]
  %v1176 = vld [vmem:[%s4 + $0x17] ss:$0 sm:$0xff]
  %v1177 = vsel %vm1098, %v1172, 0.0
  %1178 = vadd.xlane.f32.xlu0 %v1177
  %v1179 = vpop.xlane.xlu0 %1178
  %v1180 = vrcp.pop 100.0
  %v1181 = vmul.f32 %v1179, %v1180
  %v1182 = vsub.f32 %v1172, %v1181
  %v1183 = vmul.f32 %v1182, %v1182
  %v1184 = vsel %vm1098, %v1183, 0.0
  %1185 = vadd.xlane.f32.xlu0 %v1184
  %v1186 = vpop.xlane.xlu0 %1185
  %v1187 = vmul.f32 %v1186, %v1180
  %v1188 = vadd.f32 %v1187, 1e-05
  %v1189 = vrsqrt.pop %v1188
  %v1190 = vmul.f32 %v1182, %v1189
  %v1191 = vmul.f32 %v1190, %v1175
  %v1192 = vadd.f32 %v1191, %v1176
  %vm1193 = vcmp.gt.f32.partialorder %v1192, 0.0
  %v1194 = vmul.f32 %v1192, 0.01
  %v1195 = vsel %vm1193, %v1192, %v1194
  %v1196 = vld [vmem:[%s15] sm:$0xff]
  %v1197 = vld [vmem:[%s15 + $0x8] sm:$0xff]
  %v1198 = vld [vmem:[%s15 + $0x10] sm:$0xff]
  %v1199 = vld [vmem:[%s15 + $0x18] sm:$0xff]
  %v1200 = vld [vmem:[%s15 + $0x20] sm:$0xff]
  %v1201 = vld [vmem:[%s15 + $0x28] sm:$0xff]
  %v1202 = vld [vmem:[%s15 + $0x30] sm:$0xff]
  %v1203 = vld [vmem:[%s15 + $0x38] sm:$0xff]
  %v1204 = vld [vmem:[%s15 + $0x40] sm:$0xff]
  %v1205 = vld [vmem:[%s15 + $0x48] sm:$0xff]
  %v1206 = vld [vmem:[%s15 + $0x50] sm:$0xff]
  %v1207 = vld [vmem:[%s15 + $0x58] sm:$0xff]
  %v1208 = vld [vmem:[%s15 + $0x60] sm:$0xf]
  %v1209 = vld [vmem:[%s4 + $0x20] ss:$0 sm:$0xff]
  %v1211 = vsel %vm1098, %v1195, 0
  %v1214 = vsel %vm466, %v1208, 0
  %1216 = vmatprep.subr.mxu0 0.0
  %1217 = vmatpush1.msra.mxu0 0.0
  %1218 = vmatprep.subr.mxu0 0.0
  %1219 = vmatpush1.msra.mxu0 0.0
  %1220 = vmatprep.subr.mxu0 0.0
  %1221 = vmatpush1.msra.mxu0 0.0
  %1222 = vmatprep.subr.mxu0 0.0
  %1223 = vmatpush1.msra.mxu0 %v1214
  %1224 = vmatprep.subr.mxu0 0.0
  %1225 = vmatpush1.msra.mxu0 %v1207
  %1226 = vmatprep.subr.mxu0 0.0
  %1227 = vmatpush1.msra.mxu0 %v1206
  %1228 = vmatprep.subr.mxu0 0.0
  %1229 = vmatpush1.msra.mxu0 %v1205
  %1230 = vmatprep.subr.mxu0 0.0
  %1231 = vmatpush1.msra.mxu0 %v1204
  %1232 = vmatprep.subr.mxu0 0.0
  %1233 = vmatpush1.msra.mxu0 %v1203
  %1234 = vmatprep.subr.mxu0 0.0
  %1235 = vmatpush1.msra.mxu0 %v1202
  %1236 = vmatprep.subr.mxu0 0.0
  %1237 = vmatpush1.msra.mxu0 %v1201
  %1238 = vmatprep.subr.mxu0 0.0
  %1239 = vmatpush1.msra.mxu0 %v1200
  %1240 = vmatprep.subr.mxu0 0.0
  %1241 = vmatpush1.msra.mxu0 %v1199
  %1242 = vmatprep.subr.mxu0 0.0
  %1243 = vmatpush1.msra.mxu0 %v1198
  %1244 = vmatprep.subr.mxu0 0.0
  %1245 = vmatpush1.msra.mxu0 %v1197
  %1246 = vmatprep.subr.mxu0 0.0
  %1247 = vmatpush1.msra.mxu0 %v1196
  %1248 = vmatprep.subr.mxu0 0.0
  %1249 = vmatpush2.msra.mxu0 0.0
  %1250 = vmatprep.subr.mxu0 0.0
  %1251 = vmatpush2.msra.mxu0 0.0
  %1252 = vmatprep.subr.mxu0 0.0
  %1253 = vmatpush2.msra.mxu0 0.0
  %1254 = vmatprep.subr.mxu0 0.0
  %1255 = vmatpush2.msra.mxu0 0.0
  %1256 = vmatprep.subr.mxu0 0.0
  %1257 = vmatpush2.msra.mxu0 0.0
  %1258 = vmatprep.subr.mxu0 0.0
  %1259 = vmatpush2.msra.mxu0 0.0
  %1260 = vmatprep.subr.mxu0 0.0
  %1261 = vmatpush2.msra.mxu0 0.0
  %1262 = vmatprep.subr.mxu0 0.0
  %1263 = vmatpush2.msra.mxu0 0.0
  %1264 = vmatprep.subr.mxu0 0.0
  %1265 = vmatpush2.msra.mxu0 0.0
  %1266 = vmatprep.subr.mxu0 0.0
  %1267 = vmatpush2.msra.mxu0 0.0
  %1268 = vmatprep.subr.mxu0 0.0
  %1269 = vmatpush2.msra.mxu0 0.0
  %1270 = vmatprep.subr.mxu0 0.0
  %1271 = vmatpush2.msra.mxu0 0.0
  %1272 = vmatprep.subr.mxu0 0.0
  %1273 = vmatpush2.msra.mxu0 0.0
  %1274 = vmatprep.subr.mxu0 0.0
  %1275 = vmatpush2.msra.mxu0 0.0
  %1276 = vmatprep.subr.mxu0 0.0
  %1277 = vmatpush2.msra.mxu0 0.0
  %1278 = vmatprep.subr.mxu0 0.0
  %1279 = vmatpush2.msra.mxu0 0.0
  %1280 = vmatprep.mubr.f32.mxu0 0.0
  %1281 = vmatmul.mubr.f32.gmra.mxu0 %v1211
  %v1282 = vpop.f32.mrf.mxu0
  %v1283 = vadd.f32 %v1209, %v1282
  %v1284 = vpop.f32.mrf.mxu0
  %1285 = vdwg.mxu0
  %v1286 = vld [vmem:[%s4 + $0x21] ss:$0 sm:$0xff]
  %v1287 = vld [vmem:[%s4 + $0x22] ss:$0 sm:$0xff]
  %vm1288 = vcmask 408576
  %v1289 = vsel %vm1288, %v1283, 0.0
  %1290 = vadd.xlane.f32.xlu0 %v1289
  %v1291 = vpop.xlane.xlu0 %1290
  %v1292 = vrcp.pop 50.0
  %v1293 = vmul.f32 %v1291, %v1292
  %v1294 = vsub.f32 %v1283, %v1293
  %v1295 = vmul.f32 %v1294, %v1294
  %v1296 = vsel %vm1288, %v1295, 0.0
  %1297 = vadd.xlane.f32.xlu0 %v1296
  %v1298 = vpop.xlane.xlu0 %1297
  %v1299 = vmul.f32 %v1298, %v1292
  %v1300 = vadd.f32 %v1299, 1e-05
  %v1301 = vrsqrt.pop %v1300
  %v1302 = vmul.f32 %v1294, %v1301
  %v1303 = vmul.f32 %v1302, %v1286
  %v1304 = vadd.f32 %v1303, %v1287
  %vm1305 = vcmp.gt.f32.partialorder %v1304, 0.0
  %v1306 = vmul.f32 %v1304, 0.01
  %v1307 = vsel %vm1305, %v1304, %v1306
  %v1308 = vld [vmem:[%s16] sm:$0xff]
  %v1309 = vld [vmem:[%s16 + $0x8] sm:$0xff]
  %v1310 = vld [vmem:[%s16 + $0x10] sm:$0xff]
  %v1311 = vld [vmem:[%s16 + $0x18] sm:$0xff]
  %v1312 = vld [vmem:[%s16 + $0x20] sm:$0xff]
  %v1313 = vld [vmem:[%s16 + $0x28] sm:$0xff]
  %v1314 = vld [vmem:[%s16 + $0x30] sm:$0x3]
  %v1315 = vld [vmem:[%s4 + $0x23] ss:$0 sm:$0xff]
  %v1317 = vsel %vm1288, %v1307, 0
  %v1320 = vsel %vm79, %v1314, 0
  %1322 = vmatprep.subr.mxu0 0.0
  %1323 = vmatpush1.msra.mxu0 0.0
  %1324 = vmatprep.subr.mxu0 0.0
  %1325 = vmatpush1.msra.mxu0 0.0
  %1326 = vmatprep.subr.mxu0 0.0
  %1327 = vmatpush1.msra.mxu0 0.0
  %1328 = vmatprep.subr.mxu0 0.0
  %1329 = vmatpush1.msra.mxu0 0.0
  %1330 = vmatprep.subr.mxu0 0.0
  %1331 = vmatpush1.msra.mxu0 0.0
  %1332 = vmatprep.subr.mxu0 0.0
  %1333 = vmatpush1.msra.mxu0 0.0
  %1334 = vmatprep.subr.mxu0 0.0
  %1335 = vmatpush1.msra.mxu0 0.0
  %1336 = vmatprep.subr.mxu0 0.0
  %1337 = vmatpush1.msra.mxu0 0.0
  %1338 = vmatprep.subr.mxu0 0.0
  %1339 = vmatpush1.msra.mxu0 0.0
  %1340 = vmatprep.subr.mxu0 0.0
  %1341 = vmatpush1.msra.mxu0 %v1320
  %1342 = vmatprep.subr.mxu0 0.0
  %1343 = vmatpush1.msra.mxu0 %v1313
  %1344 = vmatprep.subr.mxu0 0.0
  %1345 = vmatpush1.msra.mxu0 %v1312
  %1346 = vmatprep.subr.mxu0 0.0
  %1347 = vmatpush1.msra.mxu0 %v1311
  %1348 = vmatprep.subr.mxu0 0.0
  %1349 = vmatpush1.msra.mxu0 %v1310
  %1350 = vmatprep.subr.mxu0 0.0
  %1351 = vmatpush1.msra.mxu0 %v1309
  %1352 = vmatprep.subr.mxu0 0.0
  %1353 = vmatpush1.msra.mxu0 %v1308
  %1354 = vmatprep.subr.mxu0 0.0
  %1355 = vmatpush2.msra.mxu0 0.0
  %1356 = vmatprep.subr.mxu0 0.0
  %1357 = vmatpush2.msra.mxu0 0.0
  %1358 = vmatprep.subr.mxu0 0.0
  %1359 = vmatpush2.msra.mxu0 0.0
  %1360 = vmatprep.subr.mxu0 0.0
  %1361 = vmatpush2.msra.mxu0 0.0
  %1362 = vmatprep.subr.mxu0 0.0
  %1363 = vmatpush2.msra.mxu0 0.0
  %1364 = vmatprep.subr.mxu0 0.0
  %1365 = vmatpush2.msra.mxu0 0.0
  %1366 = vmatprep.subr.mxu0 0.0
  %1367 = vmatpush2.msra.mxu0 0.0
  %1368 = vmatprep.subr.mxu0 0.0
  %1369 = vmatpush2.msra.mxu0 0.0
  %1370 = vmatprep.subr.mxu0 0.0
  %1371 = vmatpush2.msra.mxu0 0.0
  %1372 = vmatprep.subr.mxu0 0.0
  %1373 = vmatpush2.msra.mxu0 0.0
  %1374 = vmatprep.subr.mxu0 0.0
  %1375 = vmatpush2.msra.mxu0 0.0
  %1376 = vmatprep.subr.mxu0 0.0
  %1377 = vmatpush2.msra.mxu0 0.0
  %1378 = vmatprep.subr.mxu0 0.0
  %1379 = vmatpush2.msra.mxu0 0.0
  %1380 = vmatprep.subr.mxu0 0.0
  %1381 = vmatpush2.msra.mxu0 0.0
  %1382 = vmatprep.subr.mxu0 0.0
  %1383 = vmatpush2.msra.mxu0 0.0
  %1384 = vmatprep.subr.mxu0 0.0
  %1385 = vmatpush2.msra.mxu0 0.0
  %1386 = vmatprep.mubr.f32.mxu0 0.0
  %1387 = vmatmul.mubr.f32.gmra.mxu0 %v1317
  %v1388 = vpop.f32.mrf.mxu0
  %v1389 = vadd.f32 %v1315, %v1388
  %v1390 = vpop.f32.mrf.mxu0
  %1391 = vdwg.mxu0
  %v1392 = vld [vmem:[%s4 + $0x24] ss:$0 sm:$0xff]
  %v1393 = vld [vmem:[%s4 + $0x25] ss:$0 sm:$0xff]
  %v1394 = vsel %vm282, %v1389, 0.0
  %1395 = vadd.xlane.f32.xlu0 %v1394
  %v1396 = vpop.xlane.xlu0 %1395
  %v1397 = vrcp.pop 10.0
  %v1398 = vmul.f32 %v1396, %v1397
  %v1399 = vsub.f32 %v1389, %v1398
  %v1400 = vmul.f32 %v1399, %v1399
  %v1401 = vsel %vm282, %v1400, 0.0
  %1402 = vadd.xlane.f32.xlu0 %v1401
  %v1403 = vpop.xlane.xlu0 %1402
  %v1404 = vmul.f32 %v1403, %v1397
  %v1405 = vadd.f32 %v1404, 1e-05
  %v1406 = vrsqrt.pop %v1405
  %v1407 = vmul.f32 %v1399, %v1406
  %v1408 = vmul.f32 %v1407, %v1392
  %v1409 = vadd.f32 %v1408, %v1393
  %vm1410 = vcmp.gt.f32.partialorder %v1409, 0.0
  %v1411 = vmul.f32 %v1409, 0.01
  %v1412 = vsel %vm1410, %v1409, %v1411
  %v1413 = vld [vmem:[%s4 + $0x26] ss:$0 sm:$0xff]
  %v1414 = vmul.f32 %v1412, %v1413
  %v1415 = vsel %vm282, %v1414, 0.0
  %1416 = vadd.xlane.f32.xlu0 %v1415
  %v1417 = vpop.xlane.xlu0 %1416
  %v1418 = vld [vmem:[%s4 + $0x27] ss:$0 sm:$0xff]
  %v1419 = vadd.f32 %v1417, %v1418
  %vm1420 = vcmask 7168
  %1421 = vst.msk [vmem:[%s17] sm:$0xff] %vm1420, %v1419
  %vm1422 = vcmask 97328
  %v1423 = vsel %vm1422, %v1009, -inf
  %1424 = vmax.xlane.f32.xlu0 %v1423
  %v1425 = vpop.xlane.xlu0 %1424
  %v1426 = vsub.f32 %v1009, %v1425
  %v1427 = vmul.f32 %v1426, 1.442695
  %v1428 = vpow.pop %v1427
  %1430 = vrot.lane.b32.xlu0 %v1428, 122
  %v1431 = vpop.permute.xlu0 %1430
  %v1433 = vsel %vm1014, %v1431, 0.0
  %1434 = vadd.xlane.f32.xlu0 %v1433
  %v1435 = vpop.xlane.xlu0 %1434
  %v1436 = vrcp.pop %v1435
  %v1437 = vmul.f32 %v1428, %v1436
  %v1438 = vld [vmem:[%s2 + $0x8] sm:$0xff]
  %v1439 = vld [vmem:[%s2 + $0x10] sm:$0xff]
  %v1440 = vld [vmem:[%s2 + $0x18] sm:$0xff]
  %1442 = vset.pattern.permute.xlu0 6
  %1443 = vperm.xlu0 %1442, %v1437
  %v1444 = vpop.permute.xlu0 %1443
  %v1446 = vmul.f32 %v1444, %v1012
  %1447 = vset.pattern.permute.xlu0 7
  %1448 = vperm.xlu0 %1447, %v1437
  %v1449 = vpop.permute.xlu0 %1448
  %v1451 = vmul.f32 %v1449, %v1012
  %v1452 = vmul.f32 %v1449, %v1013
  %1455 = vrot.lane.b32.xlu0 %v1451, 28
  %v1456 = vpop.permute.xlu0 %1455
  %1457 = vrot.lane.b32.xlu0 %v1452, 28
  %v1458 = vpop.permute.xlu0 %1457
  %v1459 = vsel %vm1046, %v1456, %v1458
  %v1461 = vadd.f32 %v1446, %v1459
  %1462 = vset.pattern.permute.xlu0 8
  %1463 = vperm.xlu0 %1462, %v1437
  %v1464 = vpop.permute.xlu0 %1463
  %v1466 = vmul.f32 %v1464, %v1438
  %v1467 = vmul.f32 %v1464, %v1439
  %1470 = vrot.lane.b32.xlu0 %v1466, 56
  %v1471 = vpop.permute.xlu0 %1470
  %1472 = vrot.lane.b32.xlu0 %v1467, 56
  %v1473 = vpop.permute.xlu0 %1472
  %vm1474 = vcmask 457728
  %v1475 = vsel %vm1474, %v1471, %v1473
  %v1477 = vadd.f32 %v1461, %v1475
  %1478 = vset.pattern.permute.xlu0 9
  %1479 = vperm.xlu0 %1478, %v1437
  %v1480 = vpop.permute.xlu0 %1479
  %v1482 = vmul.f32 %v1480, %v1439
  %v1483 = vmul.f32 %v1480, %v1440
  %1486 = vrot.lane.b32.xlu0 %v1482, 84
  %v1487 = vpop.permute.xlu0 %1486
  %1488 = vrot.lane.b32.xlu0 %v1483, 84
  %v1489 = vpop.permute.xlu0 %1488
  %vm1490 = vcmask 687104
  %v1491 = vsel %vm1490, %v1487, %v1489
  %v1493 = vadd.f32 %v1477, %v1491
  %1494 = vset.pattern.permute.xlu0 10
  %1495 = vperm.xlu0 %1494, %v1437
  %v1496 = vpop.permute.xlu0 %1495
  %v1498 = vmul.f32 %v1496, %v910
  %v1499 = vadd.f32 %v1493, %v1498
  %1500 = vset.pattern.permute.xlu0 11
  %1501 = vperm.xlu0 %1500, %v1437
  %v1502 = vpop.permute.xlu0 %1501
  %v1504 = vmul.f32 %v1502, %v912
  %v1505 = vadd.f32 %v1499, %v1504
  %v1506 = vmul.f32 %v1505, 0.16666667
  %s1507 = scalar_lea.vmem %s14, 104
  %v1508 = vld [vmem:[%s1507] sm:$0xff]
  %v1509 = vld [vmem:[%s1507 + $0x8] sm:$0xff]
  %v1510 = vld [vmem:[%s1507 + $0x10] sm:$0xff]
  %v1511 = vld [vmem:[%s1507 + $0x18] sm:$0xff]
  %v1512 = vld [vmem:[%s1507 + $0x20] sm:$0xff]
  %v1513 = vld [vmem:[%s1507 + $0x28] sm:$0xff]
  %v1514 = vld [vmem:[%s1507 + $0x30] sm:$0xff]
  %v1515 = vld [vmem:[%s1507 + $0x38] sm:$0xff]
  %v1516 = vld [vmem:[%s1507 + $0x40] sm:$0xff]
  %v1517 = vld [vmem:[%s1507 + $0x48] sm:$0xff]
  %v1518 = vld [vmem:[%s1507 + $0x50] sm:$0xff]
  %v1519 = vld [vmem:[%s1507 + $0x58] sm:$0xff]
  %v1520 = vld [vmem:[%s1507 + $0x60] sm:$0xf]
  %v1521 = vld [vmem:[%s4 + $0x30] ss:$0 sm:$0xff]
  %v1523 = vsel %vm1098, %v1506, 0
  %v1526 = vsel %vm466, %v1520, 0
  %1528 = vmatprep.subr.mxu0 0.0
  %1529 = vmatpush1.msra.mxu0 0.0
  %1530 = vmatprep.subr.mxu0 0.0
  %1531 = vmatpush1.msra.mxu0 0.0
  %1532 = vmatprep.subr.mxu0 0.0
  %1533 = vmatpush1.msra.mxu0 0.0
  %1534 = vmatprep.subr.mxu0 0.0
  %1535 = vmatpush1.msra.mxu0 %v1526
  %1536 = vmatprep.subr.mxu0 0.0
  %1537 = vmatpush1.msra.mxu0 %v1519
  %1538 = vmatprep.subr.mxu0 0.0
  %1539 = vmatpush1.msra.mxu0 %v1518
  %1540 = vmatprep.subr.mxu0 0.0
  %1541 = vmatpush1.msra.mxu0 %v1517
  %1542 = vmatprep.subr.mxu0 0.0
  %1543 = vmatpush1.msra.mxu0 %v1516
  %1544 = vmatprep.subr.mxu0 0.0
  %1545 = vmatpush1.msra.mxu0 %v1515
  %1546 = vmatprep.subr.mxu0 0.0
  %1547 = vmatpush1.msra.mxu0 %v1514
  %1548 = vmatprep.subr.mxu0 0.0
  %1549 = vmatpush1.msra.mxu0 %v1513
  %1550 = vmatprep.subr.mxu0 0.0
  %1551 = vmatpush1.msra.mxu0 %v1512
  %1552 = vmatprep.subr.mxu0 0.0
  %1553 = vmatpush1.msra.mxu0 %v1511
  %1554 = vmatprep.subr.mxu0 0.0
  %1555 = vmatpush1.msra.mxu0 %v1510
  %1556 = vmatprep.subr.mxu0 0.0
  %1557 = vmatpush1.msra.mxu0 %v1509
  %1558 = vmatprep.subr.mxu0 0.0
  %1559 = vmatpush1.msra.mxu0 %v1508
  %1560 = vmatprep.subr.mxu0 0.0
  %1561 = vmatpush2.msra.mxu0 0.0
  %1562 = vmatprep.subr.mxu0 0.0
  %1563 = vmatpush2.msra.mxu0 0.0
  %1564 = vmatprep.subr.mxu0 0.0
  %1565 = vmatpush2.msra.mxu0 0.0
  %1566 = vmatprep.subr.mxu0 0.0
  %1567 = vmatpush2.msra.mxu0 0.0
  %1568 = vmatprep.subr.mxu0 0.0
  %1569 = vmatpush2.msra.mxu0 0.0
  %1570 = vmatprep.subr.mxu0 0.0
  %1571 = vmatpush2.msra.mxu0 0.0
  %1572 = vmatprep.subr.mxu0 0.0
  %1573 = vmatpush2.msra.mxu0 0.0
  %1574 = vmatprep.subr.mxu0 0.0
  %1575 = vmatpush2.msra.mxu0 0.0
  %1576 = vmatprep.subr.mxu0 0.0
  %1577 = vmatpush2.msra.mxu0 0.0
  %1578 = vmatprep.subr.mxu0 0.0
  %1579 = vmatpush2.msra.mxu0 0.0
  %1580 = vmatprep.subr.mxu0 0.0
  %1581 = vmatpush2.msra.mxu0 0.0
  %1582 = vmatprep.subr.mxu0 0.0
  %1583 = vmatpush2.msra.mxu0 0.0
  %1584 = vmatprep.subr.mxu0 0.0
  %1585 = vmatpush2.msra.mxu0 0.0
  %1586 = vmatprep.subr.mxu0 0.0
  %1587 = vmatpush2.msra.mxu0 0.0
  %1588 = vmatprep.subr.mxu0 0.0
  %1589 = vmatpush2.msra.mxu0 0.0
  %1590 = vmatprep.subr.mxu0 0.0
  %1591 = vmatpush2.msra.mxu0 0.0
  %1592 = vmatprep.mubr.f32.mxu0 0.0
  %1593 = vmatmul.mubr.f32.gmra.mxu0 %v1523
  %v1594 = vpop.f32.mrf.mxu0
  %v1595 = vadd.f32 %v1521, %v1594
  %v1596 = vpop.f32.mrf.mxu0
  %1597 = vdwg.mxu0
  %v1598 = vld [vmem:[%s4 + $0x31] ss:$0 sm:$0xff]
  %v1599 = vld [vmem:[%s4 + $0x32] ss:$0 sm:$0xff]
  %v1600 = vsel %vm1098, %v1595, 0.0
  %1601 = vadd.xlane.f32.xlu0 %v1600
  %v1602 = vpop.xlane.xlu0 %1601
  %v1603 = vmul.f32 %v1602, %v1180
  %v1604 = vsub.f32 %v1595, %v1603
  %v1605 = vmul.f32 %v1604, %v1604
  %v1606 = vsel %vm1098, %v1605, 0.0
  %1607 = vadd.xlane.f32.xlu0 %v1606
  %v1608 = vpop.xlane.xlu0 %1607
  %v1609 = vmul.f32 %v1608, %v1180
  %v1610 = vadd.f32 %v1609, 1e-05
  %v1611 = vrsqrt.pop %v1610
  %v1612 = vmul.f32 %v1604, %v1611
  %v1613 = vmul.f32 %v1612, %v1598
  %v1614 = vadd.f32 %v1613, %v1599
  %vm1615 = vcmp.gt.f32.partialorder %v1614, 0.0
  %v1616 = vmul.f32 %v1614, 0.01
  %v1617 = vsel %vm1615, %v1614, %v1616
  %s1618 = scalar_lea.vmem %s15, 104
  %v1619 = vld [vmem:[%s1618] sm:$0xff]
  %v1620 = vld [vmem:[%s1618 + $0x8] sm:$0xff]
  %v1621 = vld [vmem:[%s1618 + $0x10] sm:$0xff]
  %v1622 = vld [vmem:[%s1618 + $0x18] sm:$0xff]
  %v1623 = vld [vmem:[%s1618 + $0x20] sm:$0xff]
  %v1624 = vld [vmem:[%s1618 + $0x28] sm:$0xff]
  %v1625 = vld [vmem:[%s1618 + $0x30] sm:$0xff]
  %v1626 = vld [vmem:[%s1618 + $0x38] sm:$0xff]
  %v1627 = vld [vmem:[%s1618 + $0x40] sm:$0xff]
  %v1628 = vld [vmem:[%s1618 + $0x48] sm:$0xff]
  %v1629 = vld [vmem:[%s1618 + $0x50] sm:$0xff]
  %v1630 = vld [vmem:[%s1618 + $0x58] sm:$0xff]
  %v1631 = vld [vmem:[%s1618 + $0x60] sm:$0xf]
  %v1632 = vld [vmem:[%s4 + $0x33] ss:$0 sm:$0xff]
  %v1634 = vsel %vm1098, %v1617, 0
  %v1637 = vsel %vm466, %v1631, 0
  %1639 = vmatprep.subr.mxu0 0.0
  %1640 = vmatpush1.msra.mxu0 0.0
  %1641 = vmatprep.subr.mxu0 0.0
  %1642 = vmatpush1.msra.mxu0 0.0
  %1643 = vmatprep.subr.mxu0 0.0
  %1644 = vmatpush1.msra.mxu0 0.0
  %1645 = vmatprep.subr.mxu0 0.0
  %1646 = vmatpush1.msra.mxu0 %v1637
  %1647 = vmatprep.subr.mxu0 0.0
  %1648 = vmatpush1.msra.mxu0 %v1630
  %1649 = vmatprep.subr.mxu0 0.0
  %1650 = vmatpush1.msra.mxu0 %v1629
  %1651 = vmatprep.subr.mxu0 0.0
  %1652 = vmatpush1.msra.mxu0 %v1628
  %1653 = vmatprep.subr.mxu0 0.0
  %1654 = vmatpush1.msra.mxu0 %v1627
  %1655 = vmatprep.subr.mxu0 0.0
  %1656 = vmatpush1.msra.mxu0 %v1626
  %1657 = vmatprep.subr.mxu0 0.0
  %1658 = vmatpush1.msra.mxu0 %v1625
  %1659 = vmatprep.subr.mxu0 0.0
  %1660 = vmatpush1.msra.mxu0 %v1624
  %1661 = vmatprep.subr.mxu0 0.0
  %1662 = vmatpush1.msra.mxu0 %v1623
  %1663 = vmatprep.subr.mxu0 0.0
  %1664 = vmatpush1.msra.mxu0 %v1622
  %1665 = vmatprep.subr.mxu0 0.0
  %1666 = vmatpush1.msra.mxu0 %v1621
  %1667 = vmatprep.subr.mxu0 0.0
  %1668 = vmatpush1.msra.mxu0 %v1620
  %1669 = vmatprep.subr.mxu0 0.0
  %1670 = vmatpush1.msra.mxu0 %v1619
  %1671 = vmatprep.subr.mxu0 0.0
  %1672 = vmatpush2.msra.mxu0 0.0
  %1673 = vmatprep.subr.mxu0 0.0
  %1674 = vmatpush2.msra.mxu0 0.0
  %1675 = vmatprep.subr.mxu0 0.0
  %1676 = vmatpush2.msra.mxu0 0.0
  %1677 = vmatprep.subr.mxu0 0.0
  %1678 = vmatpush2.msra.mxu0 0.0
  %1679 = vmatprep.subr.mxu0 0.0
  %1680 = vmatpush2.msra.mxu0 0.0
  %1681 = vmatprep.subr.mxu0 0.0
  %1682 = vmatpush2.msra.mxu0 0.0
  %1683 = vmatprep.subr.mxu0 0.0
  %1684 = vmatpush2.msra.mxu0 0.0
  %1685 = vmatprep.subr.mxu0 0.0
  %1686 = vmatpush2.msra.mxu0 0.0
  %1687 = vmatprep.subr.mxu0 0.0
  %1688 = vmatpush2.msra.mxu0 0.0
  %1689 = vmatprep.subr.mxu0 0.0
  %1690 = vmatpush2.msra.mxu0 0.0
  %1691 = vmatprep.subr.mxu0 0.0
  %1692 = vmatpush2.msra.mxu0 0.0
  %1693 = vmatprep.subr.mxu0 0.0
  %1694 = vmatpush2.msra.mxu0 0.0
  %1695 = vmatprep.subr.mxu0 0.0
  %1696 = vmatpush2.msra.mxu0 0.0
  %1697 = vmatprep.subr.mxu0 0.0
  %1698 = vmatpush2.msra.mxu0 0.0
  %1699 = vmatprep.subr.mxu0 0.0
  %1700 = vmatpush2.msra.mxu0 0.0
  %1701 = vmatprep.subr.mxu0 0.0
  %1702 = vmatpush2.msra.mxu0 0.0
  %1703 = vmatprep.mubr.f32.mxu0 0.0
  %1704 = vmatmul.mubr.f32.gmra.mxu0 %v1634
  %v1705 = vpop.f32.mrf.mxu0
  %v1706 = vadd.f32 %v1632, %v1705
  %v1707 = vpop.f32.mrf.mxu0
  %1708 = vdwg.mxu0
  %v1709 = vld [vmem:[%s4 + $0x34] ss:$0 sm:$0xff]
  %v1710 = vld [vmem:[%s4 + $0x35] ss:$0 sm:$0xff]
  %v1711 = vsel %vm1288, %v1706, 0.0
  %1712 = vadd.xlane.f32.xlu0 %v1711
  %v1713 = vpop.xlane.xlu0 %1712
  %v1714 = vmul.f32 %v1713, %v1292
  %v1715 = vsub.f32 %v1706, %v1714
  %v1716 = vmul.f32 %v1715, %v1715
  %v1717 = vsel %vm1288, %v1716, 0.0
  %1718 = vadd.xlane.f32.xlu0 %v1717
  %v1719 = vpop.xlane.xlu0 %1718
  %v1720 = vmul.f32 %v1719, %v1292
  %v1721 = vadd.f32 %v1720, 1e-05
  %v1722 = vrsqrt.pop %v1721
  %v1723 = vmul.f32 %v1715, %v1722
  %v1724 = vmul.f32 %v1723, %v1709
  %v1725 = vadd.f32 %v1724, %v1710
  %vm1726 = vcmp.gt.f32.partialorder %v1725, 0.0
  %v1727 = vmul.f32 %v1725, 0.01
  %v1728 = vsel %vm1726, %v1725, %v1727
  %s1729 = scalar_lea.vmem %s16, 56
  %v1730 = vld [vmem:[%s1729] sm:$0xff]
  %v1731 = vld [vmem:[%s1729 + $0x8] sm:$0xff]
  %v1732 = vld [vmem:[%s1729 + $0x10] sm:$0xff]
  %v1733 = vld [vmem:[%s1729 + $0x18] sm:$0xff]
  %v1734 = vld [vmem:[%s1729 + $0x20] sm:$0xff]
  %v1735 = vld [vmem:[%s1729 + $0x28] sm:$0xff]
  %v1736 = vld [vmem:[%s1729 + $0x30] sm:$0x3]
  %v1737 = vld [vmem:[%s4 + $0x36] ss:$0 sm:$0xff]
  %v1739 = vsel %vm1288, %v1728, 0
  %v1742 = vsel %vm79, %v1736, 0
  %1744 = vmatprep.subr.mxu0 0.0
  %1745 = vmatpush1.msra.mxu0 0.0
  %1746 = vmatprep.subr.mxu0 0.0
  %1747 = vmatpush1.msra.mxu0 0.0
  %1748 = vmatprep.subr.mxu0 0.0
  %1749 = vmatpush1.msra.mxu0 0.0
  %1750 = vmatprep.subr.mxu0 0.0
  %1751 = vmatpush1.msra.mxu0 0.0
  %1752 = vmatprep.subr.mxu0 0.0
  %1753 = vmatpush1.msra.mxu0 0.0
  %1754 = vmatprep.subr.mxu0 0.0
  %1755 = vmatpush1.msra.mxu0 0.0
  %1756 = vmatprep.subr.mxu0 0.0
  %1757 = vmatpush1.msra.mxu0 0.0
  %1758 = vmatprep.subr.mxu0 0.0
  %1759 = vmatpush1.msra.mxu0 0.0
  %1760 = vmatprep.subr.mxu0 0.0
  %1761 = vmatpush1.msra.mxu0 0.0
  %1762 = vmatprep.subr.mxu0 0.0
  %1763 = vmatpush1.msra.mxu0 %v1742
  %1764 = vmatprep.subr.mxu0 0.0
  %1765 = vmatpush1.msra.mxu0 %v1735
  %1766 = vmatprep.subr.mxu0 0.0
  %1767 = vmatpush1.msra.mxu0 %v1734
  %1768 = vmatprep.subr.mxu0 0.0
  %1769 = vmatpush1.msra.mxu0 %v1733
  %1770 = vmatprep.subr.mxu0 0.0
  %1771 = vmatpush1.msra.mxu0 %v1732
  %1772 = vmatprep.subr.mxu0 0.0
  %1773 = vmatpush1.msra.mxu0 %v1731
  %1774 = vmatprep.subr.mxu0 0.0
  %1775 = vmatpush1.msra.mxu0 %v1730
  %1776 = vmatprep.subr.mxu0 0.0
  %1777 = vmatpush2.msra.mxu0 0.0
  %1778 = vmatprep.subr.mxu0 0.0
  %1779 = vmatpush2.msra.mxu0 0.0
  %1780 = vmatprep.subr.mxu0 0.0
  %1781 = vmatpush2.msra.mxu0 0.0
  %1782 = vmatprep.subr.mxu0 0.0
  %1783 = vmatpush2.msra.mxu0 0.0
  %1784 = vmatprep.subr.mxu0 0.0
  %1785 = vmatpush2.msra.mxu0 0.0
  %1786 = vmatprep.subr.mxu0 0.0
  %1787 = vmatpush2.msra.mxu0 0.0
  %1788 = vmatprep.subr.mxu0 0.0
  %1789 = vmatpush2.msra.mxu0 0.0
  %1790 = vmatprep.subr.mxu0 0.0
  %1791 = vmatpush2.msra.mxu0 0.0
  %1792 = vmatprep.subr.mxu0 0.0
  %1793 = vmatpush2.msra.mxu0 0.0
  %1794 = vmatprep.subr.mxu0 0.0
  %1795 = vmatpush2.msra.mxu0 0.0
  %1796 = vmatprep.subr.mxu0 0.0
  %1797 = vmatpush2.msra.mxu0 0.0
  %1798 = vmatprep.subr.mxu0 0.0
  %1799 = vmatpush2.msra.mxu0 0.0
  %1800 = vmatprep.subr.mxu0 0.0
  %1801 = vmatpush2.msra.mxu0 0.0
  %1802 = vmatprep.subr.mxu0 0.0
  %1803 = vmatpush2.msra.mxu0 0.0
  %1804 = vmatprep.subr.mxu0 0.0
  %1805 = vmatpush2.msra.mxu0 0.0
  %1806 = vmatprep.subr.mxu0 0.0
  %1807 = vmatpush2.msra.mxu0 0.0
  %1808 = vmatprep.mubr.f32.mxu0 0.0
  %1809 = vmatmul.mubr.f32.gmra.mxu0 %v1739
  %v1810 = vpop.f32.mrf.mxu0
  %v1811 = vadd.f32 %v1737, %v1810
  %v1812 = vpop.f32.mrf.mxu0
  %1813 = vdwg.mxu0
  %v1814 = vld [vmem:[%s4 + $0x37] ss:$0 sm:$0xff]
  %v1815 = vld [vmem:[%s4 + $0x40] ss:$0 sm:$0xff]
  %v1816 = vsel %vm282, %v1811, 0.0
  %1817 = vadd.xlane.f32.xlu0 %v1816
  %v1818 = vpop.xlane.xlu0 %1817
  %v1819 = vmul.f32 %v1818, %v1397
  %v1820 = vsub.f32 %v1811, %v1819
  %v1821 = vmul.f32 %v1820, %v1820
  %v1822 = vsel %vm282, %v1821, 0.0
  %1823 = vadd.xlane.f32.xlu0 %v1822
  %v1824 = vpop.xlane.xlu0 %1823
  %v1825 = vmul.f32 %v1824, %v1397
  %v1826 = vadd.f32 %v1825, 1e-05
  %v1827 = vrsqrt.pop %v1826
  %v1828 = vmul.f32 %v1820, %v1827
  %v1829 = vmul.f32 %v1828, %v1814
  %v1830 = vadd.f32 %v1829, %v1815
  %vm1831 = vcmp.gt.f32.partialorder %v1830, 0.0
  %v1832 = vmul.f32 %v1830, 0.01
  %v1833 = vsel %vm1831, %v1830, %v1832
  %v1834 = vld [vmem:[%s4 + $0x41] ss:$0 sm:$0xff]
  %v1835 = vmul.f32 %v1833, %v1834
  %v1836 = vsel %vm282, %v1835, 0.0
  %1837 = vadd.xlane.f32.xlu0 %v1836
  %v1838 = vpop.xlane.xlu0 %1837
  %v1839 = vld [vmem:[%s4 + $0x42] ss:$0 sm:$0xff]
  %v1840 = vadd.f32 %v1838, %v1839
  %1842 = vrot.lane.b32.xlu0 %v1840, 1
  %v1843 = vpop.permute.xlu0 %1842
  %vm1845 = vcmask 15368
  %1846 = vst.msk [vmem:[%s17] sm:$0xff] %vm1845, %v1843
  %vm1847 = vcmask 146528
  %v1848 = vsel %vm1847, %v1009, -inf
  %1849 = vmax.xlane.f32.xlu0 %v1848
  %v1850 = vpop.xlane.xlu0 %1849
  %v1851 = vsub.f32 %v1009, %v1850
  %v1852 = vmul.f32 %v1851, 1.442695
  %v1853 = vpow.pop %v1852
  %1855 = vrot.lane.b32.xlu0 %v1853, 116
  %v1856 = vpop.permute.xlu0 %1855
  %v1858 = vsel %vm1014, %v1856, 0.0
  %1859 = vadd.xlane.f32.xlu0 %v1858
  %v1860 = vpop.xlane.xlu0 %1859
  %v1861 = vrcp.pop %v1860
  %v1862 = vmul.f32 %v1853, %v1861
  %v1863 = vld [vmem:[%s2 + $0x18] sm:$0xff]
  %v1864 = vld [vmem:[%s2 + $0x20] sm:$0xff]
  %1866 = vset.pattern.permute.xlu0 12
  %1867 = vperm.xlu0 %1866, %v1862
  %v1868 = vpop.permute.xlu0 %1867
  %v1870 = vmul.f32 %v1868, %v1012
  %1871 = vset.pattern.permute.xlu0 13
  %1872 = vperm.xlu0 %1871, %v1862
  %v1873 = vpop.permute.xlu0 %1872
  %v1875 = vmul.f32 %v1873, %v1012
  %v1876 = vmul.f32 %v1873, %v1013
  %1879 = vrot.lane.b32.xlu0 %v1875, 28
  %v1880 = vpop.permute.xlu0 %1879
  %1881 = vrot.lane.b32.xlu0 %v1876, 28
  %v1882 = vpop.permute.xlu0 %1881
  %v1883 = vsel %vm1046, %v1880, %v1882
  %v1885 = vadd.f32 %v1870, %v1883
  %1886 = vset.pattern.permute.xlu0 14
  %1887 = vperm.xlu0 %1886, %v1862
  %v1888 = vpop.permute.xlu0 %1887
  %v1890 = vmul.f32 %v1888, %v1863
  %1892 = vrot.lane.b32.xlu0 %v1890, 112
  %v1893 = vpop.permute.xlu0 %1892
  %v1895 = vadd.f32 %v1885, %v1893
  %1896 = vset.pattern.permute.xlu0 15
  %1897 = vperm.xlu0 %1896, %v1862
  %v1898 = vpop.permute.xlu0 %1897
  %v1900 = vmul.f32 %v1898, %v1863
  %v1901 = vmul.f32 %v1898, %v1864
  %1904 = vrot.lane.b32.xlu0 %v1900, 12
  %v1905 = vpop.permute.xlu0 %1904
  %1906 = vrot.lane.b32.xlu0 %v1901, 12
  %v1907 = vpop.permute.xlu0 %1906
  %vm1908 = vcmask 97280
  %v1909 = vsel %vm1908, %v1905, %v1907
  %v1911 = vadd.f32 %v1895, %v1909
  %1912 = vset.pattern.permute.xlu0 16
  %1913 = vperm.xlu0 %1912, %v1862
  %v1914 = vpop.permute.xlu0 %1913
  %v1916 = vmul.f32 %v1914, %v910
  %v1917 = vadd.f32 %v1911, %v1916
  %1918 = vset.pattern.permute.xlu0 17
  %1919 = vperm.xlu0 %1918, %v1862
  %v1920 = vpop.permute.xlu0 %1919
  %v1922 = vmul.f32 %v1920, %v912
  %v1923 = vadd.f32 %v1917, %v1922
  %v1924 = vmul.f32 %v1923, 0.16666667
  %s1925 = scalar_lea.vmem %s14, 208
  %v1926 = vld [vmem:[%s1925] sm:$0xff]
  %v1927 = vld [vmem:[%s1925 + $0x8] sm:$0xff]
  %v1928 = vld [vmem:[%s1925 + $0x10] sm:$0xff]
  %v1929 = vld [vmem:[%s1925 + $0x18] sm:$0xff]
  %v1930 = vld [vmem:[%s1925 + $0x20] sm:$0xff]
  %v1931 = vld [vmem:[%s1925 + $0x28] sm:$0xff]
  %v1932 = vld [vmem:[%s1925 + $0x30] sm:$0xff]
  %v1933 = vld [vmem:[%s1925 + $0x38] sm:$0xff]
  %v1934 = vld [vmem:[%s1925 + $0x40] sm:$0xff]
  %v1935 = vld [vmem:[%s1925 + $0x48] sm:$0xff]
  %v1936 = vld [vmem:[%s1925 + $0x50] sm:$0xff]
  %v1937 = vld [vmem:[%s1925 + $0x58] sm:$0xff]
  %v1938 = vld [vmem:[%s1925 + $0x60] sm:$0xf]
  %v1939 = vld [vmem:[%s4 + $0x43] ss:$0 sm:$0xff]
  %v1941 = vsel %vm1098, %v1924, 0
  %v1944 = vsel %vm466, %v1938, 0
  %1946 = vmatprep.subr.mxu0 0.0
  %1947 = vmatpush1.msra.mxu0 0.0
  %1948 = vmatprep.subr.mxu0 0.0
  %1949 = vmatpush1.msra.mxu0 0.0
  %1950 = vmatprep.subr.mxu0 0.0
  %1951 = vmatpush1.msra.mxu0 0.0
  %1952 = vmatprep.subr.mxu0 0.0
  %1953 = vmatpush1.msra.mxu0 %v1944
  %1954 = vmatprep.subr.mxu0 0.0
  %1955 = vmatpush1.msra.mxu0 %v1937
  %1956 = vmatprep.subr.mxu0 0.0
  %1957 = vmatpush1.msra.mxu0 %v1936
  %1958 = vmatprep.subr.mxu0 0.0
  %1959 = vmatpush1.msra.mxu0 %v1935
  %1960 = vmatprep.subr.mxu0 0.0
  %1961 = vmatpush1.msra.mxu0 %v1934
  %1962 = vmatprep.subr.mxu0 0.0
  %1963 = vmatpush1.msra.mxu0 %v1933
  %1964 = vmatprep.subr.mxu0 0.0
  %1965 = vmatpush1.msra.mxu0 %v1932
  %1966 = vmatprep.subr.mxu0 0.0
  %1967 = vmatpush1.msra.mxu0 %v1931
  %1968 = vmatprep.subr.mxu0 0.0
  %1969 = vmatpush1.msra.mxu0 %v1930
  %1970 = vmatprep.subr.mxu0 0.0
  %1971 = vmatpush1.msra.mxu0 %v1929
  %1972 = vmatprep.subr.mxu0 0.0
  %1973 = vmatpush1.msra.mxu0 %v1928
  %1974 = vmatprep.subr.mxu0 0.0
  %1975 = vmatpush1.msra.mxu0 %v1927
  %1976 = vmatprep.subr.mxu0 0.0
  %1977 = vmatpush1.msra.mxu0 %v1926
  %1978 = vmatprep.subr.mxu0 0.0
  %1979 = vmatpush2.msra.mxu0 0.0
  %1980 = vmatprep.subr.mxu0 0.0
  %1981 = vmatpush2.msra.mxu0 0.0
  %1982 = vmatprep.subr.mxu0 0.0
  %1983 = vmatpush2.msra.mxu0 0.0
  %1984 = vmatprep.subr.mxu0 0.0
  %1985 = vmatpush2.msra.mxu0 0.0
  %1986 = vmatprep.subr.mxu0 0.0
  %1987 = vmatpush2.msra.mxu0 0.0
  %1988 = vmatprep.subr.mxu0 0.0
  %1989 = vmatpush2.msra.mxu0 0.0
  %1990 = vmatprep.subr.mxu0 0.0
  %1991 = vmatpush2.msra.mxu0 0.0
  %1992 = vmatprep.subr.mxu0 0.0
  %1993 = vmatpush2.msra.mxu0 0.0
  %1994 = vmatprep.subr.mxu0 0.0
  %1995 = vmatpush2.msra.mxu0 0.0
  %1996 = vmatprep.subr.mxu0 0.0
  %1997 = vmatpush2.msra.mxu0 0.0
  %1998 = vmatprep.subr.mxu0 0.0
  %1999 = vmatpush2.msra.mxu0 0.0
  %2000 = vmatprep.subr.mxu0 0.0
  %2001 = vmatpush2.msra.mxu0 0.0
  %2002 = vmatprep.subr.mxu0 0.0
  %2003 = vmatpush2.msra.mxu0 0.0
  %2004 = vmatprep.subr.mxu0 0.0
  %2005 = vmatpush2.msra.mxu0 0.0
  %2006 = vmatprep.subr.mxu0 0.0
  %2007 = vmatpush2.msra.mxu0 0.0
  %2008 = vmatprep.subr.mxu0 0.0
  %2009 = vmatpush2.msra.mxu0 0.0
  %2010 = vmatprep.mubr.f32.mxu0 0.0
  %2011 = vmatmul.mubr.f32.gmra.mxu0 %v1941
  %v2012 = vpop.f32.mrf.mxu0
  %v2013 = vadd.f32 %v1939, %v2012
  %v2014 = vpop.f32.mrf.mxu0
  %2015 = vdwg.mxu0
  %v2016 = vld [vmem:[%s4 + $0x44] ss:$0 sm:$0xff]
  %v2017 = vld [vmem:[%s4 + $0x45] ss:$0 sm:$0xff]
  %v2018 = vsel %vm1098, %v2013, 0.0
  %2019 = vadd.xlane.f32.xlu0 %v2018
  %v2020 = vpop.xlane.xlu0 %2019
  %v2021 = vmul.f32 %v2020, %v1180
  %v2022 = vsub.f32 %v2013, %v2021
  %v2023 = vmul.f32 %v2022, %v2022
  %v2024 = vsel %vm1098, %v2023, 0.0
  %2025 = vadd.xlane.f32.xlu0 %v2024
  %v2026 = vpop.xlane.xlu0 %2025
  %v2027 = vmul.f32 %v2026, %v1180
  %v2028 = vadd.f32 %v2027, 1e-05
  %v2029 = vrsqrt.pop %v2028
  %v2030 = vmul.f32 %v2022, %v2029
  %v2031 = vmul.f32 %v2030, %v2016
  %v2032 = vadd.f32 %v2031, %v2017
  %vm2033 = vcmp.gt.f32.partialorder %v2032, 0.0
  %v2034 = vmul.f32 %v2032, 0.01
  %v2035 = vsel %vm2033, %v2032, %v2034
  %s2036 = scalar_lea.vmem %s15, 208
  %v2037 = vld [vmem:[%s2036] sm:$0xff]
  %v2038 = vld [vmem:[%s2036 + $0x8] sm:$0xff]
  %v2039 = vld [vmem:[%s2036 + $0x10] sm:$0xff]
  %v2040 = vld [vmem:[%s2036 + $0x18] sm:$0xff]
  %v2041 = vld [vmem:[%s2036 + $0x20] sm:$0xff]
  %v2042 = vld [vmem:[%s2036 + $0x28] sm:$0xff]
  %v2043 = vld [vmem:[%s2036 + $0x30] sm:$0xff]
  %v2044 = vld [vmem:[%s2036 + $0x38] sm:$0xff]
  %v2045 = vld [vmem:[%s2036 + $0x40] sm:$0xff]
  %v2046 = vld [vmem:[%s2036 + $0x48] sm:$0xff]
  %v2047 = vld [vmem:[%s2036 + $0x50] sm:$0xff]
  %v2048 = vld [vmem:[%s2036 + $0x58] sm:$0xff]
  %v2049 = vld [vmem:[%s2036 + $0x60] sm:$0xf]
  %v2050 = vld [vmem:[%s4 + $0x46] ss:$0 sm:$0xff]
  %v2052 = vsel %vm1098, %v2035, 0
  %v2055 = vsel %vm466, %v2049, 0
  %2057 = vmatprep.subr.mxu0 0.0
  %2058 = vmatpush1.msra.mxu0 0.0
  %2059 = vmatprep.subr.mxu0 0.0
  %2060 = vmatpush1.msra.mxu0 0.0
  %2061 = vmatprep.subr.mxu0 0.0
  %2062 = vmatpush1.msra.mxu0 0.0
  %2063 = vmatprep.subr.mxu0 0.0
  %2064 = vmatpush1.msra.mxu0 %v2055
  %2065 = vmatprep.subr.mxu0 0.0
  %2066 = vmatpush1.msra.mxu0 %v2048
  %2067 = vmatprep.subr.mxu0 0.0
  %2068 = vmatpush1.msra.mxu0 %v2047
  %2069 = vmatprep.subr.mxu0 0.0
  %2070 = vmatpush1.msra.mxu0 %v2046
  %2071 = vmatprep.subr.mxu0 0.0
  %2072 = vmatpush1.msra.mxu0 %v2045
  %2073 = vmatprep.subr.mxu0 0.0
  %2074 = vmatpush1.msra.mxu0 %v2044
  %2075 = vmatprep.subr.mxu0 0.0
  %2076 = vmatpush1.msra.mxu0 %v2043
  %2077 = vmatprep.subr.mxu0 0.0
  %2078 = vmatpush1.msra.mxu0 %v2042
  %2079 = vmatprep.subr.mxu0 0.0
  %2080 = vmatpush1.msra.mxu0 %v2041
  %2081 = vmatprep.subr.mxu0 0.0
  %2082 = vmatpush1.msra.mxu0 %v2040
  %2083 = vmatprep.subr.mxu0 0.0
  %2084 = vmatpush1.msra.mxu0 %v2039
  %2085 = vmatprep.subr.mxu0 0.0
  %2086 = vmatpush1.msra.mxu0 %v2038
  %2087 = vmatprep.subr.mxu0 0.0
  %2088 = vmatpush1.msra.mxu0 %v2037
  %2089 = vmatprep.subr.mxu0 0.0
  %2090 = vmatpush2.msra.mxu0 0.0
  %2091 = vmatprep.subr.mxu0 0.0
  %2092 = vmatpush2.msra.mxu0 0.0
  %2093 = vmatprep.subr.mxu0 0.0
  %2094 = vmatpush2.msra.mxu0 0.0
  %2095 = vmatprep.subr.mxu0 0.0
  %2096 = vmatpush2.msra.mxu0 0.0
  %2097 = vmatprep.subr.mxu0 0.0
  %2098 = vmatpush2.msra.mxu0 0.0
  %2099 = vmatprep.subr.mxu0 0.0
  %2100 = vmatpush2.msra.mxu0 0.0
  %2101 = vmatprep.subr.mxu0 0.0
  %2102 = vmatpush2.msra.mxu0 0.0
  %2103 = vmatprep.subr.mxu0 0.0
  %2104 = vmatpush2.msra.mxu0 0.0
  %2105 = vmatprep.subr.mxu0 0.0
  %2106 = vmatpush2.msra.mxu0 0.0
  %2107 = vmatprep.subr.mxu0 0.0
  %2108 = vmatpush2.msra.mxu0 0.0
  %2109 = vmatprep.subr.mxu0 0.0
  %2110 = vmatpush2.msra.mxu0 0.0
  %2111 = vmatprep.subr.mxu0 0.0
  %2112 = vmatpush2.msra.mxu0 0.0
  %2113 = vmatprep.subr.mxu0 0.0
  %2114 = vmatpush2.msra.mxu0 0.0
  %2115 = vmatprep.subr.mxu0 0.0
  %2116 = vmatpush2.msra.mxu0 0.0
  %2117 = vmatprep.subr.mxu0 0.0
  %2118 = vmatpush2.msra.mxu0 0.0
  %2119 = vmatprep.subr.mxu0 0.0
  %2120 = vmatpush2.msra.mxu0 0.0
  %2121 = vmatprep.mubr.f32.mxu0 0.0
  %2122 = vmatmul.mubr.f32.gmra.mxu0 %v2052
  %v2123 = vpop.f32.mrf.mxu0
  %v2124 = vadd.f32 %v2050, %v2123
  %v2125 = vpop.f32.mrf.mxu0
  %2126 = vdwg.mxu0
  %v2127 = vld [vmem:[%s4 + $0x47] ss:$0 sm:$0xff]
  %v2128 = vld [vmem:[%s4 + $0x50] ss:$0 sm:$0xff]
  %v2129 = vsel %vm1288, %v2124, 0.0
  %2130 = vadd.xlane.f32.xlu0 %v2129
  %v2131 = vpop.xlane.xlu0 %2130
  %v2132 = vmul.f32 %v2131, %v1292
  %v2133 = vsub.f32 %v2124, %v2132
  %v2134 = vmul.f32 %v2133, %v2133
  %v2135 = vsel %vm1288, %v2134, 0.0
  %2136 = vadd.xlane.f32.xlu0 %v2135
  %v2137 = vpop.xlane.xlu0 %2136
  %v2138 = vmul.f32 %v2137, %v1292
  %v2139 = vadd.f32 %v2138, 1e-05
  %v2140 = vrsqrt.pop %v2139
  %v2141 = vmul.f32 %v2133, %v2140
  %v2142 = vmul.f32 %v2141, %v2127
  %v2143 = vadd.f32 %v2142, %v2128
  %vm2144 = vcmp.gt.f32.partialorder %v2143, 0.0
  %v2145 = vmul.f32 %v2143, 0.01
  %v2146 = vsel %vm2144, %v2143, %v2145
  %s2147 = scalar_lea.vmem %s16, 112
  %v2148 = vld [vmem:[%s2147] sm:$0xff]
  %v2149 = vld [vmem:[%s2147 + $0x8] sm:$0xff]
  %v2150 = vld [vmem:[%s2147 + $0x10] sm:$0xff]
  %v2151 = vld [vmem:[%s2147 + $0x18] sm:$0xff]
  %v2152 = vld [vmem:[%s2147 + $0x20] sm:$0xff]
  %v2153 = vld [vmem:[%s2147 + $0x28] sm:$0xff]
  %v2154 = vld [vmem:[%s2147 + $0x30] sm:$0x3]
  %v2155 = vld [vmem:[%s4 + $0x51] ss:$0 sm:$0xff]
  %v2157 = vsel %vm1288, %v2146, 0
  %v2160 = vsel %vm79, %v2154, 0
  %2162 = vmatprep.subr.mxu0 0.0
  %2163 = vmatpush1.msra.mxu0 0.0
  %2164 = vmatprep.subr.mxu0 0.0
  %2165 = vmatpush1.msra.mxu0 0.0
  %2166 = vmatprep.subr.mxu0 0.0
  %2167 = vmatpush1.msra.mxu0 0.0
  %2168 = vmatprep.subr.mxu0 0.0
  %2169 = vmatpush1.msra.mxu0 0.0
  %2170 = vmatprep.subr.mxu0 0.0
  %2171 = vmatpush1.msra.mxu0 0.0
  %2172 = vmatprep.subr.mxu0 0.0
  %2173 = vmatpush1.msra.mxu0 0.0
  %2174 = vmatprep.subr.mxu0 0.0
  %2175 = vmatpush1.msra.mxu0 0.0
  %2176 = vmatprep.subr.mxu0 0.0
  %2177 = vmatpush1.msra.mxu0 0.0
  %2178 = vmatprep.subr.mxu0 0.0
  %2179 = vmatpush1.msra.mxu0 0.0
  %2180 = vmatprep.subr.mxu0 0.0
  %2181 = vmatpush1.msra.mxu0 %v2160
  %2182 = vmatprep.subr.mxu0 0.0
  %2183 = vmatpush1.msra.mxu0 %v2153
  %2184 = vmatprep.subr.mxu0 0.0
  %2185 = vmatpush1.msra.mxu0 %v2152
  %2186 = vmatprep.subr.mxu0 0.0
  %2187 = vmatpush1.msra.mxu0 %v2151
  %2188 = vmatprep.subr.mxu0 0.0
  %2189 = vmatpush1.msra.mxu0 %v2150
  %2190 = vmatprep.subr.mxu0 0.0
  %2191 = vmatpush1.msra.mxu0 %v2149
  %2192 = vmatprep.subr.mxu0 0.0
  %2193 = vmatpush1.msra.mxu0 %v2148
  %2194 = vmatprep.subr.mxu0 0.0
  %2195 = vmatpush2.msra.mxu0 0.0
  %2196 = vmatprep.subr.mxu0 0.0
  %2197 = vmatpush2.msra.mxu0 0.0
  %2198 = vmatprep.subr.mxu0 0.0
  %2199 = vmatpush2.msra.mxu0 0.0
  %2200 = vmatprep.subr.mxu0 0.0
  %2201 = vmatpush2.msra.mxu0 0.0
  %2202 = vmatprep.subr.mxu0 0.0
  %2203 = vmatpush2.msra.mxu0 0.0
  %2204 = vmatprep.subr.mxu0 0.0
  %2205 = vmatpush2.msra.mxu0 0.0
  %2206 = vmatprep.subr.mxu0 0.0
  %2207 = vmatpush2.msra.mxu0 0.0
  %2208 = vmatprep.subr.mxu0 0.0
  %2209 = vmatpush2.msra.mxu0 0.0
  %2210 = vmatprep.subr.mxu0 0.0
  %2211 = vmatpush2.msra.mxu0 0.0
  %2212 = vmatprep.subr.mxu0 0.0
  %2213 = vmatpush2.msra.mxu0 0.0
  %2214 = vmatprep.subr.mxu0 0.0
  %2215 = vmatpush2.msra.mxu0 0.0
  %2216 = vmatprep.subr.mxu0 0.0
  %2217 = vmatpush2.msra.mxu0 0.0
  %2218 = vmatprep.subr.mxu0 0.0
  %2219 = vmatpush2.msra.mxu0 0.0
  %2220 = vmatprep.subr.mxu0 0.0
  %2221 = vmatpush2.msra.mxu0 0.0
  %2222 = vmatprep.subr.mxu0 0.0
  %2223 = vmatpush2.msra.mxu0 0.0
  %2224 = vmatprep.subr.mxu0 0.0
  %2225 = vmatpush2.msra.mxu0 0.0
  %2226 = vmatprep.mubr.f32.mxu0 0.0
  %2227 = vmatmul.mubr.f32.gmra.mxu0 %v2157
  %v2228 = vpop.f32.mrf.mxu0
  %v2229 = vadd.f32 %v2155, %v2228
  %v2230 = vpop.f32.mrf.mxu0
  %2231 = vdwg.mxu0
  %v2232 = vld [vmem:[%s4 + $0x52] ss:$0 sm:$0xff]
  %v2233 = vld [vmem:[%s4 + $0x53] ss:$0 sm:$0xff]
  %v2234 = vsel %vm282, %v2229, 0.0
  %2235 = vadd.xlane.f32.xlu0 %v2234
  %v2236 = vpop.xlane.xlu0 %2235
  %v2237 = vmul.f32 %v2236, %v1397
  %v2238 = vsub.f32 %v2229, %v2237
  %v2239 = vmul.f32 %v2238, %v2238
  %v2240 = vsel %vm282, %v2239, 0.0
  %2241 = vadd.xlane.f32.xlu0 %v2240
  %v2242 = vpop.xlane.xlu0 %2241
  %v2243 = vmul.f32 %v2242, %v1397
  %v2244 = vadd.f32 %v2243, 1e-05
  %v2245 = vrsqrt.pop %v2244
  %v2246 = vmul.f32 %v2238, %v2245
  %v2247 = vmul.f32 %v2246, %v2232
  %v2248 = vadd.f32 %v2247, %v2233
  %vm2249 = vcmp.gt.f32.partialorder %v2248, 0.0
  %v2250 = vmul.f32 %v2248, 0.01
  %v2251 = vsel %vm2249, %v2248, %v2250
  %v2252 = vld [vmem:[%s4 + $0x54] ss:$0 sm:$0xff]
  %v2253 = vmul.f32 %v2251, %v2252
  %v2254 = vsel %vm282, %v2253, 0.0
  %2255 = vadd.xlane.f32.xlu0 %v2254
  %v2256 = vpop.xlane.xlu0 %2255
  %v2257 = vld [vmem:[%s4 + $0x55] ss:$0 sm:$0xff]
  %v2258 = vadd.f32 %v2256, %v2257
  %2260 = vrot.lane.b32.xlu0 %v2258, 2
  %v2261 = vpop.permute.xlu0 %2260
  %vm2263 = vcmask 23568
  %2264 = vst.msk [vmem:[%s17] sm:$0xff] %vm2263, %v2261
  %vm2265 = vcmask 195728
  %v2266 = vsel %vm2265, %v1009, -inf
  %2267 = vmax.xlane.f32.xlu0 %v2266
  %v2268 = vpop.xlane.xlu0 %2267
  %v2269 = vsub.f32 %v1009, %v2268
  %v2270 = vmul.f32 %v2269, 1.442695
  %v2271 = vpow.pop %v2270
  %2273 = vrot.lane.b32.xlu0 %v2271, 110
  %v2274 = vpop.permute.xlu0 %2273
  %v2276 = vsel %vm1014, %v2274, 0.0
  %2277 = vadd.xlane.f32.xlu0 %v2276
  %v2278 = vpop.xlane.xlu0 %2277
  %v2279 = vrcp.pop %v2278
  %v2280 = vmul.f32 %v2271, %v2279
  %v2281 = vld [vmem:[%s2 + $0x20] sm:$0xff]
  %v2282 = vld [vmem:[%s2 + $0x28] sm:$0xff]
  %v2283 = vld [vmem:[%s2 + $0x30] sm:$0xff]
  %2285 = vset.pattern.permute.xlu0 18
  %2286 = vperm.xlu0 %2285, %v2280
  %v2287 = vpop.permute.xlu0 %2286
  %v2289 = vmul.f32 %v2287, %v1012
  %2290 = vset.pattern.permute.xlu0 19
  %2291 = vperm.xlu0 %2290, %v2280
  %v2292 = vpop.permute.xlu0 %2291
  %v2294 = vmul.f32 %v2292, %v1012
  %v2295 = vmul.f32 %v2292, %v1013
  %2298 = vrot.lane.b32.xlu0 %v2294, 28
  %v2299 = vpop.permute.xlu0 %2298
  %2300 = vrot.lane.b32.xlu0 %v2295, 28
  %v2301 = vpop.permute.xlu0 %2300
  %v2302 = vsel %vm1046, %v2299, %v2301
  %v2304 = vadd.f32 %v2289, %v2302
  %2305 = vset.pattern.permute.xlu0 20
  %2306 = vperm.xlu0 %2305, %v2280
  %v2307 = vpop.permute.xlu0 %2306
  %v2309 = vmul.f32 %v2307, %v2281
  %v2310 = vmul.f32 %v2307, %v2282
  %2313 = vrot.lane.b32.xlu0 %v2309, 40
  %v2314 = vpop.permute.xlu0 %2313
  %2315 = vrot.lane.b32.xlu0 %v2310, 40
  %v2316 = vpop.permute.xlu0 %2315
  %vm2317 = vcmask 326656
  %v2318 = vsel %vm2317, %v2314, %v2316
  %v2320 = vadd.f32 %v2304, %v2318
  %2321 = vset.pattern.permute.xlu0 21
  %2322 = vperm.xlu0 %2321, %v2280
  %v2323 = vpop.permute.xlu0 %2322
  %v2325 = vmul.f32 %v2323, %v2282
  %v2326 = vmul.f32 %v2323, %v2283
  %2329 = vrot.lane.b32.xlu0 %v2325, 68
  %v2330 = vpop.permute.xlu0 %2329
  %2331 = vrot.lane.b32.xlu0 %v2326, 68
  %v2332 = vpop.permute.xlu0 %2331
  %vm2333 = vcmask 556032
  %v2334 = vsel %vm2333, %v2330, %v2332
  %v2336 = vadd.f32 %v2320, %v2334
  %2337 = vset.pattern.permute.xlu0 22
  %2338 = vperm.xlu0 %2337, %v2280
  %v2339 = vpop.permute.xlu0 %2338
  %v2341 = vmul.f32 %v2339, %v910
  %v2342 = vadd.f32 %v2336, %v2341
  %2343 = vset.pattern.permute.xlu0 23
  %2344 = vperm.xlu0 %2343, %v2280
  %v2345 = vpop.permute.xlu0 %2344
  %v2347 = vmul.f32 %v2345, %v912
  %v2348 = vadd.f32 %v2342, %v2347
  %v2349 = vmul.f32 %v2348, 0.16666667
  %s2350 = scalar_lea.vmem %s14, 312
  %v2351 = vld [vmem:[%s2350] sm:$0xff]
  %v2352 = vld [vmem:[%s2350 + $0x8] sm:$0xff]
  %v2353 = vld [vmem:[%s2350 + $0x10] sm:$0xff]
  %v2354 = vld [vmem:[%s2350 + $0x18] sm:$0xff]
  %v2355 = vld [vmem:[%s2350 + $0x20] sm:$0xff]
  %v2356 = vld [vmem:[%s2350 + $0x28] sm:$0xff]
  %v2357 = vld [vmem:[%s2350 + $0x30] sm:$0xff]
  %v2358 = vld [vmem:[%s2350 + $0x38] sm:$0xff]
  %v2359 = vld [vmem:[%s2350 + $0x40] sm:$0xff]
  %v2360 = vld [vmem:[%s2350 + $0x48] sm:$0xff]
  %v2361 = vld [vmem:[%s2350 + $0x50] sm:$0xff]
  %v2362 = vld [vmem:[%s2350 + $0x58] sm:$0xff]
  %v2363 = vld [vmem:[%s2350 + $0x60] sm:$0xf]
  %v2364 = vld [vmem:[%s4 + $0x56] ss:$0 sm:$0xff]
  %v2366 = vsel %vm1098, %v2349, 0
  %v2369 = vsel %vm466, %v2363, 0
  %2371 = vmatprep.subr.mxu0 0.0
  %2372 = vmatpush1.msra.mxu0 0.0
  %2373 = vmatprep.subr.mxu0 0.0
  %2374 = vmatpush1.msra.mxu0 0.0
  %2375 = vmatprep.subr.mxu0 0.0
  %2376 = vmatpush1.msra.mxu0 0.0
  %2377 = vmatprep.subr.mxu0 0.0
  %2378 = vmatpush1.msra.mxu0 %v2369
  %2379 = vmatprep.subr.mxu0 0.0
  %2380 = vmatpush1.msra.mxu0 %v2362
  %2381 = vmatprep.subr.mxu0 0.0
  %2382 = vmatpush1.msra.mxu0 %v2361
  %2383 = vmatprep.subr.mxu0 0.0
  %2384 = vmatpush1.msra.mxu0 %v2360
  %2385 = vmatprep.subr.mxu0 0.0
  %2386 = vmatpush1.msra.mxu0 %v2359
  %2387 = vmatprep.subr.mxu0 0.0
  %2388 = vmatpush1.msra.mxu0 %v2358
  %2389 = vmatprep.subr.mxu0 0.0
  %2390 = vmatpush1.msra.mxu0 %v2357
  %2391 = vmatprep.subr.mxu0 0.0
  %2392 = vmatpush1.msra.mxu0 %v2356
  %2393 = vmatprep.subr.mxu0 0.0
  %2394 = vmatpush1.msra.mxu0 %v2355
  %2395 = vmatprep.subr.mxu0 0.0
  %2396 = vmatpush1.msra.mxu0 %v2354
  %2397 = vmatprep.subr.mxu0 0.0
  %2398 = vmatpush1.msra.mxu0 %v2353
  %2399 = vmatprep.subr.mxu0 0.0
  %2400 = vmatpush1.msra.mxu0 %v2352
  %2401 = vmatprep.subr.mxu0 0.0
  %2402 = vmatpush1.msra.mxu0 %v2351
  %2403 = vmatprep.subr.mxu0 0.0
  %2404 = vmatpush2.msra.mxu0 0.0
  %2405 = vmatprep.subr.mxu0 0.0
  %2406 = vmatpush2.msra.mxu0 0.0
  %2407 = vmatprep.subr.mxu0 0.0
  %2408 = vmatpush2.msra.mxu0 0.0
  %2409 = vmatprep.subr.mxu0 0.0
  %2410 = vmatpush2.msra.mxu0 0.0
  %2411 = vmatprep.subr.mxu0 0.0
  %2412 = vmatpush2.msra.mxu0 0.0
  %2413 = vmatprep.subr.mxu0 0.0
  %2414 = vmatpush2.msra.mxu0 0.0
  %2415 = vmatprep.subr.mxu0 0.0
  %2416 = vmatpush2.msra.mxu0 0.0
  %2417 = vmatprep.subr.mxu0 0.0
  %2418 = vmatpush2.msra.mxu0 0.0
  %2419 = vmatprep.subr.mxu0 0.0
  %2420 = vmatpush2.msra.mxu0 0.0
  %2421 = vmatprep.subr.mxu0 0.0
  %2422 = vmatpush2.msra.mxu0 0.0
  %2423 = vmatprep.subr.mxu0 0.0
  %2424 = vmatpush2.msra.mxu0 0.0
  %2425 = vmatprep.subr.mxu0 0.0
  %2426 = vmatpush2.msra.mxu0 0.0
  %2427 = vmatprep.subr.mxu0 0.0
  %2428 = vmatpush2.msra.mxu0 0.0
  %2429 = vmatprep.subr.mxu0 0.0
  %2430 = vmatpush2.msra.mxu0 0.0
  %2431 = vmatprep.subr.mxu0 0.0
  %2432 = vmatpush2.msra.mxu0 0.0
  %2433 = vmatprep.subr.mxu0 0.0
  %2434 = vmatpush2.msra.mxu0 0.0
  %2435 = vmatprep.mubr.f32.mxu0 0.0
  %2436 = vmatmul.mubr.f32.gmra.mxu0 %v2366
  %v2437 = vpop.f32.mrf.mxu0
  %v2438 = vadd.f32 %v2364, %v2437
  %v2439 = vpop.f32.mrf.mxu0
  %2440 = vdwg.mxu0
  %v2441 = vld [vmem:[%s4 + $0x57] ss:$0 sm:$0xff]
  %v2442 = vld [vmem:[%s4 + $0x60] ss:$0 sm:$0xff]
  %v2443 = vsel %vm1098, %v2438, 0.0
  %2444 = vadd.xlane.f32.xlu0 %v2443
  %v2445 = vpop.xlane.xlu0 %2444
  %v2446 = vmul.f32 %v2445, %v1180
  %v2447 = vsub.f32 %v2438, %v2446
  %v2448 = vmul.f32 %v2447, %v2447
  %v2449 = vsel %vm1098, %v2448, 0.0
  %2450 = vadd.xlane.f32.xlu0 %v2449
  %v2451 = vpop.xlane.xlu0 %2450
  %v2452 = vmul.f32 %v2451, %v1180
  %v2453 = vadd.f32 %v2452, 1e-05
  %v2454 = vrsqrt.pop %v2453
  %v2455 = vmul.f32 %v2447, %v2454
  %v2456 = vmul.f32 %v2455, %v2441
  %v2457 = vadd.f32 %v2456, %v2442
  %vm2458 = vcmp.gt.f32.partialorder %v2457, 0.0
  %v2459 = vmul.f32 %v2457, 0.01
  %v2460 = vsel %vm2458, %v2457, %v2459
  %s2461 = scalar_lea.vmem %s15, 312
  %v2462 = vld [vmem:[%s2461] sm:$0xff]
  %v2463 = vld [vmem:[%s2461 + $0x8] sm:$0xff]
  %v2464 = vld [vmem:[%s2461 + $0x10] sm:$0xff]
  %v2465 = vld [vmem:[%s2461 + $0x18] sm:$0xff]
  %v2466 = vld [vmem:[%s2461 + $0x20] sm:$0xff]
  %v2467 = vld [vmem:[%s2461 + $0x28] sm:$0xff]
  %v2468 = vld [vmem:[%s2461 + $0x30] sm:$0xff]
  %v2469 = vld [vmem:[%s2461 + $0x38] sm:$0xff]
  %v2470 = vld [vmem:[%s2461 + $0x40] sm:$0xff]
  %v2471 = vld [vmem:[%s2461 + $0x48] sm:$0xff]
  %v2472 = vld [vmem:[%s2461 + $0x50] sm:$0xff]
  %v2473 = vld [vmem:[%s2461 + $0x58] sm:$0xff]
  %v2474 = vld [vmem:[%s2461 + $0x60] sm:$0xf]
  %v2475 = vld [vmem:[%s4 + $0x61] ss:$0 sm:$0xff]
  %v2477 = vsel %vm1098, %v2460, 0
  %v2480 = vsel %vm466, %v2474, 0
  %2482 = vmatprep.subr.mxu0 0.0
  %2483 = vmatpush1.msra.mxu0 0.0
  %2484 = vmatprep.subr.mxu0 0.0
  %2485 = vmatpush1.msra.mxu0 0.0
  %2486 = vmatprep.subr.mxu0 0.0
  %2487 = vmatpush1.msra.mxu0 0.0
  %2488 = vmatprep.subr.mxu0 0.0
  %2489 = vmatpush1.msra.mxu0 %v2480
  %2490 = vmatprep.subr.mxu0 0.0
  %2491 = vmatpush1.msra.mxu0 %v2473
  %2492 = vmatprep.subr.mxu0 0.0
  %2493 = vmatpush1.msra.mxu0 %v2472
  %2494 = vmatprep.subr.mxu0 0.0
  %2495 = vmatpush1.msra.mxu0 %v2471
  %2496 = vmatprep.subr.mxu0 0.0
  %2497 = vmatpush1.msra.mxu0 %v2470
  %2498 = vmatprep.subr.mxu0 0.0
  %2499 = vmatpush1.msra.mxu0 %v2469
  %2500 = vmatprep.subr.mxu0 0.0
  %2501 = vmatpush1.msra.mxu0 %v2468
  %2502 = vmatprep.subr.mxu0 0.0
  %2503 = vmatpush1.msra.mxu0 %v2467
  %2504 = vmatprep.subr.mxu0 0.0
  %2505 = vmatpush1.msra.mxu0 %v2466
  %2506 = vmatprep.subr.mxu0 0.0
  %2507 = vmatpush1.msra.mxu0 %v2465
  %2508 = vmatprep.subr.mxu0 0.0
  %2509 = vmatpush1.msra.mxu0 %v2464
  %2510 = vmatprep.subr.mxu0 0.0
  %2511 = vmatpush1.msra.mxu0 %v2463
  %2512 = vmatprep.subr.mxu0 0.0
  %2513 = vmatpush1.msra.mxu0 %v2462
  %2514 = vmatprep.subr.mxu0 0.0
  %2515 = vmatpush2.msra.mxu0 0.0
  %2516 = vmatprep.subr.mxu0 0.0
  %2517 = vmatpush2.msra.mxu0 0.0
  %2518 = vmatprep.subr.mxu0 0.0
  %2519 = vmatpush2.msra.mxu0 0.0
  %2520 = vmatprep.subr.mxu0 0.0
  %2521 = vmatpush2.msra.mxu0 0.0
  %2522 = vmatprep.subr.mxu0 0.0
  %2523 = vmatpush2.msra.mxu0 0.0
  %2524 = vmatprep.subr.mxu0 0.0
  %2525 = vmatpush2.msra.mxu0 0.0
  %2526 = vmatprep.subr.mxu0 0.0
  %2527 = vmatpush2.msra.mxu0 0.0
  %2528 = vmatprep.subr.mxu0 0.0
  %2529 = vmatpush2.msra.mxu0 0.0
  %2530 = vmatprep.subr.mxu0 0.0
  %2531 = vmatpush2.msra.mxu0 0.0
  %2532 = vmatprep.subr.mxu0 0.0
  %2533 = vmatpush2.msra.mxu0 0.0
  %2534 = vmatprep.subr.mxu0 0.0
  %2535 = vmatpush2.msra.mxu0 0.0
  %2536 = vmatprep.subr.mxu0 0.0
  %2537 = vmatpush2.msra.mxu0 0.0
  %2538 = vmatprep.subr.mxu0 0.0
  %2539 = vmatpush2.msra.mxu0 0.0
  %2540 = vmatprep.subr.mxu0 0.0
  %2541 = vmatpush2.msra.mxu0 0.0
  %2542 = vmatprep.subr.mxu0 0.0
  %2543 = vmatpush2.msra.mxu0 0.0
  %2544 = vmatprep.subr.mxu0 0.0
  %2545 = vmatpush2.msra.mxu0 0.0
  %2546 = vmatprep.mubr.f32.mxu0 0.0
  %2547 = vmatmul.mubr.f32.gmra.mxu0 %v2477
  %v2548 = vpop.f32.mrf.mxu0
  %v2549 = vadd.f32 %v2475, %v2548
  %v2550 = vpop.f32.mrf.mxu0
  %2551 = vdwg.mxu0
  %v2552 = vld [vmem:[%s4 + $0x62] ss:$0 sm:$0xff]
  %v2553 = vld [vmem:[%s4 + $0x63] ss:$0 sm:$0xff]
  %v2554 = vsel %vm1288, %v2549, 0.0
  %2555 = vadd.xlane.f32.xlu0 %v2554
  %v2556 = vpop.xlane.xlu0 %2555
  %v2557 = vmul.f32 %v2556, %v1292
  %v2558 = vsub.f32 %v2549, %v2557
  %v2559 = vmul.f32 %v2558, %v2558
  %v2560 = vsel %vm1288, %v2559, 0.0
  %2561 = vadd.xlane.f32.xlu0 %v2560
  %v2562 = vpop.xlane.xlu0 %2561
  %v2563 = vmul.f32 %v2562, %v1292
  %v2564 = vadd.f32 %v2563, 1e-05
  %v2565 = vrsqrt.pop %v2564
  %v2566 = vmul.f32 %v2558, %v2565
  %v2567 = vmul.f32 %v2566, %v2552
  %v2568 = vadd.f32 %v2567, %v2553
  %vm2569 = vcmp.gt.f32.partialorder %v2568, 0.0
  %v2570 = vmul.f32 %v2568, 0.01
  %v2571 = vsel %vm2569, %v2568, %v2570
  %s2572 = scalar_lea.vmem %s16, 168
  %v2573 = vld [vmem:[%s2572] sm:$0xff]
  %v2574 = vld [vmem:[%s2572 + $0x8] sm:$0xff]
  %v2575 = vld [vmem:[%s2572 + $0x10] sm:$0xff]
  %v2576 = vld [vmem:[%s2572 + $0x18] sm:$0xff]
  %v2577 = vld [vmem:[%s2572 + $0x20] sm:$0xff]
  %v2578 = vld [vmem:[%s2572 + $0x28] sm:$0xff]
  %v2579 = vld [vmem:[%s2572 + $0x30] sm:$0x3]
  %v2580 = vld [vmem:[%s4 + $0x64] ss:$0 sm:$0xff]
  %v2582 = vsel %vm1288, %v2571, 0
  %v2585 = vsel %vm79, %v2579, 0
  %2587 = vmatprep.subr.mxu0 0.0
  %2588 = vmatpush1.msra.mxu0 0.0
  %2589 = vmatprep.subr.mxu0 0.0
  %2590 = vmatpush1.msra.mxu0 0.0
  %2591 = vmatprep.subr.mxu0 0.0
  %2592 = vmatpush1.msra.mxu0 0.0
  %2593 = vmatprep.subr.mxu0 0.0
  %2594 = vmatpush1.msra.mxu0 0.0
  %2595 = vmatprep.subr.mxu0 0.0
  %2596 = vmatpush1.msra.mxu0 0.0
  %2597 = vmatprep.subr.mxu0 0.0
  %2598 = vmatpush1.msra.mxu0 0.0
  %2599 = vmatprep.subr.mxu0 0.0
  %2600 = vmatpush1.msra.mxu0 0.0
  %2601 = vmatprep.subr.mxu0 0.0
  %2602 = vmatpush1.msra.mxu0 0.0
  %2603 = vmatprep.subr.mxu0 0.0
  %2604 = vmatpush1.msra.mxu0 0.0
  %2605 = vmatprep.subr.mxu0 0.0
  %2606 = vmatpush1.msra.mxu0 %v2585
  %2607 = vmatprep.subr.mxu0 0.0
  %2608 = vmatpush1.msra.mxu0 %v2578
  %2609 = vmatprep.subr.mxu0 0.0
  %2610 = vmatpush1.msra.mxu0 %v2577
  %2611 = vmatprep.subr.mxu0 0.0
  %2612 = vmatpush1.msra.mxu0 %v2576
  %2613 = vmatprep.subr.mxu0 0.0
  %2614 = vmatpush1.msra.mxu0 %v2575
  %2615 = vmatprep.subr.mxu0 0.0
  %2616 = vmatpush1.msra.mxu0 %v2574
  %2617 = vmatprep.subr.mxu0 0.0
  %2618 = vmatpush1.msra.mxu0 %v2573
  %2619 = vmatprep.subr.mxu0 0.0
  %2620 = vmatpush2.msra.mxu0 0.0
  %2621 = vmatprep.subr.mxu0 0.0
  %2622 = vmatpush2.msra.mxu0 0.0
  %2623 = vmatprep.subr.mxu0 0.0
  %2624 = vmatpush2.msra.mxu0 0.0
  %2625 = vmatprep.subr.mxu0 0.0
  %2626 = vmatpush2.msra.mxu0 0.0
  %2627 = vmatprep.subr.mxu0 0.0
  %2628 = vmatpush2.msra.mxu0 0.0
  %2629 = vmatprep.subr.mxu0 0.0
  %2630 = vmatpush2.msra.mxu0 0.0
  %2631 = vmatprep.subr.mxu0 0.0
  %2632 = vmatpush2.msra.mxu0 0.0
  %2633 = vmatprep.subr.mxu0 0.0
  %2634 = vmatpush2.msra.mxu0 0.0
  %2635 = vmatprep.subr.mxu0 0.0
  %2636 = vmatpush2.msra.mxu0 0.0
  %2637 = vmatprep.subr.mxu0 0.0
  %2638 = vmatpush2.msra.mxu0 0.0
  %2639 = vmatprep.subr.mxu0 0.0
  %2640 = vmatpush2.msra.mxu0 0.0
  %2641 = vmatprep.subr.mxu0 0.0
  %2642 = vmatpush2.msra.mxu0 0.0
  %2643 = vmatprep.subr.mxu0 0.0
  %2644 = vmatpush2.msra.mxu0 0.0
  %2645 = vmatprep.subr.mxu0 0.0
  %2646 = vmatpush2.msra.mxu0 0.0
  %2647 = vmatprep.subr.mxu0 0.0
  %2648 = vmatpush2.msra.mxu0 0.0
  %2649 = vmatprep.subr.mxu0 0.0
  %2650 = vmatpush2.msra.mxu0 0.0
  %2651 = vmatprep.mubr.f32.mxu0 0.0
  %2652 = vmatmul.mubr.f32.gmra.mxu0 %v2582
  %v2653 = vpop.f32.mrf.mxu0
  %v2654 = vadd.f32 %v2580, %v2653
  %v2655 = vpop.f32.mrf.mxu0
  %2656 = vdwg.mxu0
  %v2657 = vld [vmem:[%s4 + $0x65] ss:$0 sm:$0xff]
  %v2658 = vld [vmem:[%s4 + $0x66] ss:$0 sm:$0xff]
  %v2659 = vsel %vm282, %v2654, 0.0
  %2660 = vadd.xlane.f32.xlu0 %v2659
  %v2661 = vpop.xlane.xlu0 %2660
  %v2662 = vmul.f32 %v2661, %v1397
  %v2663 = vsub.f32 %v2654, %v2662
  %v2664 = vmul.f32 %v2663, %v2663
  %v2665 = vsel %vm282, %v2664, 0.0
  %2666 = vadd.xlane.f32.xlu0 %v2665
  %v2667 = vpop.xlane.xlu0 %2666
  %v2668 = vmul.f32 %v2667, %v1397
  %v2669 = vadd.f32 %v2668, 1e-05
  %v2670 = vrsqrt.pop %v2669
  %v2671 = vmul.f32 %v2663, %v2670
  %v2672 = vmul.f32 %v2671, %v2657
  %v2673 = vadd.f32 %v2672, %v2658
  %vm2674 = vcmp.gt.f32.partialorder %v2673, 0.0
  %v2675 = vmul.f32 %v2673, 0.01
  %v2676 = vsel %vm2674, %v2673, %v2675
  %v2677 = vld [vmem:[%s4 + $0x67] ss:$0 sm:$0xff]
  %v2678 = vmul.f32 %v2676, %v2677
  %v2679 = vsel %vm282, %v2678, 0.0
  %2680 = vadd.xlane.f32.xlu0 %v2679
  %v2681 = vpop.xlane.xlu0 %2680
  %v2682 = vld [vmem:[%s4 + $0x70] ss:$0 sm:$0xff]
  %v2683 = vadd.f32 %v2681, %v2682
  %2685 = vrot.lane.b32.xlu0 %v2683, 3
  %v2686 = vpop.permute.xlu0 %2685
  %vm2688 = vcmask 31768
  %2689 = vst.msk [vmem:[%s17] sm:$0xff] %vm2688, %v2686
  // Predicated region
  $region70: #{transfer_model_forward.3} parent=0 // pred_check
    _
  $region71: #{transfer_model_forward.3} parent=0 // pred_check_branch
    %2691 = sbr.rel (0) target = $region73
  $region72: #{transfer_model_forward.3} parent=0 // pred_region
    _
  $region73: #{transfer_model_forward.3} parent=0 // pred_fallthru
    _
  // Predicated region
  $region74: #{transfer_model_forward.3} parent=0 // pred_check
    _
  $region75: #{transfer_model_forward.3} parent=0 // pred_check_branch
    %2693 = sbr.rel (0) target = $region77
  $region76: #{transfer_model_forward.3} parent=0 // pred_region
    _
  $region77: #{transfer_model_forward.3} parent=0 // pred_fallthru
    _

</llo_original>
